<compile_context>
chip_gen: v7x
topology: tpu7x:2x2x1
jax: 0.10.0
libtpu: 0.0.40
codegen_flags: <defaults>
</compile_context>

<pallas_src>
import math

import jax
import jax.numpy as jnp
from jax.experimental import pallas as pl
from jax.experimental.pallas import tpu as pltpu


def _round_up(a, b):
    return ((a + b - 1) // b) * b


def _vmem_capacity_bytes():
    """Physical VMEM per TensorCore (conservative fallback if query fails)."""
    try:
        info = pltpu.get_tpu_info()
        cap = getattr(info, "vmem_capacity_bytes", None)
        if cap:
            return int(cap)
    except Exception:
        pass
    return 64 * 1024 * 1024  # v7x-sized conservative default


def _pick_tile_n(n, d_feat, d_inner, x_bytes, vmem_limit):
    """Largest tile_n whose double-buffered x tile + f32 intermediates fit."""
    budget = vmem_limit // 2                 # headroom for weights / spills / epilogue
    tile = 128
    for cand in (4096, 2048, 1024, 512, 256, 128):
        need = 2 * cand * d_feat * x_bytes   # double-buffered x tile
        need += 8 * cand * d_inner * 4       # med, fused V+logits, exp temporaries (f32)
        if need <= budget:
            tile = cand
            break
    tile = min(tile, _round_up(n, 8))
    return max(8, tile)


def make_mha_kernel(tile_n, d_inner):
    def kernel(nv_ref,                       # scalar-prefetch: bag length (SMEM)
               x_ref, w1_ref, b1_ref, wvs_ref, bvs_ref, wo_ref, bo_ref,
               gamma_ref, beta_ref, wc_ref, bc_ref, out_ref,
               m_ref, l_ref, acc_ref):
        t = pl.program_id(1)                 # tile index along N (reduction axis)
        n_valid = nv_ref[0]

        @pl.when(t == 0)
        def _init():
            m_ref[...] = jnp.full_like(m_ref, -jnp.inf)
            l_ref[...] = jnp.zeros_like(l_ref)
            acc_ref[...] = jnp.zeros_like(acc_ref)

        # ---- DimReduction: Linear + ReLU (cast to MXU dtype only at the dot) ----
        med = jnp.dot(x_ref[...].astype(w1_ref.dtype), w1_ref[...],
                      preferred_element_type=jnp.float32) + b1_ref[...]
        med = jnp.maximum(med, 0.0)                         # [tile_n, D_inner] f32

        # ---- ONE fused matmul: V projection | query-folded per-head logits ----
        vs = jnp.dot(med.astype(wvs_ref.dtype), wvs_ref[...],
                     preferred_element_type=jnp.float32) + bvs_ref[...]
        v = vs[:, :d_inner]                                  # [tile_n, D_inner]
        s = vs[:, d_inner:]                                  # head-replicated logits

        # ---- online softmax accumulation (flash-style rescale) ----
        def accumulate(s_m, v_m):
            m_prev = m_ref[...]
            m_new = jnp.maximum(m_prev, jnp.max(s_m, axis=0, keepdims=True))
            alpha = jnp.exp(m_prev - m_new)
            p = jnp.exp(s_m - m_new)                         # [tile_n, D_inner]
            l_ref[...] = alpha * l_ref[...] + jnp.sum(p, axis=0, keepdims=True)
            acc_ref[...] = alpha * acc_ref[...] + jnp.sum(p * v_m, axis=0,
                                                          keepdims=True)
            m_ref[...] = m_new

        is_tail = (t + 1) * tile_n > n_valid                 # only tile holding padding

        @pl.when(jnp.logical_not(is_tail))
        def _full_tile():                                    # interior tiles: no mask work
            accumulate(s, v)

        @pl.when(is_tail)
        def _tail_tile():                                    # mask garbage rows past N
            row = jax.lax.broadcasted_iota(jnp.int32, (tile_n, 1), 0) + t * tile_n
            valid = row < n_valid
            # where-before-exp: garbage/NaN rows replaced before they can leak
            accumulate(jnp.where(valid, s, -1e30), jnp.where(valid, v, 0.0))

        # ---- epilogue: out_proj + (dropout=identity) + LayerNorm + classifier ----
        @pl.when(t == pl.num_programs(1) - 1)
        def _finalize():
            attn_vec = acc_ref[...] * pl.reciprocal(l_ref[...])   # [1, D_inner]
            out1 = jnp.dot(attn_vec, wo_ref[...],
                           preferred_element_type=jnp.float32) + bo_ref[...]
            mu = jnp.mean(out1, axis=-1, keepdims=True)
            xc = out1 - mu
            var = jnp.mean(xc * xc, axis=-1, keepdims=True)
            # module explicitly uses nn.LayerNorm(..., eps=1e-06)
            y = xc * jax.lax.rsqrt(var + 1e-6) * gamma_ref[...] + beta_ref[...]
            out = jnp.dot(y, wc_ref[...],
                          preferred_element_type=jnp.float32) + bc_ref[...]
            out_ref[...] = out.astype(out_ref.dtype)

    return kernel


def mha_forward(x, params, *, num_heads=8, tile_n=None, use_bf16=True):
    """x: [B, N, D_feat] float32 (module uses B=1).  Returns [B, n_class]."""
    B, N, d_feat = x.shape
    d_inner = params["w1"].shape[1]
    n_class = params["wc"].shape[1]
    assert d_inner % num_heads == 0
    c = d_inner // num_heads
    scale = 1.0 / math.sqrt(c)

    # ---- fold the (constant-per-forward) projected query into the K weights ----
    #   s = med @ wk_fold + bk_fold   gives the per-head logit replicated across
    #   that head's lanes (identical math to (K*qp_scaled) @ hmask).
    qp = (params["q"] @ params["wq"] + params["bq"]) * scale          # [1, D_inner]
    head = jnp.arange(d_inner) // c
    hmask = (head[:, None] == head[None, :]).astype(jnp.float32)      # [D_inner, D_inner]
    wk_fold = (params["wk"] * qp) @ hmask                             # [D_inner, D_inner]
    bk_fold = (params["bk"] * qp) @ hmask                             # [1, D_inner]

    mxu_dtype = jnp.bfloat16 if use_bf16 else jnp.float32
    w1 = params["w1"].astype(mxu_dtype)
    wvs = jnp.concatenate([params["wv"], wk_fold], axis=1).astype(mxu_dtype)
    bvs = jnp.concatenate([params["bv"], bk_fold], axis=1)            # f32

    # ---- generation-aware VMEM budget and tile size ----
    vmem_cap = _vmem_capacity_bytes()
    vmem_limit = min(vmem_cap * 3 // 4, 96 * 1024 * 1024)
    if tile_n is None:
        tile_n = _pick_tile_n(N, d_feat, d_inner, x.dtype.itemsize, vmem_limit)
    tile_n = max(8, _round_up(tile_n, 8))
    tile_n = min(tile_n, _round_up(N, 8))
    num_tiles = pl.cdiv(N, tile_n)          # unpadded x; tail rows masked in-kernel

    # Bag length via scalar prefetch: one compiled kernel serves any n_valid
    # (pad/bucket x to a fixed max length upstream to reuse across ragged bags).
    n_valid_arr = jnp.asarray([N], dtype=jnp.int32)

    tensor_args = (x, w1, params["b1"], wvs, bvs, params["wo"], params["bo"],
                   params["gamma"], params["beta"], params["wc"], params["bc"])

    kernel = make_mha_kernel(tile_n, d_inner)

    def build_and_call(single_buffer_weights):
        def weight_spec(a):
            if single_buffer_weights:
                # constant index_map -> no benefit from double buffering
                return pl.BlockSpec(a.shape, lambda b, t, nv: (0, 0),
                                    pipeline_mode=pl.Buffered(1))
            return pl.BlockSpec(a.shape, lambda b, t, nv: (0, 0))

        x_spec = pl.BlockSpec((None, tile_n, d_feat), lambda b, t, nv: (b, t, 0))
        in_specs = [x_spec] + [weight_spec(a) for a in tensor_args[1:]]
        out_spec = pl.BlockSpec((None, 1, n_class), lambda b, t, nv: (b, 0, 0))

        grid_spec = pltpu.PrefetchScalarGridSpec(
            num_scalar_prefetch=1,
            grid=(B, num_tiles),
            in_specs=in_specs,
            out_specs=out_spec,
            scratch_shapes=[
                pltpu.VMEM((1, d_inner), jnp.float32),   # running max  m
                pltpu.VMEM((1, d_inner), jnp.float32),   # running sum  l
                pltpu.VMEM((1, d_inner), jnp.float32),   # running pooled value
            ])

        return pl.pallas_call(
            kernel,
            out_shape=jax.ShapeDtypeStruct((B, 1, n_class), jnp.float32),
            grid_spec=grid_spec,
            compiler_params=pltpu.CompilerParams(
                dimension_semantics=("parallel", "arbitrary"),
                vmem_limit_bytes=vmem_limit),
        )(n_valid_arr, *tensor_args)

    try:
        out = build_and_call(True)
    except Exception:
        # pipeline_mode=pl.Buffered(1) unsupported in this jax build: fall back
        # to default double-buffered weights (correctness identical).
        out = build_and_call(False)
    return out.reshape(B, n_class)


def mha_reference(x, params, num_heads):
    """Pure-JAX f32 reference for the MHA forward pass (B=1)."""
    xb = x[0]
    d_inner = params["w1"].shape[1]
    c = d_inner // num_heads
    med = jnp.maximum(xb @ params["w1"] + params["b1"], 0.0)       # [N, D_inner]
    qp = params["q"] @ params["wq"] + params["bq"]                 # [1, D_inner]
    kp = med @ params["wk"] + params["bk"]
    vp = med @ params["wv"] + params["bv"]
    qh = qp.reshape(num_heads, c)
    kh = kp.reshape(-1, num_heads, c)
    vh = vp.reshape(-1, num_heads, c)
    attn = jnp.einsum("hc,nhc->hn", qh, kh) / jnp.sqrt(float(c))   # [H, N]
    attn = jax.nn.softmax(attn, axis=-1)
    outh = jnp.einsum("hn,nhc->hc", attn, vh)                      # [H, c]
    out1 = outh.reshape(1, d_inner) @ params["wo"] + params["bo"]
    mu = jnp.mean(out1, axis=-1, keepdims=True)
    var = jnp.mean((out1 - mu) ** 2, axis=-1, keepdims=True)
    y = (out1 - mu) / jnp.sqrt(var + 1e-6) * params["gamma"] + params["beta"]
    return y @ params["wc"] + params["bc"]                         # [1, n_class]


def init_params(key, d_feat, d_inner, num_heads, n_class):
    """Deterministic synthetic parameters (PyTorch-Linear-like uniform init)."""
    ks = jax.random.split(key, 16)

    def lin(kw, kb, fan_in, fan_out):
        bound = 1.0 / math.sqrt(fan_in)
        w = jax.random.uniform(kw, (fan_in, fan_out), jnp.float32, -bound, bound)
        b = jax.random.uniform(kb, (1, fan_out), jnp.float32, -bound, bound)
        return w, b

    w1, b1 = lin(ks[0], ks[1], d_feat, d_inner)        # DimReduction
    wq, bq = lin(ks[2], ks[3], d_inner, d_inner)       # q_proj
    wk, bk = lin(ks[4], ks[5], d_inner, d_inner)       # k_proj
    wv, bv = lin(ks[6], ks[7], d_inner, d_inner)       # v_proj
    wo, bo = lin(ks[8], ks[9], d_inner, d_inner)       # out_proj
    wc, bc = lin(ks[10], ks[11], d_inner, n_class)     # Classifier_1fc
    q = 1e-6 * jax.random.normal(ks[12], (1, d_inner), jnp.float32)   # learnable query
    gamma = 1.0 + 0.1 * jax.random.normal(ks[13], (1, d_inner), jnp.float32)
    beta = 0.1 * jax.random.normal(ks[14], (1, d_inner), jnp.float32)
    return dict(w1=w1, b1=b1, q=q, wq=wq, bq=bq, wk=wk, bk=bk, wv=wv, bv=bv,
                wo=wo, bo=bo, gamma=gamma, beta=beta, wc=wc, bc=bc)


if __name__ == "__main__":
    # Small shapes consistent with the module: D_feat=64, D_inner=32 (8 heads
    # of size 4), n_class=4, bag of N=300 instances.  tile_n=128 exercises the
    # multi-tile online softmax + unpadded tail-row masking; the auto-tile run
    # exercises the generation-aware single-tile path.
    N, D_FEAT, D_INNER, N_HEADS, N_CLASS = 300, 64, 32, 8, 4

    key = jax.random.PRNGKey(0)
    kx, kp = jax.random.split(key)
    x = jax.random.normal(kx, (1, N, D_FEAT), jnp.float32)   # [1, N, D_feat]
    params = init_params(kp, D_FEAT, D_INNER, N_HEADS, N_CLASS)

    ref = mha_reference(x, params, N_HEADS)

    out_f32 = jax.block_until_ready(
        mha_forward(x, params, num_heads=N_HEADS, tile_n=128, use_bf16=False))
    out_bf16 = jax.block_until_ready(
        mha_forward(x, params, num_heads=N_HEADS, tile_n=128, use_bf16=True))
    out_auto = jax.block_until_ready(
        mha_forward(x, params, num_heads=N_HEADS))           # auto tile, bf16

    assert out_f32.shape == (1, N_CLASS)
    assert jnp.allclose(out_f32, ref, atol=1e-2, rtol=1e-2), (out_f32, ref)
    assert jnp.allclose(out_bf16, ref, atol=5e-2, rtol=5e-2), (out_bf16, ref)
    assert jnp.allclose(out_auto, ref, atol=5e-2, rtol=5e-2), (out_auto, ref)

    print("KERNEL_OK")
</pallas_src>

<mosaic_0001>
module attributes {stable_mosaic.version = 11 : i64} {
  func.func @kernel(%arg0: i32, %arg1: i32, %arg2: memref<1xi32, #tpu.memory_space<smem>>, %arg3: memref<1x128x64xf32, #tpu.memory_space<vmem>>, %arg4: memref<64x32xf32, #tpu.memory_space<vmem>>, %arg5: memref<1x32xf32, #tpu.memory_space<vmem>>, %arg6: memref<32x64xf32, #tpu.memory_space<vmem>>, %arg7: memref<1x64xf32, #tpu.memory_space<vmem>>, %arg8: memref<32x32xf32, #tpu.memory_space<vmem>>, %arg9: memref<1x32xf32, #tpu.memory_space<vmem>>, %arg10: memref<1x32xf32, #tpu.memory_space<vmem>>, %arg11: memref<1x32xf32, #tpu.memory_space<vmem>>, %arg12: memref<32x4xf32, #tpu.memory_space<vmem>>, %arg13: memref<1x4xf32, #tpu.memory_space<vmem>>, %arg14: memref<1x1x4xf32, #tpu.memory_space<vmem>>, %arg15: memref<1x32xf32, #tpu.memory_space<vmem>>, %arg16: memref<1x32xf32, #tpu.memory_space<vmem>>, %arg17: memref<1x32xf32, #tpu.memory_space<vmem>>) attributes {dimension_semantics = [#tpu.dimension_semantics<parallel>, #tpu.dimension_semantics<arbitrary>], iteration_bounds = array<i64: 1, 3>, scalar_prefetch = 1 : i64, scratch_operands = 3 : i64, tpu.core_type = #tpu.core_type<tc>, window_params = [{transform_indices = @transform_0, window_bounds = array<i64: 1, 128, 64>}, {pipeline_mode = #tpu.pipeline_mode<synchronous>, transform_indices = @transform_1, window_bounds = array<i64: 64, 32>}, {pipeline_mode = #tpu.pipeline_mode<synchronous>, transform_indices = @transform_2, window_bounds = array<i64: 1, 32>}, {pipeline_mode = #tpu.pipeline_mode<synchronous>, transform_indices = @transform_3, window_bounds = array<i64: 32, 64>}, {pipeline_mode = #tpu.pipeline_mode<synchronous>, transform_indices = @transform_4, window_bounds = array<i64: 1, 64>}, {pipeline_mode = #tpu.pipeline_mode<synchronous>, transform_indices = @transform_5, window_bounds = array<i64: 32, 32>}, {pipeline_mode = #tpu.pipeline_mode<synchronous>, transform_indices = @transform_6, window_bounds = array<i64: 1, 32>}, {pipeline_mode = #tpu.pipeline_mode<synchronous>, transform_indices = @transform_7, window_bounds = array<i64: 1, 32>}, {pipeline_mode = #tpu.pipeline_mode<synchronous>, transform_indices = @transform_8, window_bounds = array<i64: 1, 32>}, {pipeline_mode = #tpu.pipeline_mode<synchronous>, transform_indices = @transform_9, window_bounds = array<i64: 32, 4>}, {pipeline_mode = #tpu.pipeline_mode<synchronous>, transform_indices = @transform_10, window_bounds = array<i64: 1, 4>}, {transform_indices = @transform_11, window_bounds = array<i64: 1, 1, 4>}]} {
    %c0 = arith.constant 0 : index
    %0 = memref.load %arg2[%c0] : memref<1xi32, #tpu.memory_space<smem>>
    %c0_i32 = arith.constant 0 : i32
    %1 = arith.cmpi eq, %arg1, %c0_i32 : i32
    %2 = arith.extui %1 : i1 to i32
    %c0_i32_0 = arith.constant 0 : i32
    %3 = arith.cmpi ne, %2, %c0_i32_0 : i32
    scf.if %3 {
      %cst_17 = arith.constant 0xFF800000 : f32
      %31 = vector.broadcast %cst_17 : f32 to vector<1x32xf32>
      %c0_18 = arith.constant 0 : index
      %c0_19 = arith.constant 0 : index
      %32 = vector.load %arg15[%c0_18, %c0_19] : memref<1x32xf32, #tpu.memory_space<vmem>>, vector<1x32xf32>
      tpu.vector_store %arg15[%c0_18, %c0_19], %31 {strides = array<i32>} : memref<1x32xf32, #tpu.memory_space<vmem>>, vector<1x32xf32>,
      %cst_20 = arith.constant 0.000000e+00 : f32
      %33 = vector.broadcast %cst_20 : f32 to vector<1x32xf32>
      %c0_21 = arith.constant 0 : index
      %c0_22 = arith.constant 0 : index
      %34 = vector.load %arg16[%c0_21, %c0_22] : memref<1x32xf32, #tpu.memory_space<vmem>>, vector<1x32xf32>
      tpu.vector_store %arg16[%c0_21, %c0_22], %33 {strides = array<i32>} : memref<1x32xf32, #tpu.memory_space<vmem>>, vector<1x32xf32>,
      %cst_23 = arith.constant 0.000000e+00 : f32
      %35 = vector.broadcast %cst_23 : f32 to vector<1x32xf32>
      %c0_24 = arith.constant 0 : index
      %c0_25 = arith.constant 0 : index
      %36 = vector.load %arg17[%c0_24, %c0_25] : memref<1x32xf32, #tpu.memory_space<vmem>>, vector<1x32xf32>
      tpu.vector_store %arg17[%c0_24, %c0_25], %35 {strides = array<i32>} : memref<1x32xf32, #tpu.memory_space<vmem>>, vector<1x32xf32>,
    } else {
    }
    %c0_1 = arith.constant 0 : index
    %c0_2 = arith.constant 0 : index
    %c0_3 = arith.constant 0 : index
    %4 = vector.load %arg3[%c0_1, %c0_2, %c0_3] : memref<1x128x64xf32, #tpu.memory_space<vmem>>, vector<1x128x64xf32>
    %5 = vector.shape_cast %4 : vector<1x128x64xf32> to vector<128x64xf32>
    %c0_4 = arith.constant 0 : index
    %c0_5 = arith.constant 0 : index
    %6 = vector.load %arg4[%c0_4, %c0_5] : memref<64x32xf32, #tpu.memory_space<vmem>>, vector<64x32xf32>
    %cst = arith.constant dense<0.000000e+00> : vector<128x32xf32>
    %7 = tpu.matmul %5, %6, %cst {dimension_numbers = #tpu.dot_dimension_numbers<[1], [0], [0], [1], [0, 0, 1, 1], [], []>} : vector<128x64xf32>, vector<64x32xf32>, vector<128x32xf32> -> vector<128x32xf32>
    %c0_6 = arith.constant 0 : index
    %c0_7 = arith.constant 0 : index
    %8 = vector.load %arg5[%c0_6, %c0_7] : memref<1x32xf32, #tpu.memory_space<vmem>>, vector<1x32xf32>
    %9 = vector.broadcast %8 : vector<1x32xf32> to vector<128x32xf32>
    %10 = arith.addf %7, %9 : vector<128x32xf32>
    %cst_8 = arith.constant 0.000000e+00 : f32
    %11 = vector.broadcast %cst_8 : f32 to vector<128x32xf32>
    %12 = arith.maximumf %10, %11 : vector<128x32xf32>
    %c0_9 = arith.constant 0 : index
    %c0_10 = arith.constant 0 : index
    %13 = vector.load %arg6[%c0_9, %c0_10] : memref<32x64xf32, #tpu.memory_space<vmem>>, vector<32x64xf32>
    %cst_11 = arith.constant dense<0.000000e+00> : vector<128x64xf32>
    %14 = tpu.matmul %12, %13, %cst_11 {dimension_numbers = #tpu.dot_dimension_numbers<[1], [0], [0], [1], [0, 0, 1, 1], [], []>} : vector<128x32xf32>, vector<32x64xf32>, vector<128x64xf32> -> vector<128x64xf32>
    %c0_12 = arith.constant 0 : index
    %c0_13 = arith.constant 0 : index
    %15 = vector.load %arg7[%c0_12, %c0_13] : memref<1x64xf32, #tpu.memory_space<vmem>>, vector<1x64xf32>
    %16 = vector.broadcast %15 : vector<1x64xf32> to vector<128x64xf32>
    %17 = arith.addf %14, %16 : vector<128x64xf32>
    %18 = vector.extract_strided_slice %17 {offsets = [0, 0], sizes = [128, 32], strides = [1, 1]} : vector<128x64xf32> to vector<128x32xf32>
    %19 = vector.extract_strided_slice %17 {offsets = [0, 32], sizes = [128, 32], strides = [1, 1]} : vector<128x64xf32> to vector<128x32xf32>
    %c1_i32 = arith.constant 1 : i32
    %20 = arith.addi %arg1, %c1_i32 : i32
    %c128_i32 = arith.constant 128 : i32
    %21 = arith.muli %20, %c128_i32 : i32
    %22 = arith.cmpi sgt, %21, %0 : i32
    %true = arith.constant true
    %23 = arith.xori %22, %true : i1
    %24 = arith.extui %23 : i1 to i32
    %c0_i32_14 = arith.constant 0 : i32
    %25 = arith.cmpi ne, %24, %c0_i32_14 : i32
    scf.if %25 {
      %c0_17 = arith.constant 0 : index
      %c0_18 = arith.constant 0 : index
      %31 = vector.load %arg15[%c0_17, %c0_18] : memref<1x32xf32, #tpu.memory_space<vmem>>, vector<1x32xf32>
      %cst_19 = arith.constant dense<0xFF800000> : vector<32xf32>
      %32 = vector.multi_reduction <maximumf>, %19, %cst_19 [0] : vector<128x32xf32> to vector<32xf32>
      %33 = vector.shape_cast %32 : vector<32xf32> to vector<1x32xf32>
      %34 = arith.maximumf %31, %33 : vector<1x32xf32>
      %35 = arith.subf %31, %34 : vector<1x32xf32>
      %36 = math.exp %35 : vector<1x32xf32>
      %37 = vector.broadcast %34 : vector<1x32xf32> to vector<128x32xf32>
      %38 = arith.subf %19, %37 : vector<128x32xf32>
      %39 = math.exp %38 : vector<128x32xf32>
      %c0_20 = arith.constant 0 : index
      %c0_21 = arith.constant 0 : index
      %40 = vector.load %arg16[%c0_20, %c0_21] : memref<1x32xf32, #tpu.memory_space<vmem>>, vector<1x32xf32>
      %41 = arith.mulf %36, %40 : vector<1x32xf32>
      %cst_22 = arith.constant dense<0.000000e+00> : vector<32xf32>
      %42 = vector.multi_reduction <add>, %39, %cst_22 [0] : vector<128x32xf32> to vector<32xf32>
      %43 = vector.shape_cast %42 : vector<32xf32> to vector<1x32xf32>
      %44 = arith.addf %41, %43 : vector<1x32xf32>
      %c0_23 = arith.constant 0 : index
      %c0_24 = arith.constant 0 : index
      %45 = vector.load %arg16[%c0_23, %c0_24] : memref<1x32xf32, #tpu.memory_space<vmem>>, vector<1x32xf32>
      tpu.vector_store %arg16[%c0_23, %c0_24], %44 {strides = array<i32>} : memref<1x32xf32, #tpu.memory_space<vmem>>, vector<1x32xf32>,
      %c0_25 = arith.constant 0 : index
      %c0_26 = arith.constant 0 : index
      %46 = vector.load %arg17[%c0_25, %c0_26] : memref<1x32xf32, #tpu.memory_space<vmem>>, vector<1x32xf32>
      %47 = arith.mulf %36, %46 : vector<1x32xf32>
      %48 = arith.mulf %39, %18 : vector<128x32xf32>
      %cst_27 = arith.constant dense<0.000000e+00> : vector<32xf32>
      %49 = vector.multi_reduction <add>, %48, %cst_27 [0] : vector<128x32xf32> to vector<32xf32>
      %50 = vector.shape_cast %49 : vector<32xf32> to vector<1x32xf32>
      %51 = arith.addf %47, %50 : vector<1x32xf32>
      %c0_28 = arith.constant 0 : index
      %c0_29 = arith.constant 0 : index
      %52 = vector.load %arg17[%c0_28, %c0_29] : memref<1x32xf32, #tpu.memory_space<vmem>>, vector<1x32xf32>
      tpu.vector_store %arg17[%c0_28, %c0_29], %51 {strides = array<i32>} : memref<1x32xf32, #tpu.memory_space<vmem>>, vector<1x32xf32>,
      %c0_30 = arith.constant 0 : index
      %c0_31 = arith.constant 0 : index
      %53 = vector.load %arg15[%c0_30, %c0_31] : memref<1x32xf32, #tpu.memory_space<vmem>>, vector<1x32xf32>
      tpu.vector_store %arg15[%c0_30, %c0_31], %34 {strides = array<i32>} : memref<1x32xf32, #tpu.memory_space<vmem>>, vector<1x32xf32>,
    } else {
    }
    %26 = arith.extui %22 : i1 to i32
    %c0_i32_15 = arith.constant 0 : i32
    %27 = arith.cmpi ne, %26, %c0_i32_15 : i32
    scf.if %27 {
      %31 = tpu.iota {dimensions = array<i32: 0>} : vector<128x1xi32>
      %c128_i32_17 = arith.constant 128 : i32
      %32 = arith.muli %arg1, %c128_i32_17 : i32
      %33 = vector.broadcast %32 : i32 to vector<128x1xi32>
      %34 = arith.addi %31, %33 : vector<128x1xi32>
      %35 = vector.broadcast %0 : i32 to vector<128x1xi32>
      %36 = arith.cmpi slt, %34, %35 : vector<128x1xi32>
      %cst_18 = arith.constant -1.000000e+30 : f32
      %37 = vector.shape_cast %36 : vector<128x1xi1> to vector<128x1xi1>
      %38 = vector.broadcast %37 : vector<128x1xi1> to vector<128x32xi1>
      %39 = vector.broadcast %cst_18 : f32 to vector<128x32xf32>
      %40 = arith.select %38, %19, %39 : vector<128x32xi1>, vector<128x32xf32>
      %cst_19 = arith.constant 0.000000e+00 : f32
      %41 = vector.shape_cast %36 : vector<128x1xi1> to vector<128x1xi1>
      %42 = vector.broadcast %41 : vector<128x1xi1> to vector<128x32xi1>
      %43 = vector.broadcast %cst_19 : f32 to vector<128x32xf32>
      %44 = arith.select %42, %18, %43 : vector<128x32xi1>, vector<128x32xf32>
      %c0_20 = arith.constant 0 : index
      %c0_21 = arith.constant 0 : index
      %45 = vector.load %arg15[%c0_20, %c0_21] : memref<1x32xf32, #tpu.memory_space<vmem>>, vector<1x32xf32>
      %cst_22 = arith.constant dense<0xFF800000> : vector<32xf32>
      %46 = vector.multi_reduction <maximumf>, %40, %cst_22 [0] : vector<128x32xf32> to vector<32xf32>
      %47 = vector.shape_cast %46 : vector<32xf32> to vector<1x32xf32>
      %48 = arith.maximumf %45, %47 : vector<1x32xf32>
      %49 = arith.subf %45, %48 : vector<1x32xf32>
      %50 = math.exp %49 : vector<1x32xf32>
      %51 = vector.broadcast %48 : vector<1x32xf32> to vector<128x32xf32>
      %52 = arith.subf %40, %51 : vector<128x32xf32>
      %53 = math.exp %52 : vector<128x32xf32>
      %c0_23 = arith.constant 0 : index
      %c0_24 = arith.constant 0 : index
      %54 = vector.load %arg16[%c0_23, %c0_24] : memref<1x32xf32, #tpu.memory_space<vmem>>, vector<1x32xf32>
      %55 = arith.mulf %50, %54 : vector<1x32xf32>
      %cst_25 = arith.constant dense<0.000000e+00> : vector<32xf32>
      %56 = vector.multi_reduction <add>, %53, %cst_25 [0] : vector<128x32xf32> to vector<32xf32>
      %57 = vector.shape_cast %56 : vector<32xf32> to vector<1x32xf32>
      %58 = arith.addf %55, %57 : vector<1x32xf32>
      %c0_26 = arith.constant 0 : index
      %c0_27 = arith.constant 0 : index
      %59 = vector.load %arg16[%c0_26, %c0_27] : memref<1x32xf32, #tpu.memory_space<vmem>>, vector<1x32xf32>
      tpu.vector_store %arg16[%c0_26, %c0_27], %58 {strides = array<i32>} : memref<1x32xf32, #tpu.memory_space<vmem>>, vector<1x32xf32>,
      %c0_28 = arith.constant 0 : index
      %c0_29 = arith.constant 0 : index
      %60 = vector.load %arg17[%c0_28, %c0_29] : memref<1x32xf32, #tpu.memory_space<vmem>>, vector<1x32xf32>
      %61 = arith.mulf %50, %60 : vector<1x32xf32>
      %62 = arith.mulf %53, %44 : vector<128x32xf32>
      %cst_30 = arith.constant dense<0.000000e+00> : vector<32xf32>
      %63 = vector.multi_reduction <add>, %62, %cst_30 [0] : vector<128x32xf32> to vector<32xf32>
      %64 = vector.shape_cast %63 : vector<32xf32> to vector<1x32xf32>
      %65 = arith.addf %61, %64 : vector<1x32xf32>
      %c0_31 = arith.constant 0 : index
      %c0_32 = arith.constant 0 : index
      %66 = vector.load %arg17[%c0_31, %c0_32] : memref<1x32xf32, #tpu.memory_space<vmem>>, vector<1x32xf32>
      tpu.vector_store %arg17[%c0_31, %c0_32], %65 {strides = array<i32>} : memref<1x32xf32, #tpu.memory_space<vmem>>, vector<1x32xf32>,
      %c0_33 = arith.constant 0 : index
      %c0_34 = arith.constant 0 : index
      %67 = vector.load %arg15[%c0_33, %c0_34] : memref<1x32xf32, #tpu.memory_space<vmem>>, vector<1x32xf32>
      tpu.vector_store %arg15[%c0_33, %c0_34], %48 {strides = array<i32>} : memref<1x32xf32, #tpu.memory_space<vmem>>, vector<1x32xf32>,
    } else {
    }
    %c2_i32 = arith.constant 2 : i32
    %28 = arith.cmpi eq, %arg1, %c2_i32 : i32
    %29 = arith.extui %28 : i1 to i32
    %c0_i32_16 = arith.constant 0 : i32
    %30 = arith.cmpi ne, %29, %c0_i32_16 : i32
    scf.if %30 {
      %c0_17 = arith.constant 0 : index
      %c0_18 = arith.constant 0 : index
      %31 = vector.load %arg17[%c0_17, %c0_18] : memref<1x32xf32, #tpu.memory_space<vmem>>, vector<1x32xf32>
      %c0_19 = arith.constant 0 : index
      %c0_20 = arith.constant 0 : index
      %32 = vector.load %arg16[%c0_19, %c0_20] : memref<1x32xf32, #tpu.memory_space<vmem>>, vector<1x32xf32>
      %33 = tpu.reciprocal %32 : vector<1x32xf32> -> vector<1x32xf32>
      %34 = arith.mulf %31, %33 : vector<1x32xf32>
      %c0_21 = arith.constant 0 : index
      %c0_22 = arith.constant 0 : index
      %35 = vector.load %arg8[%c0_21, %c0_22] : memref<32x32xf32, #tpu.memory_space<vmem>>, vector<32x32xf32>
      %cst_23 = arith.constant dense<0.000000e+00> : vector<1x32xf32>
      %36 = tpu.matmul %34, %35, %cst_23 {dimension_numbers = #tpu.dot_dimension_numbers<[1], [0], [0], [1], [0, 0, 1, 1], [], []>} : vector<1x32xf32>, vector<32x32xf32>, vector<1x32xf32> -> vector<1x32xf32>
      %c0_24 = arith.constant 0 : index
      %c0_25 = arith.constant 0 : index
      %37 = vector.load %arg9[%c0_24, %c0_25] : memref<1x32xf32, #tpu.memory_space<vmem>>, vector<1x32xf32>
      %38 = arith.addf %36, %37 : vector<1x32xf32>
      %cst_26 = arith.constant dense<0.000000e+00> : vector<1xf32>
      %39 = vector.multi_reduction <add>, %38, %cst_26 [1] : vector<1x32xf32> to vector<1xf32>
      %40 = vector.shape_cast %39 : vector<1xf32> to vector<1x1xf32>
      %cst_27 = arith.constant 3.200000e+01 : f32
      %41 = vector.broadcast %cst_27 : f32 to vector<1x1xf32>
      %42 = arith.divf %40, %41 : vector<1x1xf32>
      %43 = vector.broadcast %42 : vector<1x1xf32> to vector<1x32xf32>
      %44 = arith.subf %38, %43 : vector<1x32xf32>
      %45 = arith.mulf %44, %44 : vector<1x32xf32>
      %cst_28 = arith.constant dense<0.000000e+00> : vector<1xf32>
      %46 = vector.multi_reduction <add>, %45, %cst_28 [1] : vector<1x32xf32> to vector<1xf32>
      %47 = vector.shape_cast %46 : vector<1xf32> to vector<1x1xf32>
      %cst_29 = arith.constant 3.200000e+01 : f32
      %48 = vector.broadcast %cst_29 : f32 to vector<1x1xf32>
      %49 = arith.divf %47, %48 : vector<1x1xf32>
      %cst_30 = arith.constant 9.99999997E-7 : f32
      %50 = vector.broadcast %cst_30 : f32 to vector<1x1xf32>
      %51 = arith.addf %49, %50 : vector<1x1xf32>
      %52 = math.rsqrt %51 : vector<1x1xf32>
      %53 = vector.broadcast %52 : vector<1x1xf32> to vector<1x32xf32>
      %54 = arith.mulf %44, %53 : vector<1x32xf32>
      %c0_31 = arith.constant 0 : index
      %c0_32 = arith.constant 0 : index
      %55 = vector.load %arg10[%c0_31, %c0_32] : memref<1x32xf32, #tpu.memory_space<vmem>>, vector<1x32xf32>
      %56 = arith.mulf %54, %55 : vector<1x32xf32>
      %c0_33 = arith.constant 0 : index
      %c0_34 = arith.constant 0 : index
      %57 = vector.load %arg11[%c0_33, %c0_34] : memref<1x32xf32, #tpu.memory_space<vmem>>, vector<1x32xf32>
      %58 = arith.addf %56, %57 : vector<1x32xf32>
      %c0_35 = arith.constant 0 : index
      %c0_36 = arith.constant 0 : index
      %59 = vector.load %arg12[%c0_35, %c0_36] : memref<32x4xf32, #tpu.memory_space<vmem>>, vector<32x4xf32>
      %cst_37 = arith.constant dense<0.000000e+00> : vector<1x4xf32>
      %60 = tpu.matmul %58, %59, %cst_37 {dimension_numbers = #tpu.dot_dimension_numbers<[1], [0], [0], [1], [0, 0, 1, 1], [], []>} : vector<1x32xf32>, vector<32x4xf32>, vector<1x4xf32> -> vector<1x4xf32>
      %c0_38 = arith.constant 0 : index
      %c0_39 = arith.constant 0 : index
      %61 = vector.load %arg13[%c0_38, %c0_39] : memref<1x4xf32, #tpu.memory_space<vmem>>, vector<1x4xf32>
      %62 = arith.addf %60, %61 : vector<1x4xf32>
      %c0_40 = arith.constant 0 : index
      %c0_41 = arith.constant 0 : index
      %c0_42 = arith.constant 0 : index
      %63 = vector.load %arg14[%c0_40, %c0_41, %c0_42] : memref<1x1x4xf32, #tpu.memory_space<vmem>>, vector<1x1x4xf32>
      %64 = vector.shape_cast %63 : vector<1x1x4xf32> to vector<1x4xf32>
      %65 = vector.shape_cast %62 : vector<1x4xf32> to vector<1x1x4xf32>
      tpu.vector_store %arg14[%c0_40, %c0_41, %c0_42], %65 {strides = array<i32>} : memref<1x1x4xf32, #tpu.memory_space<vmem>>, vector<1x1x4xf32>,
    } else {
    }
    return
  }
  func.func @transform_0(%arg0: i32, %arg1: i32, %arg2: memref<1xi32, #tpu.memory_space<smem>>) -> (i32, i32, i32) {
    %c0_i32 = arith.constant 0 : i32
    %c0_i32_0 = arith.constant 0 : i32
    return %arg0, %arg1, %c0_i32 : i32, i32, i32
  }
  func.func @transform_1(%arg0: i32, %arg1: i32, %arg2: memref<1xi32, #tpu.memory_space<smem>>) -> (i32, i32) {
    %c0_i32 = arith.constant 0 : i32
    %c0_i32_0 = arith.constant 0 : i32
    %c0_i32_1 = arith.constant 0 : i32
    return %c0_i32, %c0_i32_0 : i32, i32
  }
  func.func @transform_2(%arg0: i32, %arg1: i32, %arg2: memref<1xi32, #tpu.memory_space<smem>>) -> (i32, i32) {
    %c0_i32 = arith.constant 0 : i32
    %c0_i32_0 = arith.constant 0 : i32
    %c0_i32_1 = arith.constant 0 : i32
    return %c0_i32, %c0_i32_0 : i32, i32
  }
  func.func @transform_3(%arg0: i32, %arg1: i32, %arg2: memref<1xi32, #tpu.memory_space<smem>>) -> (i32, i32) {
    %c0_i32 = arith.constant 0 : i32
    %c0_i32_0 = arith.constant 0 : i32
    %c0_i32_1 = arith.constant 0 : i32
    return %c0_i32, %c0_i32_0 : i32, i32
  }
  func.func @transform_4(%arg0: i32, %arg1: i32, %arg2: memref<1xi32, #tpu.memory_space<smem>>) -> (i32, i32) {
    %c0_i32 = arith.constant 0 : i32
    %c0_i32_0 = arith.constant 0 : i32
    %c0_i32_1 = arith.constant 0 : i32
    return %c0_i32, %c0_i32_0 : i32, i32
  }
  func.func @transform_5(%arg0: i32, %arg1: i32, %arg2: memref<1xi32, #tpu.memory_space<smem>>) -> (i32, i32) {
    %c0_i32 = arith.constant 0 : i32
    %c0_i32_0 = arith.constant 0 : i32
    %c0_i32_1 = arith.constant 0 : i32
    return %c0_i32, %c0_i32_0 : i32, i32
  }
  func.func @transform_6(%arg0: i32, %arg1: i32, %arg2: memref<1xi32, #tpu.memory_space<smem>>) -> (i32, i32) {
    %c0_i32 = arith.constant 0 : i32
    %c0_i32_0 = arith.constant 0 : i32
    %c0_i32_1 = arith.constant 0 : i32
    return %c0_i32, %c0_i32_0 : i32, i32
  }
  func.func @transform_7(%arg0: i32, %arg1: i32, %arg2: memref<1xi32, #tpu.memory_space<smem>>) -> (i32, i32) {
    %c0_i32 = arith.constant 0 : i32
    %c0_i32_0 = arith.constant 0 : i32
    %c0_i32_1 = arith.constant 0 : i32
    return %c0_i32, %c0_i32_0 : i32, i32
  }
  func.func @transform_8(%arg0: i32, %arg1: i32, %arg2: memref<1xi32, #tpu.memory_space<smem>>) -> (i32, i32) {
    %c0_i32 = arith.constant 0 : i32
    %c0_i32_0 = arith.constant 0 : i32
    %c0_i32_1 = arith.constant 0 : i32
    return %c0_i32, %c0_i32_0 : i32, i32
  }
  func.func @transform_9(%arg0: i32, %arg1: i32, %arg2: memref<1xi32, #tpu.memory_space<smem>>) -> (i32, i32) {
    %c0_i32 = arith.constant 0 : i32
    %c0_i32_0 = arith.constant 0 : i32
    %c0_i32_1 = arith.constant 0 : i32
    return %c0_i32, %c0_i32_0 : i32, i32
  }
  func.func @transform_10(%arg0: i32, %arg1: i32, %arg2: memref<1xi32, #tpu.memory_space<smem>>) -> (i32, i32) {
    %c0_i32 = arith.constant 0 : i32
    %c0_i32_0 = arith.constant 0 : i32
    %c0_i32_1 = arith.constant 0 : i32
    return %c0_i32, %c0_i32_0 : i32, i32
  }
  func.func @transform_11(%arg0: i32, %arg1: i32, %arg2: memref<1xi32, #tpu.memory_space<smem>>) -> (i32, i32, i32) {
    %c0_i32 = arith.constant 0 : i32
    %c0_i32_0 = arith.constant 0 : i32
    %c0_i32_1 = arith.constant 0 : i32
    return %arg0, %c0_i32, %c0_i32_0 : i32, i32, i32
  }
}

module attributes {stable_mosaic.version = 11 : i64} {
  func.func @kernel(%arg0: i32, %arg1: i32, %arg2: memref<1xi32, #tpu.memory_space<smem>>, %arg3: memref<1x128x64xf32, #tpu.memory_space<vmem>>, %arg4: memref<64x32xf32, #tpu.memory_space<vmem>>, %arg5: memref<1x32xf32, #tpu.memory_space<vmem>>, %arg6: memref<32x64xf32, #tpu.memory_space<vmem>>, %arg7: memref<1x64xf32, #tpu.memory_space<vmem>>, %arg8: memref<32x32xf32, #tpu.memory_space<vmem>>, %arg9: memref<1x32xf32, #tpu.memory_space<vmem>>, %arg10: memref<1x32xf32, #tpu.memory_space<vmem>>, %arg11: memref<1x32xf32, #tpu.memory_space<vmem>>, %arg12: memref<32x4xf32, #tpu.memory_space<vmem>>, %arg13: memref<1x4xf32, #tpu.memory_space<vmem>>, %arg14: memref<1x1x4xf32, #tpu.memory_space<vmem>>, %arg15: memref<1x32xf32, #tpu.memory_space<vmem>>, %arg16: memref<1x32xf32, #tpu.memory_space<vmem>>, %arg17: memref<1x32xf32, #tpu.memory_space<vmem>>) attributes {dimension_semantics = [#tpu.dimension_semantics<parallel>, #tpu.dimension_semantics<arbitrary>], iteration_bounds = array<i64: 1, 3>, scalar_prefetch = 1 : i64, scratch_operands = 3 : i64, tpu.core_type = #tpu.core_type<tc>, window_params = [{transform_indices = @transform_0, window_bounds = array<i64: 1, 128, 64>}, {pipeline_mode = #tpu.pipeline_mode<synchronous>, transform_indices = @transform_1, window_bounds = array<i64: 64, 32>}, {pipeline_mode = #tpu.pipeline_mode<synchronous>, transform_indices = @transform_2, window_bounds = array<i64: 1, 32>}, {pipeline_mode = #tpu.pipeline_mode<synchronous>, transform_indices = @transform_3, window_bounds = array<i64: 32, 64>}, {pipeline_mode = #tpu.pipeline_mode<synchronous>, transform_indices = @transform_4, window_bounds = array<i64: 1, 64>}, {pipeline_mode = #tpu.pipeline_mode<synchronous>, transform_indices = @transform_5, window_bounds = array<i64: 32, 32>}, {pipeline_mode = #tpu.pipeline_mode<synchronous>, transform_indices = @transform_6, window_bounds = array<i64: 1, 32>}, {pipeline_mode = #tpu.pipeline_mode<synchronous>, transform_indices = @transform_7, window_bounds = array<i64: 1, 32>}, {pipeline_mode = #tpu.pipeline_mode<synchronous>, transform_indices = @transform_8, window_bounds = array<i64: 1, 32>}, {pipeline_mode = #tpu.pipeline_mode<synchronous>, transform_indices = @transform_9, window_bounds = array<i64: 32, 4>}, {pipeline_mode = #tpu.pipeline_mode<synchronous>, transform_indices = @transform_10, window_bounds = array<i64: 1, 4>}, {transform_indices = @transform_11, window_bounds = array<i64: 1, 1, 4>}]} {
    %c0 = arith.constant 0 : index
    %0 = memref.load %arg2[%c0] : memref<1xi32, #tpu.memory_space<smem>>
    %c0_i32 = arith.constant 0 : i32
    %1 = arith.cmpi eq, %arg1, %c0_i32 : i32
    %2 = arith.extui %1 : i1 to i32
    %c0_i32_0 = arith.constant 0 : i32
    %3 = arith.cmpi ne, %2, %c0_i32_0 : i32
    scf.if %3 {
      %cst_17 = arith.constant 0xFF800000 : f32
      %31 = vector.broadcast %cst_17 : f32 to vector<1x32xf32>
      %c0_18 = arith.constant 0 : index
      %c0_19 = arith.constant 0 : index
      %32 = vector.load %arg15[%c0_18, %c0_19] : memref<1x32xf32, #tpu.memory_space<vmem>>, vector<1x32xf32>
      tpu.vector_store %arg15[%c0_18, %c0_19], %31 {strides = array<i32>} : memref<1x32xf32, #tpu.memory_space<vmem>>, vector<1x32xf32>,
      %cst_20 = arith.constant 0.000000e+00 : f32
      %33 = vector.broadcast %cst_20 : f32 to vector<1x32xf32>
      %c0_21 = arith.constant 0 : index
      %c0_22 = arith.constant 0 : index
      %34 = vector.load %arg16[%c0_21, %c0_22] : memref<1x32xf32, #tpu.memory_space<vmem>>, vector<1x32xf32>
      tpu.vector_store %arg16[%c0_21, %c0_22], %33 {strides = array<i32>} : memref<1x32xf32, #tpu.memory_space<vmem>>, vector<1x32xf32>,
      %cst_23 = arith.constant 0.000000e+00 : f32
      %35 = vector.broadcast %cst_23 : f32 to vector<1x32xf32>
      %c0_24 = arith.constant 0 : index
      %c0_25 = arith.constant 0 : index
      %36 = vector.load %arg17[%c0_24, %c0_25] : memref<1x32xf32, #tpu.memory_space<vmem>>, vector<1x32xf32>
      tpu.vector_store %arg17[%c0_24, %c0_25], %35 {strides = array<i32>} : memref<1x32xf32, #tpu.memory_space<vmem>>, vector<1x32xf32>,
    } else {
    }
    %c0_1 = arith.constant 0 : index
    %c0_2 = arith.constant 0 : index
    %c0_3 = arith.constant 0 : index
    %4 = vector.load %arg3[%c0_1, %c0_2, %c0_3] : memref<1x128x64xf32, #tpu.memory_space<vmem>>, vector<1x128x64xf32>
    %5 = vector.shape_cast %4 : vector<1x128x64xf32> to vector<128x64xf32>
    %c0_4 = arith.constant 0 : index
    %c0_5 = arith.constant 0 : index
    %6 = vector.load %arg4[%c0_4, %c0_5] : memref<64x32xf32, #tpu.memory_space<vmem>>, vector<64x32xf32>
    %cst = arith.constant dense<0.000000e+00> : vector<128x32xf32>
    %7 = tpu.matmul %5, %6, %cst {dimension_numbers = #tpu.dot_dimension_numbers<[1], [0], [0], [1], [0, 0, 1, 1], [], []>} : vector<128x64xf32>, vector<64x32xf32>, vector<128x32xf32> -> vector<128x32xf32>
    %c0_6 = arith.constant 0 : index
    %c0_7 = arith.constant 0 : index
    %8 = vector.load %arg5[%c0_6, %c0_7] : memref<1x32xf32, #tpu.memory_space<vmem>>, vector<1x32xf32>
    %9 = vector.broadcast %8 : vector<1x32xf32> to vector<128x32xf32>
    %10 = arith.addf %7, %9 : vector<128x32xf32>
    %cst_8 = arith.constant 0.000000e+00 : f32
    %11 = vector.broadcast %cst_8 : f32 to vector<128x32xf32>
    %12 = arith.maximumf %10, %11 : vector<128x32xf32>
    %c0_9 = arith.constant 0 : index
    %c0_10 = arith.constant 0 : index
    %13 = vector.load %arg6[%c0_9, %c0_10] : memref<32x64xf32, #tpu.memory_space<vmem>>, vector<32x64xf32>
    %cst_11 = arith.constant dense<0.000000e+00> : vector<128x64xf32>
    %14 = tpu.matmul %12, %13, %cst_11 {dimension_numbers = #tpu.dot_dimension_numbers<[1], [0], [0], [1], [0, 0, 1, 1], [], []>} : vector<128x32xf32>, vector<32x64xf32>, vector<128x64xf32> -> vector<128x64xf32>
    %c0_12 = arith.constant 0 : index
    %c0_13 = arith.constant 0 : index
    %15 = vector.load %arg7[%c0_12, %c0_13] : memref<1x64xf32, #tpu.memory_space<vmem>>, vector<1x64xf32>
    %16 = vector.broadcast %15 : vector<1x64xf32> to vector<128x64xf32>
    %17 = arith.addf %14, %16 : vector<128x64xf32>
    %18 = vector.extract_strided_slice %17 {offsets = [0, 0], sizes = [128, 32], strides = [1, 1]} : vector<128x64xf32> to vector<128x32xf32>
    %19 = vector.extract_strided_slice %17 {offsets = [0, 32], sizes = [128, 32], strides = [1, 1]} : vector<128x64xf32> to vector<128x32xf32>
    %c1_i32 = arith.constant 1 : i32
    %20 = arith.addi %arg1, %c1_i32 : i32
    %c128_i32 = arith.constant 128 : i32
    %21 = arith.muli %20, %c128_i32 : i32
    %22 = arith.cmpi sgt, %21, %0 : i32
    %true = arith.constant true
    %23 = arith.xori %22, %true : i1
    %24 = arith.extui %23 : i1 to i32
    %c0_i32_14 = arith.constant 0 : i32
    %25 = arith.cmpi ne, %24, %c0_i32_14 : i32
    scf.if %25 {
      %c0_17 = arith.constant 0 : index
      %c0_18 = arith.constant 0 : index
      %31 = vector.load %arg15[%c0_17, %c0_18] : memref<1x32xf32, #tpu.memory_space<vmem>>, vector<1x32xf32>
      %cst_19 = arith.constant dense<0xFF800000> : vector<32xf32>
      %32 = vector.multi_reduction <maximumf>, %19, %cst_19 [0] : vector<128x32xf32> to vector<32xf32>
      %33 = vector.shape_cast %32 : vector<32xf32> to vector<1x32xf32>
      %34 = arith.maximumf %31, %33 : vector<1x32xf32>
      %35 = arith.subf %31, %34 : vector<1x32xf32>
      %36 = math.exp %35 : vector<1x32xf32>
      %37 = vector.broadcast %34 : vector<1x32xf32> to vector<128x32xf32>
      %38 = arith.subf %19, %37 : vector<128x32xf32>
      %39 = math.exp %38 : vector<128x32xf32>
      %c0_20 = arith.constant 0 : index
      %c0_21 = arith.constant 0 : index
      %40 = vector.load %arg16[%c0_20, %c0_21] : memref<1x32xf32, #tpu.memory_space<vmem>>, vector<1x32xf32>
      %41 = arith.mulf %36, %40 : vector<1x32xf32>
      %cst_22 = arith.constant dense<0.000000e+00> : vector<32xf32>
      %42 = vector.multi_reduction <add>, %39, %cst_22 [0] : vector<128x32xf32> to vector<32xf32>
      %43 = vector.shape_cast %42 : vector<32xf32> to vector<1x32xf32>
      %44 = arith.addf %41, %43 : vector<1x32xf32>
      %c0_23 = arith.constant 0 : index
      %c0_24 = arith.constant 0 : index
      %45 = vector.load %arg16[%c0_23, %c0_24] : memref<1x32xf32, #tpu.memory_space<vmem>>, vector<1x32xf32>
      tpu.vector_store %arg16[%c0_23, %c0_24], %44 {strides = array<i32>} : memref<1x32xf32, #tpu.memory_space<vmem>>, vector<1x32xf32>,
      %c0_25 = arith.constant 0 : index
      %c0_26 = arith.constant 0 : index
      %46 = vector.load %arg17[%c0_25, %c0_26] : memref<1x32xf32, #tpu.memory_space<vmem>>, vector<1x32xf32>
      %47 = arith.mulf %36, %46 : vector<1x32xf32>
      %48 = arith.mulf %39, %18 : vector<128x32xf32>
      %cst_27 = arith.constant dense<0.000000e+00> : vector<32xf32>
      %49 = vector.multi_reduction <add>, %48, %cst_27 [0] : vector<128x32xf32> to vector<32xf32>
      %50 = vector.shape_cast %49 : vector<32xf32> to vector<1x32xf32>
      %51 = arith.addf %47, %50 : vector<1x32xf32>
      %c0_28 = arith.constant 0 : index
      %c0_29 = arith.constant 0 : index
      %52 = vector.load %arg17[%c0_28, %c0_29] : memref<1x32xf32, #tpu.memory_space<vmem>>, vector<1x32xf32>
      tpu.vector_store %arg17[%c0_28, %c0_29], %51 {strides = array<i32>} : memref<1x32xf32, #tpu.memory_space<vmem>>, vector<1x32xf32>,
      %c0_30 = arith.constant 0 : index
      %c0_31 = arith.constant 0 : index
      %53 = vector.load %arg15[%c0_30, %c0_31] : memref<1x32xf32, #tpu.memory_space<vmem>>, vector<1x32xf32>
      tpu.vector_store %arg15[%c0_30, %c0_31], %34 {strides = array<i32>} : memref<1x32xf32, #tpu.memory_space<vmem>>, vector<1x32xf32>,
    } else {
    }
    %26 = arith.extui %22 : i1 to i32
    %c0_i32_15 = arith.constant 0 : i32
    %27 = arith.cmpi ne, %26, %c0_i32_15 : i32
    scf.if %27 {
      %31 = tpu.iota {dimensions = array<i32: 0>} : vector<128x1xi32>
      %c128_i32_17 = arith.constant 128 : i32
      %32 = arith.muli %arg1, %c128_i32_17 : i32
      %33 = vector.broadcast %32 : i32 to vector<128x1xi32>
      %34 = arith.addi %31, %33 : vector<128x1xi32>
      %35 = vector.broadcast %0 : i32 to vector<128x1xi32>
      %36 = arith.cmpi slt, %34, %35 : vector<128x1xi32>
      %cst_18 = arith.constant -1.000000e+30 : f32
      %37 = vector.shape_cast %36 : vector<128x1xi1> to vector<128x1xi1>
      %38 = vector.broadcast %37 : vector<128x1xi1> to vector<128x32xi1>
      %39 = vector.broadcast %cst_18 : f32 to vector<128x32xf32>
      %40 = arith.select %38, %19, %39 : vector<128x32xi1>, vector<128x32xf32>
      %cst_19 = arith.constant 0.000000e+00 : f32
      %41 = vector.shape_cast %36 : vector<128x1xi1> to vector<128x1xi1>
      %42 = vector.broadcast %41 : vector<128x1xi1> to vector<128x32xi1>
      %43 = vector.broadcast %cst_19 : f32 to vector<128x32xf32>
      %44 = arith.select %42, %18, %43 : vector<128x32xi1>, vector<128x32xf32>
      %c0_20 = arith.constant 0 : index
      %c0_21 = arith.constant 0 : index
      %45 = vector.load %arg15[%c0_20, %c0_21] : memref<1x32xf32, #tpu.memory_space<vmem>>, vector<1x32xf32>
      %cst_22 = arith.constant dense<0xFF800000> : vector<32xf32>
      %46 = vector.multi_reduction <maximumf>, %40, %cst_22 [0] : vector<128x32xf32> to vector<32xf32>
      %47 = vector.shape_cast %46 : vector<32xf32> to vector<1x32xf32>
      %48 = arith.maximumf %45, %47 : vector<1x32xf32>
      %49 = arith.subf %45, %48 : vector<1x32xf32>
      %50 = math.exp %49 : vector<1x32xf32>
      %51 = vector.broadcast %48 : vector<1x32xf32> to vector<128x32xf32>
      %52 = arith.subf %40, %51 : vector<128x32xf32>
      %53 = math.exp %52 : vector<128x32xf32>
      %c0_23 = arith.constant 0 : index
      %c0_24 = arith.constant 0 : index
      %54 = vector.load %arg16[%c0_23, %c0_24] : memref<1x32xf32, #tpu.memory_space<vmem>>, vector<1x32xf32>
      %55 = arith.mulf %50, %54 : vector<1x32xf32>
      %cst_25 = arith.constant dense<0.000000e+00> : vector<32xf32>
      %56 = vector.multi_reduction <add>, %53, %cst_25 [0] : vector<128x32xf32> to vector<32xf32>
      %57 = vector.shape_cast %56 : vector<32xf32> to vector<1x32xf32>
      %58 = arith.addf %55, %57 : vector<1x32xf32>
      %c0_26 = arith.constant 0 : index
      %c0_27 = arith.constant 0 : index
      %59 = vector.load %arg16[%c0_26, %c0_27] : memref<1x32xf32, #tpu.memory_space<vmem>>, vector<1x32xf32>
      tpu.vector_store %arg16[%c0_26, %c0_27], %58 {strides = array<i32>} : memref<1x32xf32, #tpu.memory_space<vmem>>, vector<1x32xf32>,
      %c0_28 = arith.constant 0 : index
      %c0_29 = arith.constant 0 : index
      %60 = vector.load %arg17[%c0_28, %c0_29] : memref<1x32xf32, #tpu.memory_space<vmem>>, vector<1x32xf32>
      %61 = arith.mulf %50, %60 : vector<1x32xf32>
      %62 = arith.mulf %53, %44 : vector<128x32xf32>
      %cst_30 = arith.constant dense<0.000000e+00> : vector<32xf32>
      %63 = vector.multi_reduction <add>, %62, %cst_30 [0] : vector<128x32xf32> to vector<32xf32>
      %64 = vector.shape_cast %63 : vector<32xf32> to vector<1x32xf32>
      %65 = arith.addf %61, %64 : vector<1x32xf32>
      %c0_31 = arith.constant 0 : index
      %c0_32 = arith.constant 0 : index
      %66 = vector.load %arg17[%c0_31, %c0_32] : memref<1x32xf32, #tpu.memory_space<vmem>>, vector<1x32xf32>
      tpu.vector_store %arg17[%c0_31, %c0_32], %65 {strides = array<i32>} : memref<1x32xf32, #tpu.memory_space<vmem>>, vector<1x32xf32>,
      %c0_33 = arith.constant 0 : index
      %c0_34 = arith.constant 0 : index
      %67 = vector.load %arg15[%c0_33, %c0_34] : memref<1x32xf32, #tpu.memory_space<vmem>>, vector<1x32xf32>
      tpu.vector_store %arg15[%c0_33, %c0_34], %48 {strides = array<i32>} : memref<1x32xf32, #tpu.memory_space<vmem>>, vector<1x32xf32>,
    } else {
    }
    %c2_i32 = arith.constant 2 : i32
    %28 = arith.cmpi eq, %arg1, %c2_i32 : i32
    %29 = arith.extui %28 : i1 to i32
    %c0_i32_16 = arith.constant 0 : i32
    %30 = arith.cmpi ne, %29, %c0_i32_16 : i32
    scf.if %30 {
      %c0_17 = arith.constant 0 : index
      %c0_18 = arith.constant 0 : index
      %31 = vector.load %arg17[%c0_17, %c0_18] : memref<1x32xf32, #tpu.memory_space<vmem>>, vector<1x32xf32>
      %c0_19 = arith.constant 0 : index
      %c0_20 = arith.constant 0 : index
      %32 = vector.load %arg16[%c0_19, %c0_20] : memref<1x32xf32, #tpu.memory_space<vmem>>, vector<1x32xf32>
      %33 = tpu.reciprocal %32 : vector<1x32xf32> -> vector<1x32xf32>
      %34 = arith.mulf %31, %33 : vector<1x32xf32>
      %c0_21 = arith.constant 0 : index
      %c0_22 = arith.constant 0 : index
      %35 = vector.load %arg8[%c0_21, %c0_22] : memref<32x32xf32, #tpu.memory_space<vmem>>, vector<32x32xf32>
      %cst_23 = arith.constant dense<0.000000e+00> : vector<1x32xf32>
      %36 = tpu.matmul %34, %35, %cst_23 {dimension_numbers = #tpu.dot_dimension_numbers<[1], [0], [0], [1], [0, 0, 1, 1], [], []>} : vector<1x32xf32>, vector<32x32xf32>, vector<1x32xf32> -> vector<1x32xf32>
      %c0_24 = arith.constant 0 : index
      %c0_25 = arith.constant 0 : index
      %37 = vector.load %arg9[%c0_24, %c0_25] : memref<1x32xf32, #tpu.memory_space<vmem>>, vector<1x32xf32>
      %38 = arith.addf %36, %37 : vector<1x32xf32>
      %cst_26 = arith.constant dense<0.000000e+00> : vector<1xf32>
      %39 = vector.multi_reduction <add>, %38, %cst_26 [1] : vector<1x32xf32> to vector<1xf32>
      %40 = vector.shape_cast %39 : vector<1xf32> to vector<1x1xf32>
      %cst_27 = arith.constant 3.200000e+01 : f32
      %41 = vector.broadcast %cst_27 : f32 to vector<1x1xf32>
      %42 = arith.divf %40, %41 : vector<1x1xf32>
      %43 = vector.broadcast %42 : vector<1x1xf32> to vector<1x32xf32>
      %44 = arith.subf %38, %43 : vector<1x32xf32>
      %45 = arith.mulf %44, %44 : vector<1x32xf32>
      %cst_28 = arith.constant dense<0.000000e+00> : vector<1xf32>
      %46 = vector.multi_reduction <add>, %45, %cst_28 [1] : vector<1x32xf32> to vector<1xf32>
      %47 = vector.shape_cast %46 : vector<1xf32> to vector<1x1xf32>
      %cst_29 = arith.constant 3.200000e+01 : f32
      %48 = vector.broadcast %cst_29 : f32 to vector<1x1xf32>
      %49 = arith.divf %47, %48 : vector<1x1xf32>
      %cst_30 = arith.constant 9.99999997E-7 : f32
      %50 = vector.broadcast %cst_30 : f32 to vector<1x1xf32>
      %51 = arith.addf %49, %50 : vector<1x1xf32>
      %52 = math.rsqrt %51 : vector<1x1xf32>
      %53 = vector.broadcast %52 : vector<1x1xf32> to vector<1x32xf32>
      %54 = arith.mulf %44, %53 : vector<1x32xf32>
      %c0_31 = arith.constant 0 : index
      %c0_32 = arith.constant 0 : index
      %55 = vector.load %arg10[%c0_31, %c0_32] : memref<1x32xf32, #tpu.memory_space<vmem>>, vector<1x32xf32>
      %56 = arith.mulf %54, %55 : vector<1x32xf32>
      %c0_33 = arith.constant 0 : index
      %c0_34 = arith.constant 0 : index
      %57 = vector.load %arg11[%c0_33, %c0_34] : memref<1x32xf32, #tpu.memory_space<vmem>>, vector<1x32xf32>
      %58 = arith.addf %56, %57 : vector<1x32xf32>
      %c0_35 = arith.constant 0 : index
      %c0_36 = arith.constant 0 : index
      %59 = vector.load %arg12[%c0_35, %c0_36] : memref<32x4xf32, #tpu.memory_space<vmem>>, vector<32x4xf32>
      %cst_37 = arith.constant dense<0.000000e+00> : vector<1x4xf32>
      %60 = tpu.matmul %58, %59, %cst_37 {dimension_numbers = #tpu.dot_dimension_numbers<[1], [0], [0], [1], [0, 0, 1, 1], [], []>} : vector<1x32xf32>, vector<32x4xf32>, vector<1x4xf32> -> vector<1x4xf32>
      %c0_38 = arith.constant 0 : index
      %c0_39 = arith.constant 0 : index
      %61 = vector.load %arg13[%c0_38, %c0_39] : memref<1x4xf32, #tpu.memory_space<vmem>>, vector<1x4xf32>
      %62 = arith.addf %60, %61 : vector<1x4xf32>
      %c0_40 = arith.constant 0 : index
      %c0_41 = arith.constant 0 : index
      %c0_42 = arith.constant 0 : index
      %63 = vector.load %arg14[%c0_40, %c0_41, %c0_42] : memref<1x1x4xf32, #tpu.memory_space<vmem>>, vector<1x1x4xf32>
      %64 = vector.shape_cast %63 : vector<1x1x4xf32> to vector<1x4xf32>
      %65 = vector.shape_cast %62 : vector<1x4xf32> to vector<1x1x4xf32>
      tpu.vector_store %arg14[%c0_40, %c0_41, %c0_42], %65 {strides = array<i32>} : memref<1x1x4xf32, #tpu.memory_space<vmem>>, vector<1x1x4xf32>,
    } else {
    }
    return
  }
  func.func @transform_0(%arg0: i32, %arg1: i32, %arg2: memref<1xi32, #tpu.memory_space<smem>>) -> (i32, i32, i32) {
    %c0_i32 = arith.constant 0 : i32
    %c0_i32_0 = arith.constant 0 : i32
    return %arg0, %arg1, %c0_i32 : i32, i32, i32
  }
  func.func @transform_1(%arg0: i32, %arg1: i32, %arg2: memref<1xi32, #tpu.memory_space<smem>>) -> (i32, i32) {
    %c0_i32 = arith.constant 0 : i32
    %c0_i32_0 = arith.constant 0 : i32
    %c0_i32_1 = arith.constant 0 : i32
    return %c0_i32, %c0_i32_0 : i32, i32
  }
  func.func @transform_2(%arg0: i32, %arg1: i32, %arg2: memref<1xi32, #tpu.memory_space<smem>>) -> (i32, i32) {
    %c0_i32 = arith.constant 0 : i32
    %c0_i32_0 = arith.constant 0 : i32
    %c0_i32_1 = arith.constant 0 : i32
    return %c0_i32, %c0_i32_0 : i32, i32
  }
  func.func @transform_3(%arg0: i32, %arg1: i32, %arg2: memref<1xi32, #tpu.memory_space<smem>>) -> (i32, i32) {
    %c0_i32 = arith.constant 0 : i32
    %c0_i32_0 = arith.constant 0 : i32
    %c0_i32_1 = arith.constant 0 : i32
    return %c0_i32, %c0_i32_0 : i32, i32
  }
  func.func @transform_4(%arg0: i32, %arg1: i32, %arg2: memref<1xi32, #tpu.memory_space<smem>>) -> (i32, i32) {
    %c0_i32 = arith.constant 0 : i32
    %c0_i32_0 = arith.constant 0 : i32
    %c0_i32_1 = arith.constant 0 : i32
    return %c0_i32, %c0_i32_0 : i32, i32
  }
  func.func @transform_5(%arg0: i32, %arg1: i32, %arg2: memref<1xi32, #tpu.memory_space<smem>>) -> (i32, i32) {
    %c0_i32 = arith.constant 0 : i32
    %c0_i32_0 = arith.constant 0 : i32
    %c0_i32_1 = arith.constant 0 : i32
    return %c0_i32, %c0_i32_0 : i32, i32
  }
  func.func @transform_6(%arg0: i32, %arg1: i32, %arg2: memref<1xi32, #tpu.memory_space<smem>>) -> (i32, i32) {
    %c0_i32 = arith.constant 0 : i32
    %c0_i32_0 = arith.constant 0 : i32
    %c0_i32_1 = arith.constant 0 : i32
    return %c0_i32, %c0_i32_0 : i32, i32
  }
  func.func @transform_7(%arg0: i32, %arg1: i32, %arg2: memref<1xi32, #tpu.memory_space<smem>>) -> (i32, i32) {
    %c0_i32 = arith.constant 0 : i32
    %c0_i32_0 = arith.constant 0 : i32
    %c0_i32_1 = arith.constant 0 : i32
    return %c0_i32, %c0_i32_0 : i32, i32
  }
  func.func @transform_8(%arg0: i32, %arg1: i32, %arg2: memref<1xi32, #tpu.memory_space<smem>>) -> (i32, i32) {
    %c0_i32 = arith.constant 0 : i32
    %c0_i32_0 = arith.constant 0 : i32
    %c0_i32_1 = arith.constant 0 : i32
    return %c0_i32, %c0_i32_0 : i32, i32
  }
  func.func @transform_9(%arg0: i32, %arg1: i32, %arg2: memref<1xi32, #tpu.memory_space<smem>>) -> (i32, i32) {
    %c0_i32 = arith.constant 0 : i32
    %c0_i32_0 = arith.constant 0 : i32
    %c0_i32_1 = arith.constant 0 : i32
    return %c0_i32, %c0_i32_0 : i32, i32
  }
  func.func @transform_10(%arg0: i32, %arg1: i32, %arg2: memref<1xi32, #tpu.memory_space<smem>>) -> (i32, i32) {
    %c0_i32 = arith.constant 0 : i32
    %c0_i32_0 = arith.constant 0 : i32
    %c0_i32_1 = arith.constant 0 : i32
    return %c0_i32, %c0_i32_0 : i32, i32
  }
  func.func @transform_11(%arg0: i32, %arg1: i32, %arg2: memref<1xi32, #tpu.memory_space<smem>>) -> (i32, i32, i32) {
    %c0_i32 = arith.constant 0 : i32
    %c0_i32_0 = arith.constant 0 : i32
    %c0_i32_1 = arith.constant 0 : i32
    return %arg0, %c0_i32, %c0_i32_0 : i32, i32, i32
  }
}

</mosaic_0001>

<llo_original>
// kernel: tpu_custom_call.1
$region0: #{tpu_custom_call.1}
  #allocation0 [shape = 'u32[]', space=smem, size = 0x4, offset = 0x4, fixed_abs, tag = 'smem constant byte address 0x4 - core index']
  #allocation1 [shape = 'u32[144,128]{1,0:T(1,128)}', space=vmem, size = 0x12000, scoped, tag = 'internal scratch']
  #allocation2 [shape = 'f32[1,32]{1,0:T(1,128)}', space=vmem, size = 0x200, scoped, tag = 'scratch operand']
  #allocation3 [shape = 'f32[1,32]{1,0:T(1,128)}', space=vmem, size = 0x200, scoped, tag = 'scratch operand']
  #allocation4 [shape = 'f32[1,32]{1,0:T(1,128)}', space=vmem, size = 0x200, scoped, tag = 'scratch operand']
  #allocation5 [shape = 's32[1]{0}', space=sflag, size = 0x4, scoped, tag = 'scoped memory for tpu_custom_call.1']
  #allocation6 [shape = 's32[1]{0:T(128)S(6)}', space=smem, size = 0x200, scoped, tag = 'prefetched SMEM operand 0']
  %s0 = inlined_call_operand.<no memory space> [shape: s32[1], index: 0, kind: input, shape index: {}]
  %s1 = inlined_call_operand.vmem [shape: f32[1,300,64], index: 1, kind: input, shape index: {}]
  %s2 = inlined_call_operand.vmem [shape: f32[64,32], index: 2, kind: input, shape index: {}]
  %s3 = inlined_call_operand.vmem [shape: f32[1,32], index: 3, kind: input, shape index: {}]
  %s4 = inlined_call_operand.vmem [shape: f32[32,64], index: 4, kind: input, shape index: {}]
  %s5 = inlined_call_operand.vmem [shape: f32[1,64], index: 5, kind: input, shape index: {}]
  %s6 = inlined_call_operand.vmem [shape: f32[32,32], index: 6, kind: input, shape index: {}]
  %s7 = inlined_call_operand.vmem [shape: f32[1,32], index: 7, kind: input, shape index: {}]
  %s8 = inlined_call_operand.vmem [shape: f32[1,32], index: 8, kind: input, shape index: {}]
  %s9 = inlined_call_operand.vmem [shape: f32[1,32], index: 9, kind: input, shape index: {}]
  %s10 = inlined_call_operand.vmem [shape: f32[32,4], index: 10, kind: input, shape index: {}]
  %s11 = inlined_call_operand.vmem [shape: f32[1,4], index: 11, kind: input, shape index: {}]
  %s12 = inlined_call_operand.hbm [shape: f32[1,1,4], index: 12, kind: output, shape index: {}]
  %s13 = sld [smem:[#allocation0]]
  $region93: #{tpu_custom_call.1} parent=0
    _
  %s15 = ssub.s32 1, %s13
  %s16 = scalar_select 0, %s15, %s13
  %17 = sst [smem:[#allocation6]] %s0
  $region1: #{tpu_custom_call.1} parent=0
    #allocation7 [shape = 'u8[512]{0}', space=vmem, size = 0x400, scoped, tag = 'output window, operand 0, single buffered']
    #allocation8 [shape = 's32[2]{0}', space=sflag, size = 0x8, scoped, tag = 'scoped memory for tpu_custom_call.1']
    %18 = vsyncpa [#allocation8], 0
    loop: start=0, step=1, limit=5
    $region2: #{tpu_custom_call.1} parent=1 // loop_pre_header
      _
    $region3: #{tpu_custom_call.1} parent=1 // loop_header
      %s20 = sphi 0, %s24
      %p21 = scmp.ge.s32.totalorder %s20, 5
      %s27 = sphi 0, %s39
      %s28 = sphi 0, %s35
      %s29 = sphi 0, %s27
      %s30 = sphi 0, %s28
      %s31 = sphi 0, %s29
      %s32 = sphi 0, %s30
      %s44 = sphi 0, %s46
      %s47 = sphi 0, %s44
      %s48 = sphi 0, %s47
      %s64 = sphi 0, %s48
      %s68 = sphi 0, %s68
      %s70 = sphi 0, %s68
      %s71 = sphi 0, %s70
      %s85 = sphi 0, %s71
      %s89 = sphi 0, %s89
      %s91 = sphi 0, %s89
      %s92 = sphi 0, %s91
      %s106 = sphi 0, %s92
      %s110 = sphi 0, %s110
      %s112 = sphi 0, %s110
      %s113 = sphi 0, %s112
      %s127 = sphi 0, %s113
      %s131 = sphi 0, %s131
      %s133 = sphi 0, %s131
      %s134 = sphi 0, %s133
      %s148 = sphi 0, %s134
      %s152 = sphi 0, %s152
      %s154 = sphi 0, %s152
      %s155 = sphi 0, %s154
      %s169 = sphi 0, %s155
      %s173 = sphi 0, %s173
      %s175 = sphi 0, %s173
      %s176 = sphi 0, %s175
      %s190 = sphi 0, %s176
      %s194 = sphi 0, %s194
      %s196 = sphi 0, %s194
      %s197 = sphi 0, %s196
      %s211 = sphi 0, %s197
      %s215 = sphi 0, %s215
      %s217 = sphi 0, %s215
      %s218 = sphi 0, %s217
      %s232 = sphi 0, %s218
      %s236 = sphi 0, %s236
      %s238 = sphi 0, %s236
      %s239 = sphi 0, %s238
      %s253 = sphi 0, %s239
      %s257 = sphi 0, %s257
      %s259 = sphi 0, %s257
      %s260 = sphi 0, %s259
      %s274 = sphi 0, %s260
      %s280 = sphi 0, %s282
      %s283 = sphi 0, %s280
      %s284 = sphi 0, %s283
      %s300 = sphi 0, %s284
    $region4: #{tpu_custom_call.1} parent=1 // loop_header_branch
      %23 = sbr.rel (%p21) target = $region8
    $region5: #{tpu_custom_call.1} parent=1 // loop_body
      %s25 = ssub.s32 %s20, 1
      %s26 = ssub.s32 %s20, 2
      %s33 = sadd.s32 1, %s28
      %p34 = scmp.ge.s32.totalorder %s33, 3
      %s35 = scalar_select %p34, 0, %s33
      %s36 = sadd.s32 1, %s27
      %s37 = scalar_select %p34, %s36, %s27
      %p38 = scmp.ge.s32.totalorder %s37, 1
      %s39 = scalar_select %p38, 0, %s37
      %s40 = ssub.s32 %s27, %s39
      %s41 = ssub.s32 %s28, %s35
      %s42 = sor.u32 %s40, %s41
      %p43 = scmp.eq.s32.totalorder %s42, 0
      %s45 = sadd.s32 %s44, 1
      %s46 = scalar_select %p43, %s44, %s45
      %p49 = pneg %p43
      %p50 = scmp.eq.s32.totalorder %s20, 2
      %p51 = por %p49, %p50
      %p52 = scmp.ne.s32.totalorder %s44, %s47
      %p53 = scmp.eq.s32.totalorder %s20, 0
      %p54 = por %p52, %p53
      %p55 = scmp.ne.s32.totalorder %s44, %s47
      %p56 = scmp.eq.s32.totalorder %s25, 2
      %p57 = por %p55, %p56
      %p58 = scmp.ne.s32.totalorder %s47, %s48
      %p59 = scmp.eq.s32.totalorder %s25, 0
      %p60 = por %p58, %p59
      %p61 = scmp.ne.s32.totalorder %s47, %s48
      %p62 = scmp.eq.s32.totalorder %s26, 2
      %p63 = por %p61, %p62
      %p65 = scmp.ne.s32.totalorder %s48, %s64
      %p66 = scmp.eq.s32.totalorder %s26, 0
      %p67 = por %p65, %p66
      %s69 = sadd.s32 %s68, 1
      %p72 = scmp.eq.s32.totalorder %s20, 2
      %p73 = scmp.ne.s32.totalorder %s68, %s70
      %p74 = scmp.eq.s32.totalorder %s20, 0
      %p75 = por %p73, %p74
      %p76 = scmp.ne.s32.totalorder %s68, %s70
      %p77 = scmp.eq.s32.totalorder %s25, 2
      %p78 = por %p76, %p77
      %p79 = scmp.ne.s32.totalorder %s70, %s71
      %p80 = scmp.eq.s32.totalorder %s25, 0
      %p81 = por %p79, %p80
      %p82 = scmp.ne.s32.totalorder %s70, %s71
      %p83 = scmp.eq.s32.totalorder %s26, 2
      %p84 = por %p82, %p83
      %p86 = scmp.ne.s32.totalorder %s71, %s85
      %p87 = scmp.eq.s32.totalorder %s26, 0
      %p88 = por %p86, %p87
      %s90 = sadd.s32 %s89, 1
      %p93 = scmp.eq.s32.totalorder %s20, 2
      %p94 = scmp.ne.s32.totalorder %s89, %s91
      %p95 = scmp.eq.s32.totalorder %s20, 0
      %p96 = por %p94, %p95
      %p97 = scmp.ne.s32.totalorder %s89, %s91
      %p98 = scmp.eq.s32.totalorder %s25, 2
      %p99 = por %p97, %p98
      %p100 = scmp.ne.s32.totalorder %s91, %s92
      %p101 = scmp.eq.s32.totalorder %s25, 0
      %p102 = por %p100, %p101
      %p103 = scmp.ne.s32.totalorder %s91, %s92
      %p104 = scmp.eq.s32.totalorder %s26, 2
      %p105 = por %p103, %p104
      %p107 = scmp.ne.s32.totalorder %s92, %s106
      %p108 = scmp.eq.s32.totalorder %s26, 0
      %p109 = por %p107, %p108
      %s111 = sadd.s32 %s110, 1
      %p114 = scmp.eq.s32.totalorder %s20, 2
      %p115 = scmp.ne.s32.totalorder %s110, %s112
      %p116 = scmp.eq.s32.totalorder %s20, 0
      %p117 = por %p115, %p116
      %p118 = scmp.ne.s32.totalorder %s110, %s112
      %p119 = scmp.eq.s32.totalorder %s25, 2
      %p120 = por %p118, %p119
      %p121 = scmp.ne.s32.totalorder %s112, %s113
      %p122 = scmp.eq.s32.totalorder %s25, 0
      %p123 = por %p121, %p122
      %p124 = scmp.ne.s32.totalorder %s112, %s113
      %p125 = scmp.eq.s32.totalorder %s26, 2
      %p126 = por %p124, %p125
      %p128 = scmp.ne.s32.totalorder %s113, %s127
      %p129 = scmp.eq.s32.totalorder %s26, 0
      %p130 = por %p128, %p129
      %s132 = sadd.s32 %s131, 1
      %p135 = scmp.eq.s32.totalorder %s20, 2
      %p136 = scmp.ne.s32.totalorder %s131, %s133
      %p137 = scmp.eq.s32.totalorder %s20, 0
      %p138 = por %p136, %p137
      %p139 = scmp.ne.s32.totalorder %s131, %s133
      %p140 = scmp.eq.s32.totalorder %s25, 2
      %p141 = por %p139, %p140
      %p142 = scmp.ne.s32.totalorder %s133, %s134
      %p143 = scmp.eq.s32.totalorder %s25, 0
      %p144 = por %p142, %p143
      %p145 = scmp.ne.s32.totalorder %s133, %s134
      %p146 = scmp.eq.s32.totalorder %s26, 2
      %p147 = por %p145, %p146
      %p149 = scmp.ne.s32.totalorder %s134, %s148
      %p150 = scmp.eq.s32.totalorder %s26, 0
      %p151 = por %p149, %p150
      %s153 = sadd.s32 %s152, 1
      %p156 = scmp.eq.s32.totalorder %s20, 2
      %p157 = scmp.ne.s32.totalorder %s152, %s154
      %p158 = scmp.eq.s32.totalorder %s20, 0
      %p159 = por %p157, %p158
      %p160 = scmp.ne.s32.totalorder %s152, %s154
      %p161 = scmp.eq.s32.totalorder %s25, 2
      %p162 = por %p160, %p161
      %p163 = scmp.ne.s32.totalorder %s154, %s155
      %p164 = scmp.eq.s32.totalorder %s25, 0
      %p165 = por %p163, %p164
      %p166 = scmp.ne.s32.totalorder %s154, %s155
      %p167 = scmp.eq.s32.totalorder %s26, 2
      %p168 = por %p166, %p167
      %p170 = scmp.ne.s32.totalorder %s155, %s169
      %p171 = scmp.eq.s32.totalorder %s26, 0
      %p172 = por %p170, %p171
      %s174 = sadd.s32 %s173, 1
      %p177 = scmp.eq.s32.totalorder %s20, 2
      %p178 = scmp.ne.s32.totalorder %s173, %s175
      %p179 = scmp.eq.s32.totalorder %s20, 0
      %p180 = por %p178, %p179
      %p181 = scmp.ne.s32.totalorder %s173, %s175
      %p182 = scmp.eq.s32.totalorder %s25, 2
      %p183 = por %p181, %p182
      %p184 = scmp.ne.s32.totalorder %s175, %s176
      %p185 = scmp.eq.s32.totalorder %s25, 0
      %p186 = por %p184, %p185
      %p187 = scmp.ne.s32.totalorder %s175, %s176
      %p188 = scmp.eq.s32.totalorder %s26, 2
      %p189 = por %p187, %p188
      %p191 = scmp.ne.s32.totalorder %s176, %s190
      %p192 = scmp.eq.s32.totalorder %s26, 0
      %p193 = por %p191, %p192
      %s195 = sadd.s32 %s194, 1
      %p198 = scmp.eq.s32.totalorder %s20, 2
      %p199 = scmp.ne.s32.totalorder %s194, %s196
      %p200 = scmp.eq.s32.totalorder %s20, 0
      %p201 = por %p199, %p200
      %p202 = scmp.ne.s32.totalorder %s194, %s196
      %p203 = scmp.eq.s32.totalorder %s25, 2
      %p204 = por %p202, %p203
      %p205 = scmp.ne.s32.totalorder %s196, %s197
      %p206 = scmp.eq.s32.totalorder %s25, 0
      %p207 = por %p205, %p206
      %p208 = scmp.ne.s32.totalorder %s196, %s197
      %p209 = scmp.eq.s32.totalorder %s26, 2
      %p210 = por %p208, %p209
      %p212 = scmp.ne.s32.totalorder %s197, %s211
      %p213 = scmp.eq.s32.totalorder %s26, 0
      %p214 = por %p212, %p213
      %s216 = sadd.s32 %s215, 1
      %p219 = scmp.eq.s32.totalorder %s20, 2
      %p220 = scmp.ne.s32.totalorder %s215, %s217
      %p221 = scmp.eq.s32.totalorder %s20, 0
      %p222 = por %p220, %p221
      %p223 = scmp.ne.s32.totalorder %s215, %s217
      %p224 = scmp.eq.s32.totalorder %s25, 2
      %p225 = por %p223, %p224
      %p226 = scmp.ne.s32.totalorder %s217, %s218
      %p227 = scmp.eq.s32.totalorder %s25, 0
      %p228 = por %p226, %p227
      %p229 = scmp.ne.s32.totalorder %s217, %s218
      %p230 = scmp.eq.s32.totalorder %s26, 2
      %p231 = por %p229, %p230
      %p233 = scmp.ne.s32.totalorder %s218, %s232
      %p234 = scmp.eq.s32.totalorder %s26, 0
      %p235 = por %p233, %p234
      %s237 = sadd.s32 %s236, 1
      %p240 = scmp.eq.s32.totalorder %s20, 2
      %p241 = scmp.ne.s32.totalorder %s236, %s238
      %p242 = scmp.eq.s32.totalorder %s20, 0
      %p243 = por %p241, %p242
      %p244 = scmp.ne.s32.totalorder %s236, %s238
      %p245 = scmp.eq.s32.totalorder %s25, 2
      %p246 = por %p244, %p245
      %p247 = scmp.ne.s32.totalorder %s238, %s239
      %p248 = scmp.eq.s32.totalorder %s25, 0
      %p249 = por %p247, %p248
      %p250 = scmp.ne.s32.totalorder %s238, %s239
      %p251 = scmp.eq.s32.totalorder %s26, 2
      %p252 = por %p250, %p251
      %p254 = scmp.ne.s32.totalorder %s239, %s253
      %p255 = scmp.eq.s32.totalorder %s26, 0
      %p256 = por %p254, %p255
      %s258 = sadd.s32 %s257, 1
      %p261 = scmp.eq.s32.totalorder %s20, 2
      %p262 = scmp.ne.s32.totalorder %s257, %s259
      %p263 = scmp.eq.s32.totalorder %s20, 0
      %p264 = por %p262, %p263
      %p265 = scmp.ne.s32.totalorder %s257, %s259
      %p266 = scmp.eq.s32.totalorder %s25, 2
      %p267 = por %p265, %p266
      %p268 = scmp.ne.s32.totalorder %s259, %s260
      %p269 = scmp.eq.s32.totalorder %s25, 0
      %p270 = por %p268, %p269
      %p271 = scmp.ne.s32.totalorder %s259, %s260
      %p272 = scmp.eq.s32.totalorder %s26, 2
      %p273 = por %p271, %p272
      %p275 = scmp.ne.s32.totalorder %s260, %s274
      %p276 = scmp.eq.s32.totalorder %s26, 0
      %p277 = por %p275, %p276
      %s278 = ssub.s32 %s27, %s39
      %p279 = scmp.eq.s32.totalorder %s278, 0
      %s281 = sadd.s32 %s280, 1
      %s282 = scalar_select %p279, %s280, %s281
      %p285 = pneg %p279
      %p286 = scmp.eq.s32.totalorder %s20, 2
      %p287 = por %p285, %p286
      %p288 = scmp.ne.s32.totalorder %s280, %s283
      %p289 = scmp.eq.s32.totalorder %s20, 0
      %p290 = por %p288, %p289
      %p291 = scmp.ne.s32.totalorder %s280, %s283
      %p292 = scmp.eq.s32.totalorder %s25, 2
      %p293 = por %p291, %p292
      %p294 = scmp.ne.s32.totalorder %s283, %s284
      %p295 = scmp.eq.s32.totalorder %s25, 0
      %p296 = por %p294, %p295
      %p297 = scmp.ne.s32.totalorder %s283, %s284
      %p298 = scmp.eq.s32.totalorder %s26, 2
      %p299 = por %p297, %p298
      %p301 = scmp.ne.s32.totalorder %s284, %s300
      %p302 = scmp.eq.s32.totalorder %s26, 0
      %p303 = por %p301, %p302
      %p304 = scmp.le.s32.totalorder 1, %s20
      %p305 = scmp.lt.s32.totalorder %s20, 4
      %p306 = pnand %p304, %p305
      %p307 = pneg %p306
      // Predicated region
      $region9: #{tpu_custom_call.1} parent=5 // pred_check
        _
      $region10: #{tpu_custom_call.1} parent=5 // pred_check_branch
        %309 = sbr.rel (%p306) target = $region12
      $region11: #{tpu_custom_call.1} parent=5 // pred_region
        %s310 = ssub.s32 %s20, 1
        // Predicated region
        $region13: #{tpu_custom_call.1} parent=11 // pred_check
          %p311 = pneg %p81
        $region14: #{tpu_custom_call.1} parent=11 // pred_check_branch
          %313 = sbr.rel (%p311) target = $region16
        $region15: #{tpu_custom_call.1} parent=11 // pred_region
          _
        $region16: #{tpu_custom_call.1} parent=11 // pred_fallthru
          _
        // Predicated region
        $region17: #{tpu_custom_call.1} parent=11 // pred_check
          %p314 = pneg %p102
        $region18: #{tpu_custom_call.1} parent=11 // pred_check_branch
          %316 = sbr.rel (%p314) target = $region20
        $region19: #{tpu_custom_call.1} parent=11 // pred_region
          _
        $region20: #{tpu_custom_call.1} parent=11 // pred_fallthru
          _
        // Predicated region
        $region21: #{tpu_custom_call.1} parent=11 // pred_check
          %p317 = pneg %p123
        $region22: #{tpu_custom_call.1} parent=11 // pred_check_branch
          %319 = sbr.rel (%p317) target = $region24
        $region23: #{tpu_custom_call.1} parent=11 // pred_region
          _
        $region24: #{tpu_custom_call.1} parent=11 // pred_fallthru
          _
        // Predicated region
        $region25: #{tpu_custom_call.1} parent=11 // pred_check
          %p320 = pneg %p144
        $region26: #{tpu_custom_call.1} parent=11 // pred_check_branch
          %322 = sbr.rel (%p320) target = $region28
        $region27: #{tpu_custom_call.1} parent=11 // pred_region
          _
        $region28: #{tpu_custom_call.1} parent=11 // pred_fallthru
          _
        // Predicated region
        $region29: #{tpu_custom_call.1} parent=11 // pred_check
          %p323 = pneg %p165
        $region30: #{tpu_custom_call.1} parent=11 // pred_check_branch
          %325 = sbr.rel (%p323) target = $region32
        $region31: #{tpu_custom_call.1} parent=11 // pred_region
          _
        $region32: #{tpu_custom_call.1} parent=11 // pred_fallthru
          _
        // Predicated region
        $region33: #{tpu_custom_call.1} parent=11 // pred_check
          %p326 = pneg %p186
        $region34: #{tpu_custom_call.1} parent=11 // pred_check_branch
          %328 = sbr.rel (%p326) target = $region36
        $region35: #{tpu_custom_call.1} parent=11 // pred_region
          _
        $region36: #{tpu_custom_call.1} parent=11 // pred_fallthru
          _
        // Predicated region
        $region37: #{tpu_custom_call.1} parent=11 // pred_check
          %p329 = pneg %p207
        $region38: #{tpu_custom_call.1} parent=11 // pred_check_branch
          %331 = sbr.rel (%p329) target = $region40
        $region39: #{tpu_custom_call.1} parent=11 // pred_region
          _
        $region40: #{tpu_custom_call.1} parent=11 // pred_fallthru
          _
        // Predicated region
        $region41: #{tpu_custom_call.1} parent=11 // pred_check
          %p332 = pneg %p228
        $region42: #{tpu_custom_call.1} parent=11 // pred_check_branch
          %334 = sbr.rel (%p332) target = $region44
        $region43: #{tpu_custom_call.1} parent=11 // pred_region
          _
        $region44: #{tpu_custom_call.1} parent=11 // pred_fallthru
          _
        // Predicated region
        $region45: #{tpu_custom_call.1} parent=11 // pred_check
          %p335 = pneg %p249
        $region46: #{tpu_custom_call.1} parent=11 // pred_check_branch
          %337 = sbr.rel (%p335) target = $region48
        $region47: #{tpu_custom_call.1} parent=11 // pred_region
          _
        $region48: #{tpu_custom_call.1} parent=11 // pred_fallthru
          _
        // Predicated region
        $region49: #{tpu_custom_call.1} parent=11 // pred_check
          %p338 = pneg %p270
        $region50: #{tpu_custom_call.1} parent=11 // pred_check_branch
          %340 = sbr.rel (%p338) target = $region52
        $region51: #{tpu_custom_call.1} parent=11 // pred_region
          _
        $region52: #{tpu_custom_call.1} parent=11 // pred_fallthru
          _
      $region12: #{tpu_custom_call.1} parent=5 // pred_fallthru
        _
      %p341 = scmp.lt.s32.totalorder %s20, 3
      // Predicated region
      $region53: #{tpu_custom_call.1} parent=5 // pred_check
        %p342 = pneg %p341
      $region54: #{tpu_custom_call.1} parent=5 // pred_check_branch
        %344 = sbr.rel (%p342) target = $region56
      $region55: #{tpu_custom_call.1} parent=5 // pred_region
        // Predicated region
        $region57: #{tpu_custom_call.1} parent=55 // pred_check
          %p345 = pneg %p54
        $region58: #{tpu_custom_call.1} parent=55 // pred_check_branch
          %347 = sbr.rel (%p345) target = $region60
        $region59: #{tpu_custom_call.1} parent=55 // pred_region
          %s348 = smul.u32 16, %s28
          %s349 = ssub.s32 38, %s348
          %p350 = scmp.lt.s32.totalorder %s349, 16
          %s351 = scalar_select %p350, %s349, 16
          %s352 = smul.u32 128, %s351
          %p353 = scmp.lt.s32.totalorder %s27, 0
          %s354 = scalar_select %p353, %s27, 0
          %p355 = scmp.lt.s32.totalorder %s348, 37
          %s356 = scalar_select %p355, %s348, 37
          %s357 = smul.addr %s354, 38
          %s358 = sadd.s32 %s356, %s357
          %s359 = smul.addr %s358, 8
          %s360 = scalar_lea.vmem %s1, %s359
          %s361 = smul.u32 16, %s28
          %s362 = ssub.s32 38, %s361
          %p363 = scmp.lt.s32.totalorder %s362, 16
          %s364 = scalar_select %p363, %s362, 16
          %s365 = smul.u32 128, %s364
        $region60: #{tpu_custom_call.1} parent=55 // pred_fallthru
          _
      $region56: #{tpu_custom_call.1} parent=5 // pred_fallthru
        _
      %p366 = scmp.le.s32.totalorder 1, %s20
      %p367 = scmp.lt.s32.totalorder %s20, 4
      %p368 = pnand %p366, %p367
      %p369 = pneg %p368
      // Predicated region
      $region61: #{tpu_custom_call.1} parent=5 // pred_check
        _
      $region62: #{tpu_custom_call.1} parent=5 // pred_check_branch
        %371 = sbr.rel (%p368) target = $region64
      $region63: #{tpu_custom_call.1} parent=5 // pred_region
        %s372 = ssub.s32 %s20, 1
        %s373 = smul.u32 16, %s30
        %s374 = ssub.s32 38, %s373
        %p375 = scmp.lt.s32.totalorder %s374, 16
        %s376 = scalar_select %p375, %s374, 16
        %s377 = smul.u32 128, %s376
        %p378 = scmp.lt.s32.totalorder %s29, 0
        %s379 = scalar_select %p378, %s29, 0
        %p380 = scmp.lt.s32.totalorder %s373, 37
        %s381 = scalar_select %p380, %s373, 37
        %s382 = smul.addr %s379, 38
        %s383 = sadd.s32 %s381, %s382
        %s384 = smul.addr %s383, 8
        %s385 = scalar_lea.vmem %s1, %s384
        %p386 = pneg %p60
        %p387 = pneg %p57
        %p388 = pneg %p81
        %p389 = pneg %p78
        %p390 = pneg %p102
        %p391 = pneg %p99
        %p392 = pneg %p123
        %p393 = pneg %p120
        %p394 = pneg %p144
        %p395 = pneg %p141
        %p396 = pneg %p165
        %p397 = pneg %p162
        %p398 = pneg %p186
        %p399 = pneg %p183
        %p400 = pneg %p207
        %p401 = pneg %p204
        %p402 = pneg %p228
        %p403 = pneg %p225
        %p404 = pneg %p249
        %p405 = pneg %p246
        %p406 = pneg %p270
        %p407 = pneg %p267
        %p408 = pneg %p296
        %p409 = pneg %p293
        %s410 = smul.u32 16, %s30
        %s411 = ssub.s32 38, %s410
        %p412 = scmp.lt.s32.totalorder %s411, 16
        %s413 = scalar_select %p412, %s411, 16
        %s414 = smul.u32 128, %s413
        %p415 = scmp.lt.s32.totalorder %s29, 0
        %s416 = scalar_select %p415, %s29, 0
        %p417 = scmp.lt.s32.totalorder %s410, 37
        %s418 = scalar_select %p417, %s410, 37
        %s419 = smul.addr %s416, 38
        %s420 = sadd.s32 %s418, %s419
        %s421 = smul.addr %s420, 8
        %s422 = scalar_lea.vmem %s1, %s421
        %s423 = smul.u32 16, %s30
        %s424 = ssub.s32 38, %s423
        %p425 = scmp.lt.s32.totalorder %s424, 16
        %s426 = scalar_select %p425, %s424, 16
        %s427 = smul.u32 128, %s426
        %s428 = sld [smem:[#allocation6]]
        %p429 = scmp.eq.s32.totalorder %s30, 0
        // Predicated region
        $region65: #{tpu_custom_call.1} parent=63 // pred_check
          %p430 = pneg %p429
        $region66: #{tpu_custom_call.1} parent=63 // pred_check_branch
          %432 = sbr.rel (%p430) target = $region68
        $region67: #{tpu_custom_call.1} parent=63 // pred_region
          %vm433 = vcmask 253952
          %434 = vst.msk [vmem:[#allocation2] sm:$0x1] %vm433, -inf
          %435 = vst.msk [vmem:[#allocation3] sm:$0x1] %vm433, 0.0
          %436 = vst.msk [vmem:[#allocation4] sm:$0x1] %vm433, 0.0
        $region68: #{tpu_custom_call.1} parent=63 // pred_fallthru
          _
        %v437 = vld [vmem:[%s422] sm:$0xff]
        %v438 = vld [vmem:[%s422 + $0x8] sm:$0xff]
        %v439 = vld [vmem:[%s422 + $0x10] sm:$0xff]
        %v440 = vld [vmem:[%s422 + $0x18] sm:$0xff]
        %v441 = vld [vmem:[%s422 + $0x20] sm:$0xff]
        %v442 = vld [vmem:[%s422 + $0x28] sm:$0xff]
        %v443 = vld [vmem:[%s422 + $0x30] sm:$0xff]
        %v444 = vld [vmem:[%s422 + $0x38] sm:$0xff]
        %v445 = vld [vmem:[%s422 + $0x40] sm:$0xff]
        %v446 = vld [vmem:[%s422 + $0x48] sm:$0xff]
        %v447 = vld [vmem:[%s422 + $0x50] sm:$0xff]
        %v448 = vld [vmem:[%s422 + $0x58] sm:$0xff]
        %v449 = vld [vmem:[%s422 + $0x60] sm:$0xff]
        %v450 = vld [vmem:[%s422 + $0x68] sm:$0xff]
        %v451 = vld [vmem:[%s422 + $0x70] sm:$0xff]
        %v452 = vld [vmem:[%s422 + $0x78] sm:$0xff]
        %v453 = vld [vmem:[%s2] sm:$0xff]
        %v454 = vld [vmem:[%s2 + $0x8] sm:$0xff]
        %v455 = vld [vmem:[%s2 + $0x10] sm:$0xff]
        %v456 = vld [vmem:[%s2 + $0x18] sm:$0xff]
        %v457 = vld [vmem:[%s2 + $0x20] sm:$0xff]
        %v458 = vld [vmem:[%s2 + $0x28] sm:$0xff]
        %v459 = vld [vmem:[%s2 + $0x30] sm:$0xff]
        %v460 = vld [vmem:[%s2 + $0x38] sm:$0xff]
        %v461 = vld [vmem:[%s3] sm:$0x1]
        %v463 = vlaneseq
        %v464 = vshrl.u32 %v463, 7
        %v465 = vsub.s32 0, %v464
        %v466 = vrot.slane %v461, %v465
        %vm468 = vcmask 523264
        %v470 = vsel %vm468, %v437, 0
        %v473 = vsel %vm468, %v438, 0
        %v476 = vsel %vm468, %v439, 0
        %v479 = vsel %vm468, %v440, 0
        %v482 = vsel %vm468, %v441, 0
        %v485 = vsel %vm468, %v442, 0
        %v488 = vsel %vm468, %v443, 0
        %v491 = vsel %vm468, %v444, 0
        %v494 = vsel %vm468, %v445, 0
        %v497 = vsel %vm468, %v446, 0
        %v500 = vsel %vm468, %v447, 0
        %v503 = vsel %vm468, %v448, 0
        %v506 = vsel %vm468, %v449, 0
        %v509 = vsel %vm468, %v450, 0
        %v512 = vsel %vm468, %v451, 0
        %v515 = vsel %vm468, %v452, 0
        %517 = vmatprep.subr.mxu0 0.0
        %518 = vmatpush1.msra.mxu0 %v453
        %519 = vmatprep.subr.mxu0 0.0
        %520 = vmatpush1.msra.mxu0 %v454
        %521 = vmatprep.subr.mxu0 0.0
        %522 = vmatpush1.msra.mxu0 %v455
        %523 = vmatprep.subr.mxu0 0.0
        %524 = vmatpush1.msra.mxu0 %v456
        %525 = vmatprep.subr.mxu0 0.0
        %526 = vmatpush1.msra.mxu0 %v457
        %527 = vmatprep.subr.mxu0 0.0
        %528 = vmatpush1.msra.mxu0 %v458
        %529 = vmatprep.subr.mxu0 0.0
        %530 = vmatpush1.msra.mxu0 %v459
        %531 = vmatprep.subr.mxu0 0.0
        %532 = vmatpush1.msra.mxu0 %v460
        %533 = vmatprep.subr.mxu0 0.0
        %534 = vmatpush1.msra.mxu0 0.0
        %535 = vmatprep.subr.mxu0 0.0
        %536 = vmatpush1.msra.mxu0 0.0
        %537 = vmatprep.subr.mxu0 0.0
        %538 = vmatpush1.msra.mxu0 0.0
        %539 = vmatprep.subr.mxu0 0.0
        %540 = vmatpush1.msra.mxu0 0.0
        %541 = vmatprep.subr.mxu0 0.0
        %542 = vmatpush1.msra.mxu0 0.0
        %543 = vmatprep.subr.mxu0 0.0
        %544 = vmatpush1.msra.mxu0 0.0
        %545 = vmatprep.subr.mxu0 0.0
        %546 = vmatpush1.msra.mxu0 0.0
        %547 = vmatprep.subr.mxu0 0.0
        %548 = vmatpush1.msra.mxu0 0.0
        %549 = vmatprep.subr.mxu0 0.0
        %550 = vmatpush1.msra.mxu0 0.0
        %551 = vmatprep.subr.mxu0 0.0
        %552 = vmatpush1.msra.mxu0 0.0
        %553 = vmatprep.subr.mxu0 0.0
        %554 = vmatpush1.msra.mxu0 0.0
        %555 = vmatprep.subr.mxu0 0.0
        %556 = vmatpush1.msra.mxu0 0.0
        %557 = vmatprep.subr.mxu0 0.0
        %558 = vmatpush1.msra.mxu0 0.0
        %559 = vmatprep.subr.mxu0 0.0
        %560 = vmatpush1.msra.mxu0 0.0
        %561 = vmatprep.subr.mxu0 0.0
        %562 = vmatpush1.msra.mxu0 0.0
        %563 = vmatprep.subr.mxu0 0.0
        %564 = vmatpush1.msra.mxu0 0.0
        %565 = vmatprep.subr.mxu0 0.0
        %566 = vmatpush1.msra.mxu0 0.0
        %567 = vmatprep.subr.mxu0 0.0
        %568 = vmatpush1.msra.mxu0 0.0
        %569 = vmatprep.subr.mxu0 0.0
        %570 = vmatpush1.msra.mxu0 0.0
        %571 = vmatprep.subr.mxu0 0.0
        %572 = vmatpush1.msra.mxu0 0.0
        %573 = vmatprep.subr.mxu0 0.0
        %574 = vmatpush1.msra.mxu0 0.0
        %575 = vmatprep.subr.mxu0 0.0
        %576 = vmatpush1.msra.mxu0 0.0
        %577 = vmatprep.subr.mxu0 0.0
        %578 = vmatpush1.msra.mxu0 0.0
        %579 = vmatprep.subr.mxu0 0.0
        %580 = vmatpush1.msra.mxu0 0.0
        %581 = vmatprep.mubr.f32.mxu0 0.0
        %582 = vmatmul.mubr.f32.gmra.mrb[0].mxu0 %v470
        %v583 = vpop.f32.mrb[0].mxu0
        %v584 = vadd.f32 %v466, %v583
        %v585 = vpop.f32.mrb[0].mxu0
        %586 = vmatprep.mubr.f32.mxu0 0.0
        %587 = vmatmul.mubr.f32.gmra.mrb[0].mxu0 %v473
        %v588 = vpop.f32.mrb[0].mxu0
        %v589 = vadd.f32 %v466, %v588
        %v590 = vpop.f32.mrb[0].mxu0
        %591 = vmatprep.mubr.f32.mxu0 0.0
        %592 = vmatmul.mubr.f32.gmra.mrb[0].mxu0 %v476
        %v593 = vpop.f32.mrb[0].mxu0
        %v594 = vadd.f32 %v466, %v593
        %v595 = vpop.f32.mrb[0].mxu0
        %596 = vmatprep.mubr.f32.mxu0 0.0
        %597 = vmatmul.mubr.f32.gmra.mrb[0].mxu0 %v479
        %v598 = vpop.f32.mrb[0].mxu0
        %v599 = vadd.f32 %v466, %v598
        %v600 = vpop.f32.mrb[0].mxu0
        %601 = vmatprep.mubr.f32.mxu0 0.0
        %602 = vmatmul.mubr.f32.gmra.mrb[0].mxu0 %v482
        %v603 = vpop.f32.mrb[0].mxu0
        %v604 = vadd.f32 %v466, %v603
        %v605 = vpop.f32.mrb[0].mxu0
        %606 = vmatprep.mubr.f32.mxu0 0.0
        %607 = vmatmul.mubr.f32.gmra.mrb[0].mxu0 %v485
        %v608 = vpop.f32.mrb[0].mxu0
        %v609 = vadd.f32 %v466, %v608
        %v610 = vpop.f32.mrb[0].mxu0
        %611 = vmatprep.mubr.f32.mxu0 0.0
        %612 = vmatmul.mubr.f32.gmra.mrb[0].mxu0 %v488
        %v613 = vpop.f32.mrb[0].mxu0
        %v614 = vadd.f32 %v466, %v613
        %v615 = vpop.f32.mrb[0].mxu0
        %616 = vmatprep.mubr.f32.mxu0 0.0
        %617 = vmatmul.mubr.f32.gmra.mrb[0].mxu0 %v491
        %v618 = vpop.f32.mrb[0].mxu0
        %v619 = vadd.f32 %v466, %v618
        %v620 = vpop.f32.mrb[0].mxu0
        %621 = vmatprep.mubr.f32.mxu0 0.0
        %622 = vmatmul.mubr.f32.gmra.mrb[0].mxu0 %v494
        %v623 = vpop.f32.mrb[0].mxu0
        %v624 = vadd.f32 %v466, %v623
        %v625 = vpop.f32.mrb[0].mxu0
        %626 = vmatprep.mubr.f32.mxu0 0.0
        %627 = vmatmul.mubr.f32.gmra.mrb[0].mxu0 %v497
        %v628 = vpop.f32.mrb[0].mxu0
        %v629 = vadd.f32 %v466, %v628
        %v630 = vpop.f32.mrb[0].mxu0
        %631 = vmatprep.mubr.f32.mxu0 0.0
        %632 = vmatmul.mubr.f32.gmra.mrb[0].mxu0 %v500
        %v633 = vpop.f32.mrb[0].mxu0
        %v634 = vadd.f32 %v466, %v633
        %v635 = vpop.f32.mrb[0].mxu0
        %636 = vmatprep.mubr.f32.mxu0 0.0
        %637 = vmatmul.mubr.f32.gmra.mrb[0].mxu0 %v503
        %v638 = vpop.f32.mrb[0].mxu0
        %v639 = vadd.f32 %v466, %v638
        %v640 = vpop.f32.mrb[0].mxu0
        %641 = vmatprep.mubr.f32.mxu0 0.0
        %642 = vmatmul.mubr.f32.gmra.mrb[0].mxu0 %v506
        %v643 = vpop.f32.mrb[0].mxu0
        %v644 = vadd.f32 %v466, %v643
        %v645 = vpop.f32.mrb[0].mxu0
        %646 = vmatprep.mubr.f32.mxu0 0.0
        %647 = vmatmul.mubr.f32.gmra.mrb[0].mxu0 %v509
        %v648 = vpop.f32.mrb[0].mxu0
        %v649 = vadd.f32 %v466, %v648
        %v650 = vpop.f32.mrb[0].mxu0
        %651 = vmatprep.mubr.f32.mxu0 0.0
        %652 = vmatmul.mubr.f32.gmra.mrb[0].mxu0 %v512
        %v653 = vpop.f32.mrb[0].mxu0
        %v654 = vadd.f32 %v466, %v653
        %v655 = vpop.f32.mrb[0].mxu0
        %656 = vmatprep.mubr.f32.mxu0 0.0
        %657 = vmatmul.mubr.f32.gmra.mrb[0].mxu0 %v515
        %v658 = vpop.f32.mrb[0].mxu0
        %v659 = vadd.f32 %v466, %v658
        %v660 = vpop.f32.mrb[0].mxu0
        %661 = vdwg.mxu0
        %v662 = vmax.f32 %v584, 0.0
        %v663 = vmax.f32 %v589, 0.0
        %v664 = vmax.f32 %v594, 0.0
        %v665 = vmax.f32 %v599, 0.0
        %v666 = vmax.f32 %v604, 0.0
        %v667 = vmax.f32 %v609, 0.0
        %v668 = vmax.f32 %v614, 0.0
        %v669 = vmax.f32 %v619, 0.0
        %v670 = vmax.f32 %v624, 0.0
        %v671 = vmax.f32 %v629, 0.0
        %v672 = vmax.f32 %v634, 0.0
        %v673 = vmax.f32 %v639, 0.0
        %v674 = vmax.f32 %v644, 0.0
        %v675 = vmax.f32 %v649, 0.0
        %v676 = vmax.f32 %v654, 0.0
        %v677 = vmax.f32 %v659, 0.0
        %v678 = vld [vmem:[%s4] sm:$0xff]
        %v679 = vld [vmem:[%s4 + $0x8] sm:$0xff]
        %v680 = vld [vmem:[%s4 + $0x10] sm:$0xff]
        %v681 = vld [vmem:[%s4 + $0x18] sm:$0xff]
        %v682 = vld [vmem:[%s5] sm:$0x1]
        %v684 = vlaneseq
        %v685 = vshrl.u32 %v684, 7
        %v686 = vsub.s32 0, %v685
        %v687 = vrot.slane %v682, %v686
        %vm689 = vcmask 261120
        %v691 = vsel %vm689, %v662, 0
        %v694 = vsel %vm689, %v663, 0
        %v697 = vsel %vm689, %v664, 0
        %v700 = vsel %vm689, %v665, 0
        %v703 = vsel %vm689, %v666, 0
        %v706 = vsel %vm689, %v667, 0
        %v709 = vsel %vm689, %v668, 0
        %v712 = vsel %vm689, %v669, 0
        %v715 = vsel %vm689, %v670, 0
        %v718 = vsel %vm689, %v671, 0
        %v721 = vsel %vm689, %v672, 0
        %v724 = vsel %vm689, %v673, 0
        %v727 = vsel %vm689, %v674, 0
        %v730 = vsel %vm689, %v675, 0
        %v733 = vsel %vm689, %v676, 0
        %v736 = vsel %vm689, %v677, 0
        %738 = vmatprep.subr.mxu0 0.0
        %739 = vmatpush1.msra.mxu0 %v678
        %740 = vmatprep.subr.mxu0 0.0
        %741 = vmatpush1.msra.mxu0 %v679
        %742 = vmatprep.subr.mxu0 0.0
        %743 = vmatpush1.msra.mxu0 %v680
        %744 = vmatprep.subr.mxu0 0.0
        %745 = vmatpush1.msra.mxu0 %v681
        %746 = vmatprep.subr.mxu0 0.0
        %747 = vmatpush1.msra.mxu0 0.0
        %748 = vmatprep.subr.mxu0 0.0
        %749 = vmatpush1.msra.mxu0 0.0
        %750 = vmatprep.subr.mxu0 0.0
        %751 = vmatpush1.msra.mxu0 0.0
        %752 = vmatprep.subr.mxu0 0.0
        %753 = vmatpush1.msra.mxu0 0.0
        %754 = vmatprep.subr.mxu0 0.0
        %755 = vmatpush1.msra.mxu0 0.0
        %756 = vmatprep.subr.mxu0 0.0
        %757 = vmatpush1.msra.mxu0 0.0
        %758 = vmatprep.subr.mxu0 0.0
        %759 = vmatpush1.msra.mxu0 0.0
        %760 = vmatprep.subr.mxu0 0.0
        %761 = vmatpush1.msra.mxu0 0.0
        %762 = vmatprep.subr.mxu0 0.0
        %763 = vmatpush1.msra.mxu0 0.0
        %764 = vmatprep.subr.mxu0 0.0
        %765 = vmatpush1.msra.mxu0 0.0
        %766 = vmatprep.subr.mxu0 0.0
        %767 = vmatpush1.msra.mxu0 0.0
        %768 = vmatprep.subr.mxu0 0.0
        %769 = vmatpush1.msra.mxu0 0.0
        %770 = vmatprep.subr.mxu0 0.0
        %771 = vmatpush1.msra.mxu0 0.0
        %772 = vmatprep.subr.mxu0 0.0
        %773 = vmatpush1.msra.mxu0 0.0
        %774 = vmatprep.subr.mxu0 0.0
        %775 = vmatpush1.msra.mxu0 0.0
        %776 = vmatprep.subr.mxu0 0.0
        %777 = vmatpush1.msra.mxu0 0.0
        %778 = vmatprep.subr.mxu0 0.0
        %779 = vmatpush1.msra.mxu0 0.0
        %780 = vmatprep.subr.mxu0 0.0
        %781 = vmatpush1.msra.mxu0 0.0
        %782 = vmatprep.subr.mxu0 0.0
        %783 = vmatpush1.msra.mxu0 0.0
        %784 = vmatprep.subr.mxu0 0.0
        %785 = vmatpush1.msra.mxu0 0.0
        %786 = vmatprep.subr.mxu0 0.0
        %787 = vmatpush1.msra.mxu0 0.0
        %788 = vmatprep.subr.mxu0 0.0
        %789 = vmatpush1.msra.mxu0 0.0
        %790 = vmatprep.subr.mxu0 0.0
        %791 = vmatpush1.msra.mxu0 0.0
        %792 = vmatprep.subr.mxu0 0.0
        %793 = vmatpush1.msra.mxu0 0.0
        %794 = vmatprep.subr.mxu0 0.0
        %795 = vmatpush1.msra.mxu0 0.0
        %796 = vmatprep.subr.mxu0 0.0
        %797 = vmatpush1.msra.mxu0 0.0
        %798 = vmatprep.subr.mxu0 0.0
        %799 = vmatpush1.msra.mxu0 0.0
        %800 = vmatprep.subr.mxu0 0.0
        %801 = vmatpush1.msra.mxu0 0.0
        %802 = vmatprep.mubr.f32.mxu0 0.0
        %803 = vmatmul.mubr.f32.gmra.mrb[0].mxu0 %v691
        %v804 = vpop.f32.mrb[0].mxu0
        %v805 = vadd.f32 %v687, %v804
        %v806 = vpop.f32.mrb[0].mxu0
        %807 = vmatprep.mubr.f32.mxu0 0.0
        %808 = vmatmul.mubr.f32.gmra.mrb[0].mxu0 %v694
        %v809 = vpop.f32.mrb[0].mxu0
        %v810 = vadd.f32 %v687, %v809
        %v811 = vpop.f32.mrb[0].mxu0
        %812 = vmatprep.mubr.f32.mxu0 0.0
        %813 = vmatmul.mubr.f32.gmra.mrb[0].mxu0 %v697
        %v814 = vpop.f32.mrb[0].mxu0
        %v815 = vadd.f32 %v687, %v814
        %v816 = vpop.f32.mrb[0].mxu0
        %817 = vmatprep.mubr.f32.mxu0 0.0
        %818 = vmatmul.mubr.f32.gmra.mrb[0].mxu0 %v700
        %v819 = vpop.f32.mrb[0].mxu0
        %v820 = vadd.f32 %v687, %v819
        %v821 = vpop.f32.mrb[0].mxu0
        %822 = vmatprep.mubr.f32.mxu0 0.0
        %823 = vmatmul.mubr.f32.gmra.mrb[0].mxu0 %v703
        %v824 = vpop.f32.mrb[0].mxu0
        %v825 = vadd.f32 %v687, %v824
        %v826 = vpop.f32.mrb[0].mxu0
        %827 = vmatprep.mubr.f32.mxu0 0.0
        %828 = vmatmul.mubr.f32.gmra.mrb[0].mxu0 %v706
        %v829 = vpop.f32.mrb[0].mxu0
        %v830 = vadd.f32 %v687, %v829
        %v831 = vpop.f32.mrb[0].mxu0
        %832 = vmatprep.mubr.f32.mxu0 0.0
        %833 = vmatmul.mubr.f32.gmra.mrb[0].mxu0 %v709
        %v834 = vpop.f32.mrb[0].mxu0
        %v835 = vadd.f32 %v687, %v834
        %v836 = vpop.f32.mrb[0].mxu0
        %837 = vmatprep.mubr.f32.mxu0 0.0
        %838 = vmatmul.mubr.f32.gmra.mrb[0].mxu0 %v712
        %v839 = vpop.f32.mrb[0].mxu0
        %v840 = vadd.f32 %v687, %v839
        %v841 = vpop.f32.mrb[0].mxu0
        %842 = vmatprep.mubr.f32.mxu0 0.0
        %843 = vmatmul.mubr.f32.gmra.mrb[0].mxu0 %v715
        %v844 = vpop.f32.mrb[0].mxu0
        %v845 = vadd.f32 %v687, %v844
        %v846 = vpop.f32.mrb[0].mxu0
        %847 = vmatprep.mubr.f32.mxu0 0.0
        %848 = vmatmul.mubr.f32.gmra.mrb[0].mxu0 %v718
        %v849 = vpop.f32.mrb[0].mxu0
        %v850 = vadd.f32 %v687, %v849
        %v851 = vpop.f32.mrb[0].mxu0
        %852 = vmatprep.mubr.f32.mxu0 0.0
        %853 = vmatmul.mubr.f32.gmra.mrb[0].mxu0 %v721
        %v854 = vpop.f32.mrb[0].mxu0
        %v855 = vadd.f32 %v687, %v854
        %v856 = vpop.f32.mrb[0].mxu0
        %857 = vmatprep.mubr.f32.mxu0 0.0
        %858 = vmatmul.mubr.f32.gmra.mrb[0].mxu0 %v724
        %v859 = vpop.f32.mrb[0].mxu0
        %v860 = vadd.f32 %v687, %v859
        %v861 = vpop.f32.mrb[0].mxu0
        %862 = vmatprep.mubr.f32.mxu0 0.0
        %863 = vmatmul.mubr.f32.gmra.mrb[0].mxu0 %v727
        %v864 = vpop.f32.mrb[0].mxu0
        %v865 = vadd.f32 %v687, %v864
        %v866 = vpop.f32.mrb[0].mxu0
        %867 = vmatprep.mubr.f32.mxu0 0.0
        %868 = vmatmul.mubr.f32.gmra.mrb[0].mxu0 %v730
        %v869 = vpop.f32.mrb[0].mxu0
        %v870 = vadd.f32 %v687, %v869
        %v871 = vpop.f32.mrb[0].mxu0
        %872 = vmatprep.mubr.f32.mxu0 0.0
        %873 = vmatmul.mubr.f32.gmra.mrb[0].mxu0 %v733
        %v874 = vpop.f32.mrb[0].mxu0
        %v875 = vadd.f32 %v687, %v874
        %v876 = vpop.f32.mrb[0].mxu0
        %877 = vmatprep.mubr.f32.mxu0 0.0
        %878 = vmatmul.mubr.f32.gmra.mrb[0].mxu0 %v736
        %v879 = vpop.f32.mrb[0].mxu0
        %v880 = vadd.f32 %v687, %v879
        %v881 = vpop.f32.mrb[0].mxu0
        %882 = vdwg.mxu0
        %s883 = sadd.s32 %s30, 1
        %s884 = smul.u32 %s883, 128
        %p885 = scmp.gt.s32.totalorder %s884, %s428
        %p886 = scmp.le.s32.totalorder %s884, %s428
        // Predicated region
        $region69: #{tpu_custom_call.1} parent=63 // pred_check
          %p887 = pneg %p886
        $region70: #{tpu_custom_call.1} parent=63 // pred_check_branch
          %889 = sbr.rel (%p887) target = $region72
        $region71: #{tpu_custom_call.1} parent=63 // pred_region
          %v890 = vld [vmem:[#allocation2] sm:$0x1]
          %vm891 = vcmask 523520
          %v892 = vsel %vm891, %v805, -inf
          %v893 = vsel %vm891, %v810, -inf
          %v894 = vsel %vm891, %v815, -inf
          %v895 = vsel %vm891, %v820, -inf
          %v896 = vsel %vm891, %v825, -inf
          %v897 = vmax.f32 %v892, %v896
          %v898 = vsel %vm891, %v830, -inf
          %v899 = vmax.f32 %v893, %v898
          %v900 = vsel %vm891, %v835, -inf
          %v901 = vmax.f32 %v894, %v900
          %v902 = vsel %vm891, %v840, -inf
          %v903 = vmax.f32 %v895, %v902
          %v904 = vsel %vm891, %v845, -inf
          %v905 = vmax.f32 %v897, %v904
          %v906 = vsel %vm891, %v850, -inf
          %v907 = vmax.f32 %v899, %v906
          %v908 = vsel %vm891, %v855, -inf
          %v909 = vmax.f32 %v901, %v908
          %v910 = vsel %vm891, %v860, -inf
          %v911 = vmax.f32 %v903, %v910
          %v912 = vsel %vm891, %v865, -inf
          %v913 = vmax.f32 %v905, %v912
          %v914 = vsel %vm891, %v870, -inf
          %v915 = vmax.f32 %v907, %v914
          %v916 = vsel %vm891, %v875, -inf
          %v917 = vmax.f32 %v909, %v916
          %v918 = vsel %vm891, %v880, -inf
          %v919 = vmax.f32 %v911, %v918
          %v920 = vmax.f32 %v913, %v915
          %v921 = vmax.f32 %v917, %v919
          %v922 = vmax.f32 %v920, %v921
          %v923 = vrot.slane %v922, 4
          %v924 = vmax.f32 %v922, %v923
          %v925 = vrot.slane %v924, 2
          %v926 = vmax.f32 %v924, %v925
          %v927 = vrot.slane %v926, 1
          %v928 = vmax.f32 %v926, %v927
          %v931 = vunpack.c.l.s4 1966171168
          %v932 = vunpack.c.0.s8 %v931
          %v933 = vlaneseq
          %v934 = vshrl.u32 %v933, 7
          %v935 = vsub.s32 %v932, %v934
          %v936 = vrot.slane %v928, %v935
          %v938 = vunpack.c.l.s4 1966171168
          %v939 = vunpack.c.0.s8 %v938
          %v940 = vlaneseq
          %v941 = vshrl.u32 %v940, 7
          %v942 = vsub.s32 %v939, %v941
          %v943 = vrot.slane %v936, %v942
          %944 = vrot.lane.b32.xlu0 %v943, 96
          %v945 = vpop.permute.xlu0 %944
          %v947 = vmax.f32 %v890, %v945
          %v948 = vsub.f32 %v890, %v947
          %v949 = vmul.f32 %v948, 1.442695
          %v950 = vpow.pop %v949
          %v952 = vlaneseq
          %v953 = vshrl.u32 %v952, 7
          %v954 = vsub.s32 0, %v953
          %v955 = vrot.slane %v947, %v954
          %956 = vrot.lane.b32.xlu0 %v955, 32
          %v957 = vpop.permute.xlu0 %956
          %v959 = vsub.f32 %v805, %v957
          %v960 = vsub.f32 %v810, %v957
          %v961 = vsub.f32 %v815, %v957
          %v962 = vsub.f32 %v820, %v957
          %v963 = vsub.f32 %v825, %v957
          %v964 = vsub.f32 %v830, %v957
          %v965 = vsub.f32 %v835, %v957
          %v966 = vsub.f32 %v840, %v957
          %v967 = vsub.f32 %v845, %v957
          %v968 = vsub.f32 %v850, %v957
          %v969 = vsub.f32 %v855, %v957
          %v970 = vsub.f32 %v860, %v957
          %v971 = vsub.f32 %v865, %v957
          %v972 = vsub.f32 %v870, %v957
          %v973 = vsub.f32 %v875, %v957
          %v974 = vsub.f32 %v880, %v957
          %v975 = vmul.f32 %v959, 1.442695
          %v976 = vpow.pop %v975
          %v977 = vmul.f32 %v960, 1.442695
          %v978 = vpow.pop %v977
          %v979 = vmul.f32 %v961, 1.442695
          %v980 = vpow.pop %v979
          %v981 = vmul.f32 %v962, 1.442695
          %v982 = vpow.pop %v981
          %v983 = vmul.f32 %v963, 1.442695
          %v984 = vpow.pop %v983
          %v985 = vmul.f32 %v964, 1.442695
          %v986 = vpow.pop %v985
          %v987 = vmul.f32 %v965, 1.442695
          %v988 = vpow.pop %v987
          %v989 = vmul.f32 %v966, 1.442695
          %v990 = vpow.pop %v989
          %v991 = vmul.f32 %v967, 1.442695
          %v992 = vpow.pop %v991
          %v993 = vmul.f32 %v968, 1.442695
          %v994 = vpow.pop %v993
          %v995 = vmul.f32 %v969, 1.442695
          %v996 = vpow.pop %v995
          %v997 = vmul.f32 %v970, 1.442695
          %v998 = vpow.pop %v997
          %v999 = vmul.f32 %v971, 1.442695
          %v1000 = vpow.pop %v999
          %v1001 = vmul.f32 %v972, 1.442695
          %v1002 = vpow.pop %v1001
          %v1003 = vmul.f32 %v973, 1.442695
          %v1004 = vpow.pop %v1003
          %v1005 = vmul.f32 %v974, 1.442695
          %v1006 = vpow.pop %v1005
          %v1007 = vld [vmem:[#allocation3] sm:$0x1]
          %v1008 = vmul.f32 %v950, %v1007
          %v1009 = vsel %vm891, %v976, 0.0
          %v1010 = vsel %vm891, %v978, 0.0
          %v1011 = vadd.f32 %v1009, %v1010
          %v1012 = vsel %vm891, %v980, 0.0
          %v1013 = vadd.f32 %v1011, %v1012
          %v1014 = vsel %vm891, %v982, 0.0
          %v1015 = vadd.f32 %v1013, %v1014
          %v1016 = vsel %vm891, %v984, 0.0
          %v1017 = vadd.f32 %v1015, %v1016
          %v1018 = vsel %vm891, %v986, 0.0
          %v1019 = vadd.f32 %v1017, %v1018
          %v1020 = vsel %vm891, %v988, 0.0
          %v1021 = vadd.f32 %v1019, %v1020
          %v1022 = vsel %vm891, %v990, 0.0
          %v1023 = vadd.f32 %v1021, %v1022
          %v1024 = vsel %vm891, %v992, 0.0
          %v1025 = vadd.f32 %v1023, %v1024
          %v1026 = vsel %vm891, %v994, 0.0
          %v1027 = vadd.f32 %v1025, %v1026
          %v1028 = vsel %vm891, %v996, 0.0
          %v1029 = vadd.f32 %v1027, %v1028
          %v1030 = vsel %vm891, %v998, 0.0
          %v1031 = vadd.f32 %v1029, %v1030
          %v1032 = vsel %vm891, %v1000, 0.0
          %v1033 = vadd.f32 %v1031, %v1032
          %v1034 = vsel %vm891, %v1002, 0.0
          %v1035 = vadd.f32 %v1033, %v1034
          %v1036 = vsel %vm891, %v1004, 0.0
          %v1037 = vadd.f32 %v1035, %v1036
          %v1038 = vsel %vm891, %v1006, 0.0
          %v1039 = vadd.f32 %v1037, %v1038
          %v1040 = vrot.slane %v1039, 4
          %v1041 = vadd.f32 %v1039, %v1040
          %v1042 = vrot.slane %v1041, 2
          %v1043 = vadd.f32 %v1041, %v1042
          %v1044 = vrot.slane %v1043, 1
          %v1045 = vadd.f32 %v1043, %v1044
          %v1048 = vunpack.c.l.s4 1966171168
          %v1049 = vunpack.c.0.s8 %v1048
          %v1050 = vlaneseq
          %v1051 = vshrl.u32 %v1050, 7
          %v1052 = vsub.s32 %v1049, %v1051
          %v1053 = vrot.slane %v1045, %v1052
          %v1055 = vunpack.c.l.s4 1966171168
          %v1056 = vunpack.c.0.s8 %v1055
          %v1057 = vlaneseq
          %v1058 = vshrl.u32 %v1057, 7
          %v1059 = vsub.s32 %v1056, %v1058
          %v1060 = vrot.slane %v1053, %v1059
          %1061 = vrot.lane.b32.xlu0 %v1060, 96
          %v1062 = vpop.permute.xlu0 %1061
          %v1064 = vadd.f32 %v1008, %v1062
          %vm1065 = vcmask 253952
          %1066 = vst.msk [vmem:[#allocation3] sm:$0x1] %vm1065, %v1064
          %v1067 = vld [vmem:[#allocation4] sm:$0x1]
          %v1068 = vmul.f32 %v950, %v1067
          %1085 = vrot.lane.b32.xlu0 %v805, 32
          %v1086 = vpop.permute.xlu0 %1085
          %1087 = vrot.lane.b32.xlu0 %v810, 32
          %v1088 = vpop.permute.xlu0 %1087
          %1089 = vrot.lane.b32.xlu0 %v815, 32
          %v1090 = vpop.permute.xlu0 %1089
          %1091 = vrot.lane.b32.xlu0 %v820, 32
          %v1092 = vpop.permute.xlu0 %1091
          %1093 = vrot.lane.b32.xlu0 %v825, 32
          %v1094 = vpop.permute.xlu0 %1093
          %1095 = vrot.lane.b32.xlu0 %v830, 32
          %v1096 = vpop.permute.xlu0 %1095
          %1097 = vrot.lane.b32.xlu0 %v835, 32
          %v1098 = vpop.permute.xlu0 %1097
          %1099 = vrot.lane.b32.xlu0 %v840, 32
          %v1100 = vpop.permute.xlu0 %1099
          %1101 = vrot.lane.b32.xlu0 %v845, 32
          %v1102 = vpop.permute.xlu0 %1101
          %1103 = vrot.lane.b32.xlu0 %v850, 32
          %v1104 = vpop.permute.xlu0 %1103
          %1105 = vrot.lane.b32.xlu0 %v855, 32
          %v1106 = vpop.permute.xlu0 %1105
          %1107 = vrot.lane.b32.xlu0 %v860, 32
          %v1108 = vpop.permute.xlu0 %1107
          %1109 = vrot.lane.b32.xlu0 %v865, 32
          %v1110 = vpop.permute.xlu0 %1109
          %1111 = vrot.lane.b32.xlu0 %v870, 32
          %v1112 = vpop.permute.xlu0 %1111
          %1113 = vrot.lane.b32.xlu0 %v875, 32
          %v1114 = vpop.permute.xlu0 %1113
          %1115 = vrot.lane.b32.xlu0 %v880, 32
          %v1116 = vpop.permute.xlu0 %1115
          %v1133 = vmul.f32 %v976, %v1086
          %v1134 = vmul.f32 %v978, %v1088
          %v1135 = vmul.f32 %v980, %v1090
          %v1136 = vmul.f32 %v982, %v1092
          %v1137 = vmul.f32 %v984, %v1094
          %v1138 = vmul.f32 %v986, %v1096
          %v1139 = vmul.f32 %v988, %v1098
          %v1140 = vmul.f32 %v990, %v1100
          %v1141 = vmul.f32 %v992, %v1102
          %v1142 = vmul.f32 %v994, %v1104
          %v1143 = vmul.f32 %v996, %v1106
          %v1144 = vmul.f32 %v998, %v1108
          %v1145 = vmul.f32 %v1000, %v1110
          %v1146 = vmul.f32 %v1002, %v1112
          %v1147 = vmul.f32 %v1004, %v1114
          %v1148 = vmul.f32 %v1006, %v1116
          %v1149 = vsel %vm891, %v1133, 0.0
          %v1150 = vsel %vm891, %v1134, 0.0
          %v1151 = vadd.f32 %v1149, %v1150
          %v1152 = vsel %vm891, %v1135, 0.0
          %v1153 = vadd.f32 %v1151, %v1152
          %v1154 = vsel %vm891, %v1136, 0.0
          %v1155 = vadd.f32 %v1153, %v1154
          %v1156 = vsel %vm891, %v1137, 0.0
          %v1157 = vadd.f32 %v1155, %v1156
          %v1158 = vsel %vm891, %v1138, 0.0
          %v1159 = vadd.f32 %v1157, %v1158
          %v1160 = vsel %vm891, %v1139, 0.0
          %v1161 = vadd.f32 %v1159, %v1160
          %v1162 = vsel %vm891, %v1140, 0.0
          %v1163 = vadd.f32 %v1161, %v1162
          %v1164 = vsel %vm891, %v1141, 0.0
          %v1165 = vadd.f32 %v1163, %v1164
          %v1166 = vsel %vm891, %v1142, 0.0
          %v1167 = vadd.f32 %v1165, %v1166
          %v1168 = vsel %vm891, %v1143, 0.0
          %v1169 = vadd.f32 %v1167, %v1168
          %v1170 = vsel %vm891, %v1144, 0.0
          %v1171 = vadd.f32 %v1169, %v1170
          %v1172 = vsel %vm891, %v1145, 0.0
          %v1173 = vadd.f32 %v1171, %v1172
          %v1174 = vsel %vm891, %v1146, 0.0
          %v1175 = vadd.f32 %v1173, %v1174
          %v1176 = vsel %vm891, %v1147, 0.0
          %v1177 = vadd.f32 %v1175, %v1176
          %v1178 = vsel %vm891, %v1148, 0.0
          %v1179 = vadd.f32 %v1177, %v1178
          %v1180 = vrot.slane %v1179, 4
          %v1181 = vadd.f32 %v1179, %v1180
          %v1182 = vrot.slane %v1181, 2
          %v1183 = vadd.f32 %v1181, %v1182
          %v1184 = vrot.slane %v1183, 1
          %v1185 = vadd.f32 %v1183, %v1184
          %v1188 = vunpack.c.l.s4 1966171168
          %v1189 = vunpack.c.0.s8 %v1188
          %v1190 = vlaneseq
          %v1191 = vshrl.u32 %v1190, 7
          %v1192 = vsub.s32 %v1189, %v1191
          %v1193 = vrot.slane %v1185, %v1192
          %v1195 = vunpack.c.l.s4 1966171168
          %v1196 = vunpack.c.0.s8 %v1195
          %v1197 = vlaneseq
          %v1198 = vshrl.u32 %v1197, 7
          %v1199 = vsub.s32 %v1196, %v1198
          %v1200 = vrot.slane %v1193, %v1199
          %1201 = vrot.lane.b32.xlu0 %v1200, 96
          %v1202 = vpop.permute.xlu0 %1201
          %v1204 = vadd.f32 %v1068, %v1202
          %1205 = vst.msk [vmem:[#allocation4] sm:$0x1] %vm1065, %v1204
          %1206 = vst.msk [vmem:[#allocation2] sm:$0x1] %vm1065, %v947
        $region72: #{tpu_custom_call.1} parent=63 // pred_fallthru
          _
        // Predicated region
        $region73: #{tpu_custom_call.1} parent=63 // pred_check
          %p1207 = pneg %p885
        $region74: #{tpu_custom_call.1} parent=63 // pred_check_branch
          %1209 = sbr.rel (%p1207) target = $region76
        $region75: #{tpu_custom_call.1} parent=63 // pred_region
          %v1210 = vlaneseq
          %v1211 = vshrl.u32 %v1210, 7
          %v1212 = vadd.s32 %v1211, 8
          %v1213 = vadd.s32 %v1211, 16
          %v1214 = vadd.s32 %v1211, 24
          %v1215 = vadd.s32 %v1211, 32
          %v1216 = vadd.s32 %v1211, 40
          %v1217 = vadd.s32 %v1211, 48
          %v1218 = vadd.s32 %v1211, 56
          %v1219 = vadd.s32 %v1211, 64
          %v1220 = vadd.s32 %v1211, 72
          %v1221 = vadd.s32 %v1211, 80
          %v1222 = vadd.s32 %v1211, 88
          %v1223 = vadd.s32 %v1211, 96
          %v1224 = vadd.s32 %v1211, 104
          %v1225 = vadd.s32 %v1211, 112
          %v1226 = vadd.s32 %v1211, 120
          %s1227 = smul.u32 %s30, 128
          %v1228 = vstv %s1227
          %v1229 = vadd.s32 %v1211, %v1228
          %v1230 = vadd.s32 %v1212, %v1228
          %v1231 = vadd.s32 %v1213, %v1228
          %v1232 = vadd.s32 %v1214, %v1228
          %v1233 = vadd.s32 %v1215, %v1228
          %v1234 = vadd.s32 %v1216, %v1228
          %v1235 = vadd.s32 %v1217, %v1228
          %v1236 = vadd.s32 %v1218, %v1228
          %v1237 = vadd.s32 %v1219, %v1228
          %v1238 = vadd.s32 %v1220, %v1228
          %v1239 = vadd.s32 %v1221, %v1228
          %v1240 = vadd.s32 %v1222, %v1228
          %v1241 = vadd.s32 %v1223, %v1228
          %v1242 = vadd.s32 %v1224, %v1228
          %v1243 = vadd.s32 %v1225, %v1228
          %v1244 = vadd.s32 %v1226, %v1228
          %v1245 = vstv %s428
          %vm1246 = vcmp.lt.s32.totalorder %v1229, %v1245
          %vm1247 = vcmp.lt.s32.totalorder %v1230, %v1245
          %vm1248 = vcmp.lt.s32.totalorder %v1231, %v1245
          %vm1249 = vcmp.lt.s32.totalorder %v1232, %v1245
          %vm1250 = vcmp.lt.s32.totalorder %v1233, %v1245
          %vm1251 = vcmp.lt.s32.totalorder %v1234, %v1245
          %vm1252 = vcmp.lt.s32.totalorder %v1235, %v1245
          %vm1253 = vcmp.lt.s32.totalorder %v1236, %v1245
          %vm1254 = vcmp.lt.s32.totalorder %v1237, %v1245
          %vm1255 = vcmp.lt.s32.totalorder %v1238, %v1245
          %vm1256 = vcmp.lt.s32.totalorder %v1239, %v1245
          %vm1257 = vcmp.lt.s32.totalorder %v1240, %v1245
          %vm1258 = vcmp.lt.s32.totalorder %v1241, %v1245
          %vm1259 = vcmp.lt.s32.totalorder %v1242, %v1245
          %vm1260 = vcmp.lt.s32.totalorder %v1243, %v1245
          %vm1261 = vcmp.lt.s32.totalorder %v1244, %v1245
          %v1262 = vsel %vm1246, 1, 0
          %v1263 = vsel %vm1247, 1, 0
          %v1264 = vsel %vm1248, 1, 0
          %v1265 = vsel %vm1249, 1, 0
          %v1266 = vsel %vm1250, 1, 0
          %v1267 = vsel %vm1251, 1, 0
          %v1268 = vsel %vm1252, 1, 0
          %v1269 = vsel %vm1253, 1, 0
          %v1270 = vsel %vm1254, 1, 0
          %v1271 = vsel %vm1255, 1, 0
          %v1272 = vsel %vm1256, 1, 0
          %v1273 = vsel %vm1257, 1, 0
          %v1274 = vsel %vm1258, 1, 0
          %v1275 = vsel %vm1259, 1, 0
          %v1276 = vsel %vm1260, 1, 0
          %v1277 = vsel %vm1261, 1, 0
          %vm1278 = vcmp.eq.s32.totalorder %v1262, 1
          %vm1279 = vcmp.eq.s32.totalorder %v1263, 1
          %vm1280 = vcmp.eq.s32.totalorder %v1264, 1
          %vm1281 = vcmp.eq.s32.totalorder %v1265, 1
          %vm1282 = vcmp.eq.s32.totalorder %v1266, 1
          %vm1283 = vcmp.eq.s32.totalorder %v1267, 1
          %vm1284 = vcmp.eq.s32.totalorder %v1268, 1
          %vm1285 = vcmp.eq.s32.totalorder %v1269, 1
          %vm1286 = vcmp.eq.s32.totalorder %v1270, 1
          %vm1287 = vcmp.eq.s32.totalorder %v1271, 1
          %vm1288 = vcmp.eq.s32.totalorder %v1272, 1
          %vm1289 = vcmp.eq.s32.totalorder %v1273, 1
          %vm1290 = vcmp.eq.s32.totalorder %v1274, 1
          %vm1291 = vcmp.eq.s32.totalorder %v1275, 1
          %vm1292 = vcmp.eq.s32.totalorder %v1276, 1
          %vm1293 = vcmp.eq.s32.totalorder %v1277, 1
          %v1294 = vsel %vm1278, %v805, -1e+30
          %v1295 = vsel %vm1279, %v810, -1e+30
          %v1296 = vsel %vm1280, %v815, -1e+30
          %v1297 = vsel %vm1281, %v820, -1e+30
          %v1298 = vsel %vm1282, %v825, -1e+30
          %v1299 = vsel %vm1283, %v830, -1e+30
          %v1300 = vsel %vm1284, %v835, -1e+30
          %v1301 = vsel %vm1285, %v840, -1e+30
          %v1302 = vsel %vm1286, %v845, -1e+30
          %v1303 = vsel %vm1287, %v850, -1e+30
          %v1304 = vsel %vm1288, %v855, -1e+30
          %v1305 = vsel %vm1289, %v860, -1e+30
          %v1306 = vsel %vm1290, %v865, -1e+30
          %v1307 = vsel %vm1291, %v870, -1e+30
          %v1308 = vsel %vm1292, %v875, -1e+30
          %v1309 = vsel %vm1293, %v880, -1e+30
          %v1310 = vsel %vm1278, %v805, 0.0
          %v1311 = vsel %vm1279, %v810, 0.0
          %v1312 = vsel %vm1280, %v815, 0.0
          %v1313 = vsel %vm1281, %v820, 0.0
          %v1314 = vsel %vm1282, %v825, 0.0
          %v1315 = vsel %vm1283, %v830, 0.0
          %v1316 = vsel %vm1284, %v835, 0.0
          %v1317 = vsel %vm1285, %v840, 0.0
          %v1318 = vsel %vm1286, %v845, 0.0
          %v1319 = vsel %vm1287, %v850, 0.0
          %v1320 = vsel %vm1288, %v855, 0.0
          %v1321 = vsel %vm1289, %v860, 0.0
          %v1322 = vsel %vm1290, %v865, 0.0
          %v1323 = vsel %vm1291, %v870, 0.0
          %v1324 = vsel %vm1292, %v875, 0.0
          %v1325 = vsel %vm1293, %v880, 0.0
          %v1326 = vld [vmem:[#allocation2] sm:$0x1]
          %vm1327 = vcmask 523520
          %v1328 = vsel %vm1327, %v1294, -inf
          %v1329 = vsel %vm1327, %v1295, -inf
          %v1330 = vsel %vm1327, %v1296, -inf
          %v1331 = vsel %vm1327, %v1297, -inf
          %v1332 = vsel %vm1327, %v1298, -inf
          %v1333 = vmax.f32 %v1328, %v1332
          %v1334 = vsel %vm1327, %v1299, -inf
          %v1335 = vmax.f32 %v1329, %v1334
          %v1336 = vsel %vm1327, %v1300, -inf
          %v1337 = vmax.f32 %v1330, %v1336
          %v1338 = vsel %vm1327, %v1301, -inf
          %v1339 = vmax.f32 %v1331, %v1338
          %v1340 = vsel %vm1327, %v1302, -inf
          %v1341 = vmax.f32 %v1333, %v1340
          %v1342 = vsel %vm1327, %v1303, -inf
          %v1343 = vmax.f32 %v1335, %v1342
          %v1344 = vsel %vm1327, %v1304, -inf
          %v1345 = vmax.f32 %v1337, %v1344
          %v1346 = vsel %vm1327, %v1305, -inf
          %v1347 = vmax.f32 %v1339, %v1346
          %v1348 = vsel %vm1327, %v1306, -inf
          %v1349 = vmax.f32 %v1341, %v1348
          %v1350 = vsel %vm1327, %v1307, -inf
          %v1351 = vmax.f32 %v1343, %v1350
          %v1352 = vsel %vm1327, %v1308, -inf
          %v1353 = vmax.f32 %v1345, %v1352
          %v1354 = vsel %vm1327, %v1309, -inf
          %v1355 = vmax.f32 %v1347, %v1354
          %v1356 = vmax.f32 %v1349, %v1351
          %v1357 = vmax.f32 %v1353, %v1355
          %v1358 = vmax.f32 %v1356, %v1357
          %v1359 = vrot.slane %v1358, 4
          %v1360 = vmax.f32 %v1358, %v1359
          %v1361 = vrot.slane %v1360, 2
          %v1362 = vmax.f32 %v1360, %v1361
          %v1363 = vrot.slane %v1362, 1
          %v1364 = vmax.f32 %v1362, %v1363
          %v1367 = vunpack.c.l.s4 1966171168
          %v1368 = vunpack.c.0.s8 %v1367
          %v1369 = vlaneseq
          %v1370 = vshrl.u32 %v1369, 7
          %v1371 = vsub.s32 %v1368, %v1370
          %v1372 = vrot.slane %v1364, %v1371
          %v1374 = vunpack.c.l.s4 1966171168
          %v1375 = vunpack.c.0.s8 %v1374
          %v1376 = vlaneseq
          %v1377 = vshrl.u32 %v1376, 7
          %v1378 = vsub.s32 %v1375, %v1377
          %v1379 = vrot.slane %v1372, %v1378
          %1380 = vrot.lane.b32.xlu0 %v1379, 96
          %v1381 = vpop.permute.xlu0 %1380
          %v1383 = vmax.f32 %v1326, %v1381
          %v1384 = vsub.f32 %v1326, %v1383
          %v1385 = vmul.f32 %v1384, 1.442695
          %v1386 = vpow.pop %v1385
          %v1388 = vlaneseq
          %v1389 = vshrl.u32 %v1388, 7
          %v1390 = vsub.s32 0, %v1389
          %v1391 = vrot.slane %v1383, %v1390
          %1392 = vrot.lane.b32.xlu0 %v1391, 32
          %v1393 = vpop.permute.xlu0 %1392
          %v1395 = vsub.f32 %v1294, %v1393
          %v1396 = vsub.f32 %v1295, %v1393
          %v1397 = vsub.f32 %v1296, %v1393
          %v1398 = vsub.f32 %v1297, %v1393
          %v1399 = vsub.f32 %v1298, %v1393
          %v1400 = vsub.f32 %v1299, %v1393
          %v1401 = vsub.f32 %v1300, %v1393
          %v1402 = vsub.f32 %v1301, %v1393
          %v1403 = vsub.f32 %v1302, %v1393
          %v1404 = vsub.f32 %v1303, %v1393
          %v1405 = vsub.f32 %v1304, %v1393
          %v1406 = vsub.f32 %v1305, %v1393
          %v1407 = vsub.f32 %v1306, %v1393
          %v1408 = vsub.f32 %v1307, %v1393
          %v1409 = vsub.f32 %v1308, %v1393
          %v1410 = vsub.f32 %v1309, %v1393
          %v1411 = vmul.f32 %v1395, 1.442695
          %v1412 = vpow.pop %v1411
          %v1413 = vmul.f32 %v1396, 1.442695
          %v1414 = vpow.pop %v1413
          %v1415 = vmul.f32 %v1397, 1.442695
          %v1416 = vpow.pop %v1415
          %v1417 = vmul.f32 %v1398, 1.442695
          %v1418 = vpow.pop %v1417
          %v1419 = vmul.f32 %v1399, 1.442695
          %v1420 = vpow.pop %v1419
          %v1421 = vmul.f32 %v1400, 1.442695
          %v1422 = vpow.pop %v1421
          %v1423 = vmul.f32 %v1401, 1.442695
          %v1424 = vpow.pop %v1423
          %v1425 = vmul.f32 %v1402, 1.442695
          %v1426 = vpow.pop %v1425
          %v1427 = vmul.f32 %v1403, 1.442695
          %v1428 = vpow.pop %v1427
          %v1429 = vmul.f32 %v1404, 1.442695
          %v1430 = vpow.pop %v1429
          %v1431 = vmul.f32 %v1405, 1.442695
          %v1432 = vpow.pop %v1431
          %v1433 = vmul.f32 %v1406, 1.442695
          %v1434 = vpow.pop %v1433
          %v1435 = vmul.f32 %v1407, 1.442695
          %v1436 = vpow.pop %v1435
          %v1437 = vmul.f32 %v1408, 1.442695
          %v1438 = vpow.pop %v1437
          %v1439 = vmul.f32 %v1409, 1.442695
          %v1440 = vpow.pop %v1439
          %v1441 = vmul.f32 %v1410, 1.442695
          %v1442 = vpow.pop %v1441
          %v1443 = vld [vmem:[#allocation3] sm:$0x1]
          %v1444 = vmul.f32 %v1386, %v1443
          %v1445 = vsel %vm1327, %v1412, 0.0
          %v1446 = vsel %vm1327, %v1414, 0.0
          %v1447 = vadd.f32 %v1445, %v1446
          %v1448 = vsel %vm1327, %v1416, 0.0
          %v1449 = vadd.f32 %v1447, %v1448
          %v1450 = vsel %vm1327, %v1418, 0.0
          %v1451 = vadd.f32 %v1449, %v1450
          %v1452 = vsel %vm1327, %v1420, 0.0
          %v1453 = vadd.f32 %v1451, %v1452
          %v1454 = vsel %vm1327, %v1422, 0.0
          %v1455 = vadd.f32 %v1453, %v1454
          %v1456 = vsel %vm1327, %v1424, 0.0
          %v1457 = vadd.f32 %v1455, %v1456
          %v1458 = vsel %vm1327, %v1426, 0.0
          %v1459 = vadd.f32 %v1457, %v1458
          %v1460 = vsel %vm1327, %v1428, 0.0
          %v1461 = vadd.f32 %v1459, %v1460
          %v1462 = vsel %vm1327, %v1430, 0.0
          %v1463 = vadd.f32 %v1461, %v1462
          %v1464 = vsel %vm1327, %v1432, 0.0
          %v1465 = vadd.f32 %v1463, %v1464
          %v1466 = vsel %vm1327, %v1434, 0.0
          %v1467 = vadd.f32 %v1465, %v1466
          %v1468 = vsel %vm1327, %v1436, 0.0
          %v1469 = vadd.f32 %v1467, %v1468
          %v1470 = vsel %vm1327, %v1438, 0.0
          %v1471 = vadd.f32 %v1469, %v1470
          %v1472 = vsel %vm1327, %v1440, 0.0
          %v1473 = vadd.f32 %v1471, %v1472
          %v1474 = vsel %vm1327, %v1442, 0.0
          %v1475 = vadd.f32 %v1473, %v1474
          %v1476 = vrot.slane %v1475, 4
          %v1477 = vadd.f32 %v1475, %v1476
          %v1478 = vrot.slane %v1477, 2
          %v1479 = vadd.f32 %v1477, %v1478
          %v1480 = vrot.slane %v1479, 1
          %v1481 = vadd.f32 %v1479, %v1480
          %v1484 = vunpack.c.l.s4 1966171168
          %v1485 = vunpack.c.0.s8 %v1484
          %v1486 = vlaneseq
          %v1487 = vshrl.u32 %v1486, 7
          %v1488 = vsub.s32 %v1485, %v1487
          %v1489 = vrot.slane %v1481, %v1488
          %v1491 = vunpack.c.l.s4 1966171168
          %v1492 = vunpack.c.0.s8 %v1491
          %v1493 = vlaneseq
          %v1494 = vshrl.u32 %v1493, 7
          %v1495 = vsub.s32 %v1492, %v1494
          %v1496 = vrot.slane %v1489, %v1495
          %1497 = vrot.lane.b32.xlu0 %v1496, 96
          %v1498 = vpop.permute.xlu0 %1497
          %v1500 = vadd.f32 %v1444, %v1498
          %vm1501 = vcmask 253952
          %1502 = vst.msk [vmem:[#allocation3] sm:$0x1] %vm1501, %v1500
          %v1503 = vld [vmem:[#allocation4] sm:$0x1]
          %v1504 = vmul.f32 %v1386, %v1503
          %1521 = vrot.lane.b32.xlu0 %v1310, 32
          %v1522 = vpop.permute.xlu0 %1521
          %1523 = vrot.lane.b32.xlu0 %v1311, 32
          %v1524 = vpop.permute.xlu0 %1523
          %1525 = vrot.lane.b32.xlu0 %v1312, 32
          %v1526 = vpop.permute.xlu0 %1525
          %1527 = vrot.lane.b32.xlu0 %v1313, 32
          %v1528 = vpop.permute.xlu0 %1527
          %1529 = vrot.lane.b32.xlu0 %v1314, 32
          %v1530 = vpop.permute.xlu0 %1529
          %1531 = vrot.lane.b32.xlu0 %v1315, 32
          %v1532 = vpop.permute.xlu0 %1531
          %1533 = vrot.lane.b32.xlu0 %v1316, 32
          %v1534 = vpop.permute.xlu0 %1533
          %1535 = vrot.lane.b32.xlu0 %v1317, 32
          %v1536 = vpop.permute.xlu0 %1535
          %1537 = vrot.lane.b32.xlu0 %v1318, 32
          %v1538 = vpop.permute.xlu0 %1537
          %1539 = vrot.lane.b32.xlu0 %v1319, 32
          %v1540 = vpop.permute.xlu0 %1539
          %1541 = vrot.lane.b32.xlu0 %v1320, 32
          %v1542 = vpop.permute.xlu0 %1541
          %1543 = vrot.lane.b32.xlu0 %v1321, 32
          %v1544 = vpop.permute.xlu0 %1543
          %1545 = vrot.lane.b32.xlu0 %v1322, 32
          %v1546 = vpop.permute.xlu0 %1545
          %1547 = vrot.lane.b32.xlu0 %v1323, 32
          %v1548 = vpop.permute.xlu0 %1547
          %1549 = vrot.lane.b32.xlu0 %v1324, 32
          %v1550 = vpop.permute.xlu0 %1549
          %1551 = vrot.lane.b32.xlu0 %v1325, 32
          %v1552 = vpop.permute.xlu0 %1551
          %v1569 = vmul.f32 %v1412, %v1522
          %v1570 = vmul.f32 %v1414, %v1524
          %v1571 = vmul.f32 %v1416, %v1526
          %v1572 = vmul.f32 %v1418, %v1528
          %v1573 = vmul.f32 %v1420, %v1530
          %v1574 = vmul.f32 %v1422, %v1532
          %v1575 = vmul.f32 %v1424, %v1534
          %v1576 = vmul.f32 %v1426, %v1536
          %v1577 = vmul.f32 %v1428, %v1538
          %v1578 = vmul.f32 %v1430, %v1540
          %v1579 = vmul.f32 %v1432, %v1542
          %v1580 = vmul.f32 %v1434, %v1544
          %v1581 = vmul.f32 %v1436, %v1546
          %v1582 = vmul.f32 %v1438, %v1548
          %v1583 = vmul.f32 %v1440, %v1550
          %v1584 = vmul.f32 %v1442, %v1552
          %v1585 = vsel %vm1327, %v1569, 0.0
          %v1586 = vsel %vm1327, %v1570, 0.0
          %v1587 = vadd.f32 %v1585, %v1586
          %v1588 = vsel %vm1327, %v1571, 0.0
          %v1589 = vadd.f32 %v1587, %v1588
          %v1590 = vsel %vm1327, %v1572, 0.0
          %v1591 = vadd.f32 %v1589, %v1590
          %v1592 = vsel %vm1327, %v1573, 0.0
          %v1593 = vadd.f32 %v1591, %v1592
          %v1594 = vsel %vm1327, %v1574, 0.0
          %v1595 = vadd.f32 %v1593, %v1594
          %v1596 = vsel %vm1327, %v1575, 0.0
          %v1597 = vadd.f32 %v1595, %v1596
          %v1598 = vsel %vm1327, %v1576, 0.0
          %v1599 = vadd.f32 %v1597, %v1598
          %v1600 = vsel %vm1327, %v1577, 0.0
          %v1601 = vadd.f32 %v1599, %v1600
          %v1602 = vsel %vm1327, %v1578, 0.0
          %v1603 = vadd.f32 %v1601, %v1602
          %v1604 = vsel %vm1327, %v1579, 0.0
          %v1605 = vadd.f32 %v1603, %v1604
          %v1606 = vsel %vm1327, %v1580, 0.0
          %v1607 = vadd.f32 %v1605, %v1606
          %v1608 = vsel %vm1327, %v1581, 0.0
          %v1609 = vadd.f32 %v1607, %v1608
          %v1610 = vsel %vm1327, %v1582, 0.0
          %v1611 = vadd.f32 %v1609, %v1610
          %v1612 = vsel %vm1327, %v1583, 0.0
          %v1613 = vadd.f32 %v1611, %v1612
          %v1614 = vsel %vm1327, %v1584, 0.0
          %v1615 = vadd.f32 %v1613, %v1614
          %v1616 = vrot.slane %v1615, 4
          %v1617 = vadd.f32 %v1615, %v1616
          %v1618 = vrot.slane %v1617, 2
          %v1619 = vadd.f32 %v1617, %v1618
          %v1620 = vrot.slane %v1619, 1
          %v1621 = vadd.f32 %v1619, %v1620
          %v1624 = vunpack.c.l.s4 1966171168
          %v1625 = vunpack.c.0.s8 %v1624
          %v1626 = vlaneseq
          %v1627 = vshrl.u32 %v1626, 7
          %v1628 = vsub.s32 %v1625, %v1627
          %v1629 = vrot.slane %v1621, %v1628
          %v1631 = vunpack.c.l.s4 1966171168
          %v1632 = vunpack.c.0.s8 %v1631
          %v1633 = vlaneseq
          %v1634 = vshrl.u32 %v1633, 7
          %v1635 = vsub.s32 %v1632, %v1634
          %v1636 = vrot.slane %v1629, %v1635
          %1637 = vrot.lane.b32.xlu0 %v1636, 96
          %v1638 = vpop.permute.xlu0 %1637
          %v1640 = vadd.f32 %v1504, %v1638
          %1641 = vst.msk [vmem:[#allocation4] sm:$0x1] %vm1501, %v1640
          %1642 = vst.msk [vmem:[#allocation2] sm:$0x1] %vm1501, %v1383
        $region76: #{tpu_custom_call.1} parent=63 // pred_fallthru
          _
        %p1643 = scmp.eq.s32.totalorder %s30, 2
        // Predicated region
        $region77: #{tpu_custom_call.1} parent=63 // pred_check
          %p1644 = pneg %p1643
        $region78: #{tpu_custom_call.1} parent=63 // pred_check_branch
          %1646 = sbr.rel (%p1644) target = $region80
        $region79: #{tpu_custom_call.1} parent=63 // pred_region
          %v1647 = vld [vmem:[#allocation4] sm:$0x1]
          %v1648 = vld [vmem:[#allocation3] sm:$0x1]
          %v1649 = vrcp.pop %v1648
          %v1650 = vmul.f32 %v1647, %v1649
          %v1651 = vld [vmem:[%s6] sm:$0xff]
          %v1652 = vld [vmem:[%s6 + $0x8] sm:$0xff]
          %v1653 = vld [vmem:[%s6 + $0x10] sm:$0xff]
          %v1654 = vld [vmem:[%s6 + $0x18] sm:$0xff]
          %v1655 = vld [vmem:[%s7] sm:$0x1]
          %v1657 = vsel %vm689, %v1650, 0
          %1659 = vmatprep.subr.mxu0 0.0
          %1660 = vmatpush1.msra.mxu0 %v1651
          %1661 = vmatprep.subr.mxu0 0.0
          %1662 = vmatpush1.msra.mxu0 %v1652
          %1663 = vmatprep.subr.mxu0 0.0
          %1664 = vmatpush1.msra.mxu0 %v1653
          %1665 = vmatprep.subr.mxu0 0.0
          %1666 = vmatpush1.msra.mxu0 %v1654
          %1667 = vmatprep.subr.mxu0 0.0
          %1668 = vmatpush1.msra.mxu0 0.0
          %1669 = vmatprep.subr.mxu0 0.0
          %1670 = vmatpush1.msra.mxu0 0.0
          %1671 = vmatprep.subr.mxu0 0.0
          %1672 = vmatpush1.msra.mxu0 0.0
          %1673 = vmatprep.subr.mxu0 0.0
          %1674 = vmatpush1.msra.mxu0 0.0
          %1675 = vmatprep.subr.mxu0 0.0
          %1676 = vmatpush1.msra.mxu0 0.0
          %1677 = vmatprep.subr.mxu0 0.0
          %1678 = vmatpush1.msra.mxu0 0.0
          %1679 = vmatprep.subr.mxu0 0.0
          %1680 = vmatpush1.msra.mxu0 0.0
          %1681 = vmatprep.subr.mxu0 0.0
          %1682 = vmatpush1.msra.mxu0 0.0
          %1683 = vmatprep.subr.mxu0 0.0
          %1684 = vmatpush1.msra.mxu0 0.0
          %1685 = vmatprep.subr.mxu0 0.0
          %1686 = vmatpush1.msra.mxu0 0.0
          %1687 = vmatprep.subr.mxu0 0.0
          %1688 = vmatpush1.msra.mxu0 0.0
          %1689 = vmatprep.subr.mxu0 0.0
          %1690 = vmatpush1.msra.mxu0 0.0
          %1691 = vmatprep.subr.mxu0 0.0
          %1692 = vmatpush1.msra.mxu0 0.0
          %1693 = vmatprep.subr.mxu0 0.0
          %1694 = vmatpush1.msra.mxu0 0.0
          %1695 = vmatprep.subr.mxu0 0.0
          %1696 = vmatpush1.msra.mxu0 0.0
          %1697 = vmatprep.subr.mxu0 0.0
          %1698 = vmatpush1.msra.mxu0 0.0
          %1699 = vmatprep.subr.mxu0 0.0
          %1700 = vmatpush1.msra.mxu0 0.0
          %1701 = vmatprep.subr.mxu0 0.0
          %1702 = vmatpush1.msra.mxu0 0.0
          %1703 = vmatprep.subr.mxu0 0.0
          %1704 = vmatpush1.msra.mxu0 0.0
          %1705 = vmatprep.subr.mxu0 0.0
          %1706 = vmatpush1.msra.mxu0 0.0
          %1707 = vmatprep.subr.mxu0 0.0
          %1708 = vmatpush1.msra.mxu0 0.0
          %1709 = vmatprep.subr.mxu0 0.0
          %1710 = vmatpush1.msra.mxu0 0.0
          %1711 = vmatprep.subr.mxu0 0.0
          %1712 = vmatpush1.msra.mxu0 0.0
          %1713 = vmatprep.subr.mxu0 0.0
          %1714 = vmatpush1.msra.mxu0 0.0
          %1715 = vmatprep.subr.mxu0 0.0
          %1716 = vmatpush1.msra.mxu0 0.0
          %1717 = vmatprep.subr.mxu0 0.0
          %1718 = vmatpush1.msra.mxu0 0.0
          %1719 = vmatprep.subr.mxu0 0.0
          %1720 = vmatpush1.msra.mxu0 0.0
          %1721 = vmatprep.subr.mxu0 0.0
          %1722 = vmatpush1.msra.mxu0 0.0
          %1723 = vmatprep.mubr.f32.mxu0 0.0
          %1724 = vmatmul.mubr.f32.gmra.mrb[0].mxu0 %v1657
          %v1725 = vpop.f32.mrb[0].mxu0
          %v1726 = vadd.f32 %v1655, %v1725
          %v1727 = vpop.f32.mrb[0].mxu0
          %1728 = vdwg.mxu0
          %vm1729 = vcmask 253952
          %v1730 = vsel %vm1729, %v1726, 0.0
          %1731 = vadd.xlane.f32.xlu0 %v1730
          %v1732 = vpop.xlane.xlu0 %1731
          %v1733 = vrcp.pop 32.0
          %v1734 = vmul.f32 %v1732, %v1733
          %v1735 = vsub.f32 %v1726, %v1734
          %v1736 = vmul.f32 %v1735, %v1735
          %v1737 = vsel %vm1729, %v1736, 0.0
          %1738 = vadd.xlane.f32.xlu0 %v1737
          %v1739 = vpop.xlane.xlu0 %1738
          %v1740 = vmul.f32 %v1739, %v1733
          %v1741 = vadd.f32 %v1740, 1e-06
          %v1742 = vrsqrt.pop %v1741
          %v1743 = vmul.f32 %v1735, %v1742
          %v1744 = vld [vmem:[%s8] sm:$0x1]
          %v1745 = vmul.f32 %v1743, %v1744
          %v1746 = vld [vmem:[%s9] sm:$0x1]
          %v1747 = vadd.f32 %v1745, %v1746
          %v1748 = vld [vmem:[%s10] sm:$0xff]
          %v1749 = vld [vmem:[%s10 + $0x8] sm:$0xff]
          %v1750 = vld [vmem:[%s10 + $0x10] sm:$0xff]
          %v1751 = vld [vmem:[%s10 + $0x18] sm:$0xff]
          %v1752 = vld [vmem:[%s11] sm:$0x1]
          %v1754 = vsel %vm689, %v1747, 0
          %1756 = vmatprep.subr.mxu0 0.0
          %1757 = vmatpush1.msra.mxu0 %v1748
          %1758 = vmatprep.subr.mxu0 0.0
          %1759 = vmatpush1.msra.mxu0 %v1749
          %1760 = vmatprep.subr.mxu0 0.0
          %1761 = vmatpush1.msra.mxu0 %v1750
          %1762 = vmatprep.subr.mxu0 0.0
          %1763 = vmatpush1.msra.mxu0 %v1751
          %1764 = vmatprep.subr.mxu0 0.0
          %1765 = vmatpush1.msra.mxu0 0.0
          %1766 = vmatprep.subr.mxu0 0.0
          %1767 = vmatpush1.msra.mxu0 0.0
          %1768 = vmatprep.subr.mxu0 0.0
          %1769 = vmatpush1.msra.mxu0 0.0
          %1770 = vmatprep.subr.mxu0 0.0
          %1771 = vmatpush1.msra.mxu0 0.0
          %1772 = vmatprep.subr.mxu0 0.0
          %1773 = vmatpush1.msra.mxu0 0.0
          %1774 = vmatprep.subr.mxu0 0.0
          %1775 = vmatpush1.msra.mxu0 0.0
          %1776 = vmatprep.subr.mxu0 0.0
          %1777 = vmatpush1.msra.mxu0 0.0
          %1778 = vmatprep.subr.mxu0 0.0
          %1779 = vmatpush1.msra.mxu0 0.0
          %1780 = vmatprep.subr.mxu0 0.0
          %1781 = vmatpush1.msra.mxu0 0.0
          %1782 = vmatprep.subr.mxu0 0.0
          %1783 = vmatpush1.msra.mxu0 0.0
          %1784 = vmatprep.subr.mxu0 0.0
          %1785 = vmatpush1.msra.mxu0 0.0
          %1786 = vmatprep.subr.mxu0 0.0
          %1787 = vmatpush1.msra.mxu0 0.0
          %1788 = vmatprep.subr.mxu0 0.0
          %1789 = vmatpush1.msra.mxu0 0.0
          %1790 = vmatprep.subr.mxu0 0.0
          %1791 = vmatpush1.msra.mxu0 0.0
          %1792 = vmatprep.subr.mxu0 0.0
          %1793 = vmatpush1.msra.mxu0 0.0
          %1794 = vmatprep.subr.mxu0 0.0
          %1795 = vmatpush1.msra.mxu0 0.0
          %1796 = vmatprep.subr.mxu0 0.0
          %1797 = vmatpush1.msra.mxu0 0.0
          %1798 = vmatprep.subr.mxu0 0.0
          %1799 = vmatpush1.msra.mxu0 0.0
          %1800 = vmatprep.subr.mxu0 0.0
          %1801 = vmatpush1.msra.mxu0 0.0
          %1802 = vmatprep.subr.mxu0 0.0
          %1803 = vmatpush1.msra.mxu0 0.0
          %1804 = vmatprep.subr.mxu0 0.0
          %1805 = vmatpush1.msra.mxu0 0.0
          %1806 = vmatprep.subr.mxu0 0.0
          %1807 = vmatpush1.msra.mxu0 0.0
          %1808 = vmatprep.subr.mxu0 0.0
          %1809 = vmatpush1.msra.mxu0 0.0
          %1810 = vmatprep.subr.mxu0 0.0
          %1811 = vmatpush1.msra.mxu0 0.0
          %1812 = vmatprep.subr.mxu0 0.0
          %1813 = vmatpush1.msra.mxu0 0.0
          %1814 = vmatprep.subr.mxu0 0.0
          %1815 = vmatpush1.msra.mxu0 0.0
          %1816 = vmatprep.subr.mxu0 0.0
          %1817 = vmatpush1.msra.mxu0 0.0
          %1818 = vmatprep.subr.mxu0 0.0
          %1819 = vmatpush1.msra.mxu0 0.0
          %1820 = vmatprep.mubr.f32.mxu0 0.0
          %1821 = vmatmul.mubr.f32.gmra.mrb[0].mxu0 %v1754
          %v1822 = vpop.f32.mrb[0].mxu0
          %v1823 = vadd.f32 %v1752, %v1822
          %v1824 = vpop.f32.mrb[0].mxu0
          %1825 = vdwg.mxu0
          %vm1826 = vcmask 24576
          %1827 = vst.msk [vmem:[#allocation7] sm:$0x1] %vm1826, %v1823
        $region80: #{tpu_custom_call.1} parent=63 // pred_fallthru
          _
        // Predicated region
        $region81: #{tpu_custom_call.1} parent=63 // pred_check
          %p1828 = pneg %p293
        $region82: #{tpu_custom_call.1} parent=63 // pred_check_branch
          %1830 = sbr.rel (%p1828) target = $region84
        $region83: #{tpu_custom_call.1} parent=63 // pred_region
          %s1832 = ssub.s32 16, 16
          %1833 = vsyncadd [#allocation8], %s1832
          %s1834 = smul.addr %s29, 16
          %s1835 = scalar_lea.hbm %s12, %s1834
          %s1837 = sshll.u32 [#allocation7], 4
          %s1838 = int_to_ptr.vmem [resolvable:$true] %s1837
          %1840 = dma.vmem_to_hbm [thread:$0]  %s1838, 16, %s1835, [#allocation8]
        $region84: #{tpu_custom_call.1} parent=63 // pred_fallthru
          _
        // Predicated region
        $region85: #{tpu_custom_call.1} parent=63 // pred_check
          %p1841 = pneg %p293
        $region86: #{tpu_custom_call.1} parent=63 // pred_check_branch
          %1843 = sbr.rel (%p1841) target = $region88
        $region87: #{tpu_custom_call.1} parent=63 // pred_region
          %1844 = dma.done [#allocation8], 16
        $region88: #{tpu_custom_call.1} parent=63 // pred_fallthru
          _
      $region64: #{tpu_custom_call.1} parent=5 // pred_fallthru
        _
      %p1845 = scmp.le.s32.totalorder 2, %s20
      // Predicated region
      $region89: #{tpu_custom_call.1} parent=5 // pred_check
        %p1846 = pneg %p1845
      $region90: #{tpu_custom_call.1} parent=5 // pred_check_branch
        %1848 = sbr.rel (%p1846) target = $region92
      $region91: #{tpu_custom_call.1} parent=5 // pred_region
        %s1849 = ssub.s32 %s20, 2
      $region92: #{tpu_custom_call.1} parent=5 // pred_fallthru
        _
    $region6: #{tpu_custom_call.1} parent=1 // loop_footer
      %s24 = sadd.s32 1, %s20
    $region7: #{tpu_custom_call.1} parent=1 // loop_footer_branch
      %19 = sbr.rel target = $region3
    $region8: #{tpu_custom_call.1} parent=1 // loop_exit
      _
    %1850 = vsyncpa [#allocation8], 1
    %s1851 = scalar_lea.sflag [#allocation8], 1
    %1852 = vsyncpa %s1851, 1

// kernel: tpu_custom_call.1
$region0: #{tpu_custom_call.1}
  #allocation0 [shape = 'u32[]', space=smem, size = 0x4, offset = 0x4, fixed_abs, tag = 'smem constant byte address 0x4 - core index']
  #allocation1 [shape = 'u32[144,128]{1,0:T(1,128)}', space=vmem, size = 0x12000, scoped, tag = 'internal scratch']
  #allocation2 [shape = 'f32[1,32]{1,0:T(1,128)}', space=vmem, size = 0x200, scoped, tag = 'scratch operand']
  #allocation3 [shape = 'f32[1,32]{1,0:T(1,128)}', space=vmem, size = 0x200, scoped, tag = 'scratch operand']
  #allocation4 [shape = 'f32[1,32]{1,0:T(1,128)}', space=vmem, size = 0x200, scoped, tag = 'scratch operand']
  #allocation5 [shape = 's32[1]{0}', space=sflag, size = 0x4, scoped, tag = 'scoped memory for tpu_custom_call.1']
  #allocation6 [shape = 's32[1]{0:T(128)S(6)}', space=smem, size = 0x200, scoped, tag = 'prefetched SMEM operand 0']
  %s0 = inlined_call_operand.<no memory space> [shape: s32[1], index: 0, kind: input, shape index: {}]
  %s1 = inlined_call_operand.vmem [shape: f32[1,300,64], index: 1, kind: input, shape index: {}]
  %s2 = inlined_call_operand.vmem [shape: f32[64,32], index: 2, kind: input, shape index: {}]
  %s3 = inlined_call_operand.vmem [shape: f32[1,32], index: 3, kind: input, shape index: {}]
  %s4 = inlined_call_operand.vmem [shape: f32[32,64], index: 4, kind: input, shape index: {}]
  %s5 = inlined_call_operand.vmem [shape: f32[1,64], index: 5, kind: input, shape index: {}]
  %s6 = inlined_call_operand.vmem [shape: f32[32,32], index: 6, kind: input, shape index: {}]
  %s7 = inlined_call_operand.vmem [shape: f32[1,32], index: 7, kind: input, shape index: {}]
  %s8 = inlined_call_operand.vmem [shape: f32[1,32], index: 8, kind: input, shape index: {}]
  %s9 = inlined_call_operand.vmem [shape: f32[1,32], index: 9, kind: input, shape index: {}]
  %s10 = inlined_call_operand.vmem [shape: f32[32,4], index: 10, kind: input, shape index: {}]
  %s11 = inlined_call_operand.vmem [shape: f32[1,4], index: 11, kind: input, shape index: {}]
  %s12 = inlined_call_operand.hbm [shape: f32[1,1,4], index: 12, kind: output, shape index: {}]
  %s13 = sld [smem:[#allocation0]]
  $region93: #{tpu_custom_call.1} parent=0
    _
  %s15 = ssub.s32 1, %s13
  %s16 = scalar_select 0, %s15, %s13
  %17 = sst [smem:[#allocation6]] %s0
  $region1: #{tpu_custom_call.1} parent=0
    #allocation7 [shape = 'u8[512]{0}', space=vmem, size = 0x400, scoped, tag = 'output window, operand 0, single buffered']
    #allocation8 [shape = 's32[2]{0}', space=sflag, size = 0x8, scoped, tag = 'scoped memory for tpu_custom_call.1']
    %18 = vsyncpa [#allocation8], 0
    loop: start=0, step=1, limit=5
    $region2: #{tpu_custom_call.1} parent=1 // loop_pre_header
      _
    $region3: #{tpu_custom_call.1} parent=1 // loop_header
      %s20 = sphi 0, %s24
      %p21 = scmp.ge.s32.totalorder %s20, 5
      %s27 = sphi 0, %s39
      %s28 = sphi 0, %s35
      %s29 = sphi 0, %s27
      %s30 = sphi 0, %s28
      %s31 = sphi 0, %s29
      %s32 = sphi 0, %s30
      %s44 = sphi 0, %s46
      %s47 = sphi 0, %s44
      %s48 = sphi 0, %s47
      %s64 = sphi 0, %s48
      %s68 = sphi 0, %s68
      %s70 = sphi 0, %s68
      %s71 = sphi 0, %s70
      %s85 = sphi 0, %s71
      %s89 = sphi 0, %s89
      %s91 = sphi 0, %s89
      %s92 = sphi 0, %s91
      %s106 = sphi 0, %s92
      %s110 = sphi 0, %s110
      %s112 = sphi 0, %s110
      %s113 = sphi 0, %s112
      %s127 = sphi 0, %s113
      %s131 = sphi 0, %s131
      %s133 = sphi 0, %s131
      %s134 = sphi 0, %s133
      %s148 = sphi 0, %s134
      %s152 = sphi 0, %s152
      %s154 = sphi 0, %s152
      %s155 = sphi 0, %s154
      %s169 = sphi 0, %s155
      %s173 = sphi 0, %s173
      %s175 = sphi 0, %s173
      %s176 = sphi 0, %s175
      %s190 = sphi 0, %s176
      %s194 = sphi 0, %s194
      %s196 = sphi 0, %s194
      %s197 = sphi 0, %s196
      %s211 = sphi 0, %s197
      %s215 = sphi 0, %s215
      %s217 = sphi 0, %s215
      %s218 = sphi 0, %s217
      %s232 = sphi 0, %s218
      %s236 = sphi 0, %s236
      %s238 = sphi 0, %s236
      %s239 = sphi 0, %s238
      %s253 = sphi 0, %s239
      %s257 = sphi 0, %s257
      %s259 = sphi 0, %s257
      %s260 = sphi 0, %s259
      %s274 = sphi 0, %s260
      %s280 = sphi 0, %s282
      %s283 = sphi 0, %s280
      %s284 = sphi 0, %s283
      %s300 = sphi 0, %s284
    $region4: #{tpu_custom_call.1} parent=1 // loop_header_branch
      %23 = sbr.rel (%p21) target = $region8
    $region5: #{tpu_custom_call.1} parent=1 // loop_body
      %s25 = ssub.s32 %s20, 1
      %s26 = ssub.s32 %s20, 2
      %s33 = sadd.s32 1, %s28
      %p34 = scmp.ge.s32.totalorder %s33, 3
      %s35 = scalar_select %p34, 0, %s33
      %s36 = sadd.s32 1, %s27
      %s37 = scalar_select %p34, %s36, %s27
      %p38 = scmp.ge.s32.totalorder %s37, 1
      %s39 = scalar_select %p38, 0, %s37
      %s40 = ssub.s32 %s27, %s39
      %s41 = ssub.s32 %s28, %s35
      %s42 = sor.u32 %s40, %s41
      %p43 = scmp.eq.s32.totalorder %s42, 0
      %s45 = sadd.s32 %s44, 1
      %s46 = scalar_select %p43, %s44, %s45
      %p49 = pneg %p43
      %p50 = scmp.eq.s32.totalorder %s20, 2
      %p51 = por %p49, %p50
      %p52 = scmp.ne.s32.totalorder %s44, %s47
      %p53 = scmp.eq.s32.totalorder %s20, 0
      %p54 = por %p52, %p53
      %p55 = scmp.ne.s32.totalorder %s44, %s47
      %p56 = scmp.eq.s32.totalorder %s25, 2
      %p57 = por %p55, %p56
      %p58 = scmp.ne.s32.totalorder %s47, %s48
      %p59 = scmp.eq.s32.totalorder %s25, 0
      %p60 = por %p58, %p59
      %p61 = scmp.ne.s32.totalorder %s47, %s48
      %p62 = scmp.eq.s32.totalorder %s26, 2
      %p63 = por %p61, %p62
      %p65 = scmp.ne.s32.totalorder %s48, %s64
      %p66 = scmp.eq.s32.totalorder %s26, 0
      %p67 = por %p65, %p66
      %s69 = sadd.s32 %s68, 1
      %p72 = scmp.eq.s32.totalorder %s20, 2
      %p73 = scmp.ne.s32.totalorder %s68, %s70
      %p74 = scmp.eq.s32.totalorder %s20, 0
      %p75 = por %p73, %p74
      %p76 = scmp.ne.s32.totalorder %s68, %s70
      %p77 = scmp.eq.s32.totalorder %s25, 2
      %p78 = por %p76, %p77
      %p79 = scmp.ne.s32.totalorder %s70, %s71
      %p80 = scmp.eq.s32.totalorder %s25, 0
      %p81 = por %p79, %p80
      %p82 = scmp.ne.s32.totalorder %s70, %s71
      %p83 = scmp.eq.s32.totalorder %s26, 2
      %p84 = por %p82, %p83
      %p86 = scmp.ne.s32.totalorder %s71, %s85
      %p87 = scmp.eq.s32.totalorder %s26, 0
      %p88 = por %p86, %p87
      %s90 = sadd.s32 %s89, 1
      %p93 = scmp.eq.s32.totalorder %s20, 2
      %p94 = scmp.ne.s32.totalorder %s89, %s91
      %p95 = scmp.eq.s32.totalorder %s20, 0
      %p96 = por %p94, %p95
      %p97 = scmp.ne.s32.totalorder %s89, %s91
      %p98 = scmp.eq.s32.totalorder %s25, 2
      %p99 = por %p97, %p98
      %p100 = scmp.ne.s32.totalorder %s91, %s92
      %p101 = scmp.eq.s32.totalorder %s25, 0
      %p102 = por %p100, %p101
      %p103 = scmp.ne.s32.totalorder %s91, %s92
      %p104 = scmp.eq.s32.totalorder %s26, 2
      %p105 = por %p103, %p104
      %p107 = scmp.ne.s32.totalorder %s92, %s106
      %p108 = scmp.eq.s32.totalorder %s26, 0
      %p109 = por %p107, %p108
      %s111 = sadd.s32 %s110, 1
      %p114 = scmp.eq.s32.totalorder %s20, 2
      %p115 = scmp.ne.s32.totalorder %s110, %s112
      %p116 = scmp.eq.s32.totalorder %s20, 0
      %p117 = por %p115, %p116
      %p118 = scmp.ne.s32.totalorder %s110, %s112
      %p119 = scmp.eq.s32.totalorder %s25, 2
      %p120 = por %p118, %p119
      %p121 = scmp.ne.s32.totalorder %s112, %s113
      %p122 = scmp.eq.s32.totalorder %s25, 0
      %p123 = por %p121, %p122
      %p124 = scmp.ne.s32.totalorder %s112, %s113
      %p125 = scmp.eq.s32.totalorder %s26, 2
      %p126 = por %p124, %p125
      %p128 = scmp.ne.s32.totalorder %s113, %s127
      %p129 = scmp.eq.s32.totalorder %s26, 0
      %p130 = por %p128, %p129
      %s132 = sadd.s32 %s131, 1
      %p135 = scmp.eq.s32.totalorder %s20, 2
      %p136 = scmp.ne.s32.totalorder %s131, %s133
      %p137 = scmp.eq.s32.totalorder %s20, 0
      %p138 = por %p136, %p137
      %p139 = scmp.ne.s32.totalorder %s131, %s133
      %p140 = scmp.eq.s32.totalorder %s25, 2
      %p141 = por %p139, %p140
      %p142 = scmp.ne.s32.totalorder %s133, %s134
      %p143 = scmp.eq.s32.totalorder %s25, 0
      %p144 = por %p142, %p143
      %p145 = scmp.ne.s32.totalorder %s133, %s134
      %p146 = scmp.eq.s32.totalorder %s26, 2
      %p147 = por %p145, %p146
      %p149 = scmp.ne.s32.totalorder %s134, %s148
      %p150 = scmp.eq.s32.totalorder %s26, 0
      %p151 = por %p149, %p150
      %s153 = sadd.s32 %s152, 1
      %p156 = scmp.eq.s32.totalorder %s20, 2
      %p157 = scmp.ne.s32.totalorder %s152, %s154
      %p158 = scmp.eq.s32.totalorder %s20, 0
      %p159 = por %p157, %p158
      %p160 = scmp.ne.s32.totalorder %s152, %s154
      %p161 = scmp.eq.s32.totalorder %s25, 2
      %p162 = por %p160, %p161
      %p163 = scmp.ne.s32.totalorder %s154, %s155
      %p164 = scmp.eq.s32.totalorder %s25, 0
      %p165 = por %p163, %p164
      %p166 = scmp.ne.s32.totalorder %s154, %s155
      %p167 = scmp.eq.s32.totalorder %s26, 2
      %p168 = por %p166, %p167
      %p170 = scmp.ne.s32.totalorder %s155, %s169
      %p171 = scmp.eq.s32.totalorder %s26, 0
      %p172 = por %p170, %p171
      %s174 = sadd.s32 %s173, 1
      %p177 = scmp.eq.s32.totalorder %s20, 2
      %p178 = scmp.ne.s32.totalorder %s173, %s175
      %p179 = scmp.eq.s32.totalorder %s20, 0
      %p180 = por %p178, %p179
      %p181 = scmp.ne.s32.totalorder %s173, %s175
      %p182 = scmp.eq.s32.totalorder %s25, 2
      %p183 = por %p181, %p182
      %p184 = scmp.ne.s32.totalorder %s175, %s176
      %p185 = scmp.eq.s32.totalorder %s25, 0
      %p186 = por %p184, %p185
      %p187 = scmp.ne.s32.totalorder %s175, %s176
      %p188 = scmp.eq.s32.totalorder %s26, 2
      %p189 = por %p187, %p188
      %p191 = scmp.ne.s32.totalorder %s176, %s190
      %p192 = scmp.eq.s32.totalorder %s26, 0
      %p193 = por %p191, %p192
      %s195 = sadd.s32 %s194, 1
      %p198 = scmp.eq.s32.totalorder %s20, 2
      %p199 = scmp.ne.s32.totalorder %s194, %s196
      %p200 = scmp.eq.s32.totalorder %s20, 0
      %p201 = por %p199, %p200
      %p202 = scmp.ne.s32.totalorder %s194, %s196
      %p203 = scmp.eq.s32.totalorder %s25, 2
      %p204 = por %p202, %p203
      %p205 = scmp.ne.s32.totalorder %s196, %s197
      %p206 = scmp.eq.s32.totalorder %s25, 0
      %p207 = por %p205, %p206
      %p208 = scmp.ne.s32.totalorder %s196, %s197
      %p209 = scmp.eq.s32.totalorder %s26, 2
      %p210 = por %p208, %p209
      %p212 = scmp.ne.s32.totalorder %s197, %s211
      %p213 = scmp.eq.s32.totalorder %s26, 0
      %p214 = por %p212, %p213
      %s216 = sadd.s32 %s215, 1
      %p219 = scmp.eq.s32.totalorder %s20, 2
      %p220 = scmp.ne.s32.totalorder %s215, %s217
      %p221 = scmp.eq.s32.totalorder %s20, 0
      %p222 = por %p220, %p221
      %p223 = scmp.ne.s32.totalorder %s215, %s217
      %p224 = scmp.eq.s32.totalorder %s25, 2
      %p225 = por %p223, %p224
      %p226 = scmp.ne.s32.totalorder %s217, %s218
      %p227 = scmp.eq.s32.totalorder %s25, 0
      %p228 = por %p226, %p227
      %p229 = scmp.ne.s32.totalorder %s217, %s218
      %p230 = scmp.eq.s32.totalorder %s26, 2
      %p231 = por %p229, %p230
      %p233 = scmp.ne.s32.totalorder %s218, %s232
      %p234 = scmp.eq.s32.totalorder %s26, 0
      %p235 = por %p233, %p234
      %s237 = sadd.s32 %s236, 1
      %p240 = scmp.eq.s32.totalorder %s20, 2
      %p241 = scmp.ne.s32.totalorder %s236, %s238
      %p242 = scmp.eq.s32.totalorder %s20, 0
      %p243 = por %p241, %p242
      %p244 = scmp.ne.s32.totalorder %s236, %s238
      %p245 = scmp.eq.s32.totalorder %s25, 2
      %p246 = por %p244, %p245
      %p247 = scmp.ne.s32.totalorder %s238, %s239
      %p248 = scmp.eq.s32.totalorder %s25, 0
      %p249 = por %p247, %p248
      %p250 = scmp.ne.s32.totalorder %s238, %s239
      %p251 = scmp.eq.s32.totalorder %s26, 2
      %p252 = por %p250, %p251
      %p254 = scmp.ne.s32.totalorder %s239, %s253
      %p255 = scmp.eq.s32.totalorder %s26, 0
      %p256 = por %p254, %p255
      %s258 = sadd.s32 %s257, 1
      %p261 = scmp.eq.s32.totalorder %s20, 2
      %p262 = scmp.ne.s32.totalorder %s257, %s259
      %p263 = scmp.eq.s32.totalorder %s20, 0
      %p264 = por %p262, %p263
      %p265 = scmp.ne.s32.totalorder %s257, %s259
      %p266 = scmp.eq.s32.totalorder %s25, 2
      %p267 = por %p265, %p266
      %p268 = scmp.ne.s32.totalorder %s259, %s260
      %p269 = scmp.eq.s32.totalorder %s25, 0
      %p270 = por %p268, %p269
      %p271 = scmp.ne.s32.totalorder %s259, %s260
      %p272 = scmp.eq.s32.totalorder %s26, 2
      %p273 = por %p271, %p272
      %p275 = scmp.ne.s32.totalorder %s260, %s274
      %p276 = scmp.eq.s32.totalorder %s26, 0
      %p277 = por %p275, %p276
      %s278 = ssub.s32 %s27, %s39
      %p279 = scmp.eq.s32.totalorder %s278, 0
      %s281 = sadd.s32 %s280, 1
      %s282 = scalar_select %p279, %s280, %s281
      %p285 = pneg %p279
      %p286 = scmp.eq.s32.totalorder %s20, 2
      %p287 = por %p285, %p286
      %p288 = scmp.ne.s32.totalorder %s280, %s283
      %p289 = scmp.eq.s32.totalorder %s20, 0
      %p290 = por %p288, %p289
      %p291 = scmp.ne.s32.totalorder %s280, %s283
      %p292 = scmp.eq.s32.totalorder %s25, 2
      %p293 = por %p291, %p292
      %p294 = scmp.ne.s32.totalorder %s283, %s284
      %p295 = scmp.eq.s32.totalorder %s25, 0
      %p296 = por %p294, %p295
      %p297 = scmp.ne.s32.totalorder %s283, %s284
      %p298 = scmp.eq.s32.totalorder %s26, 2
      %p299 = por %p297, %p298
      %p301 = scmp.ne.s32.totalorder %s284, %s300
      %p302 = scmp.eq.s32.totalorder %s26, 0
      %p303 = por %p301, %p302
      %p304 = scmp.le.s32.totalorder 1, %s20
      %p305 = scmp.lt.s32.totalorder %s20, 4
      %p306 = pnand %p304, %p305
      %p307 = pneg %p306
      // Predicated region
      $region9: #{tpu_custom_call.1} parent=5 // pred_check
        _
      $region10: #{tpu_custom_call.1} parent=5 // pred_check_branch
        %309 = sbr.rel (%p306) target = $region12
      $region11: #{tpu_custom_call.1} parent=5 // pred_region
        %s310 = ssub.s32 %s20, 1
        // Predicated region
        $region13: #{tpu_custom_call.1} parent=11 // pred_check
          %p311 = pneg %p81
        $region14: #{tpu_custom_call.1} parent=11 // pred_check_branch
          %313 = sbr.rel (%p311) target = $region16
        $region15: #{tpu_custom_call.1} parent=11 // pred_region
          _
        $region16: #{tpu_custom_call.1} parent=11 // pred_fallthru
          _
        // Predicated region
        $region17: #{tpu_custom_call.1} parent=11 // pred_check
          %p314 = pneg %p102
        $region18: #{tpu_custom_call.1} parent=11 // pred_check_branch
          %316 = sbr.rel (%p314) target = $region20
        $region19: #{tpu_custom_call.1} parent=11 // pred_region
          _
        $region20: #{tpu_custom_call.1} parent=11 // pred_fallthru
          _
        // Predicated region
        $region21: #{tpu_custom_call.1} parent=11 // pred_check
          %p317 = pneg %p123
        $region22: #{tpu_custom_call.1} parent=11 // pred_check_branch
          %319 = sbr.rel (%p317) target = $region24
        $region23: #{tpu_custom_call.1} parent=11 // pred_region
          _
        $region24: #{tpu_custom_call.1} parent=11 // pred_fallthru
          _
        // Predicated region
        $region25: #{tpu_custom_call.1} parent=11 // pred_check
          %p320 = pneg %p144
        $region26: #{tpu_custom_call.1} parent=11 // pred_check_branch
          %322 = sbr.rel (%p320) target = $region28
        $region27: #{tpu_custom_call.1} parent=11 // pred_region
          _
        $region28: #{tpu_custom_call.1} parent=11 // pred_fallthru
          _
        // Predicated region
        $region29: #{tpu_custom_call.1} parent=11 // pred_check
          %p323 = pneg %p165
        $region30: #{tpu_custom_call.1} parent=11 // pred_check_branch
          %325 = sbr.rel (%p323) target = $region32
        $region31: #{tpu_custom_call.1} parent=11 // pred_region
          _
        $region32: #{tpu_custom_call.1} parent=11 // pred_fallthru
          _
        // Predicated region
        $region33: #{tpu_custom_call.1} parent=11 // pred_check
          %p326 = pneg %p186
        $region34: #{tpu_custom_call.1} parent=11 // pred_check_branch
          %328 = sbr.rel (%p326) target = $region36
        $region35: #{tpu_custom_call.1} parent=11 // pred_region
          _
        $region36: #{tpu_custom_call.1} parent=11 // pred_fallthru
          _
        // Predicated region
        $region37: #{tpu_custom_call.1} parent=11 // pred_check
          %p329 = pneg %p207
        $region38: #{tpu_custom_call.1} parent=11 // pred_check_branch
          %331 = sbr.rel (%p329) target = $region40
        $region39: #{tpu_custom_call.1} parent=11 // pred_region
          _
        $region40: #{tpu_custom_call.1} parent=11 // pred_fallthru
          _
        // Predicated region
        $region41: #{tpu_custom_call.1} parent=11 // pred_check
          %p332 = pneg %p228
        $region42: #{tpu_custom_call.1} parent=11 // pred_check_branch
          %334 = sbr.rel (%p332) target = $region44
        $region43: #{tpu_custom_call.1} parent=11 // pred_region
          _
        $region44: #{tpu_custom_call.1} parent=11 // pred_fallthru
          _
        // Predicated region
        $region45: #{tpu_custom_call.1} parent=11 // pred_check
          %p335 = pneg %p249
        $region46: #{tpu_custom_call.1} parent=11 // pred_check_branch
          %337 = sbr.rel (%p335) target = $region48
        $region47: #{tpu_custom_call.1} parent=11 // pred_region
          _
        $region48: #{tpu_custom_call.1} parent=11 // pred_fallthru
          _
        // Predicated region
        $region49: #{tpu_custom_call.1} parent=11 // pred_check
          %p338 = pneg %p270
        $region50: #{tpu_custom_call.1} parent=11 // pred_check_branch
          %340 = sbr.rel (%p338) target = $region52
        $region51: #{tpu_custom_call.1} parent=11 // pred_region
          _
        $region52: #{tpu_custom_call.1} parent=11 // pred_fallthru
          _
      $region12: #{tpu_custom_call.1} parent=5 // pred_fallthru
        _
      %p341 = scmp.lt.s32.totalorder %s20, 3
      // Predicated region
      $region53: #{tpu_custom_call.1} parent=5 // pred_check
        %p342 = pneg %p341
      $region54: #{tpu_custom_call.1} parent=5 // pred_check_branch
        %344 = sbr.rel (%p342) target = $region56
      $region55: #{tpu_custom_call.1} parent=5 // pred_region
        // Predicated region
        $region57: #{tpu_custom_call.1} parent=55 // pred_check
          %p345 = pneg %p54
        $region58: #{tpu_custom_call.1} parent=55 // pred_check_branch
          %347 = sbr.rel (%p345) target = $region60
        $region59: #{tpu_custom_call.1} parent=55 // pred_region
          %s348 = smul.u32 16, %s28
          %s349 = ssub.s32 38, %s348
          %p350 = scmp.lt.s32.totalorder %s349, 16
          %s351 = scalar_select %p350, %s349, 16
          %s352 = smul.u32 128, %s351
          %p353 = scmp.lt.s32.totalorder %s27, 0
          %s354 = scalar_select %p353, %s27, 0
          %p355 = scmp.lt.s32.totalorder %s348, 37
          %s356 = scalar_select %p355, %s348, 37
          %s357 = smul.addr %s354, 38
          %s358 = sadd.s32 %s356, %s357
          %s359 = smul.addr %s358, 8
          %s360 = scalar_lea.vmem %s1, %s359
          %s361 = smul.u32 16, %s28
          %s362 = ssub.s32 38, %s361
          %p363 = scmp.lt.s32.totalorder %s362, 16
          %s364 = scalar_select %p363, %s362, 16
          %s365 = smul.u32 128, %s364
        $region60: #{tpu_custom_call.1} parent=55 // pred_fallthru
          _
      $region56: #{tpu_custom_call.1} parent=5 // pred_fallthru
        _
      %p366 = scmp.le.s32.totalorder 1, %s20
      %p367 = scmp.lt.s32.totalorder %s20, 4
      %p368 = pnand %p366, %p367
      %p369 = pneg %p368
      // Predicated region
      $region61: #{tpu_custom_call.1} parent=5 // pred_check
        _
      $region62: #{tpu_custom_call.1} parent=5 // pred_check_branch
        %371 = sbr.rel (%p368) target = $region64
      $region63: #{tpu_custom_call.1} parent=5 // pred_region
        %s372 = ssub.s32 %s20, 1
        %s373 = smul.u32 16, %s30
        %s374 = ssub.s32 38, %s373
        %p375 = scmp.lt.s32.totalorder %s374, 16
        %s376 = scalar_select %p375, %s374, 16
        %s377 = smul.u32 128, %s376
        %p378 = scmp.lt.s32.totalorder %s29, 0
        %s379 = scalar_select %p378, %s29, 0
        %p380 = scmp.lt.s32.totalorder %s373, 37
        %s381 = scalar_select %p380, %s373, 37
        %s382 = smul.addr %s379, 38
        %s383 = sadd.s32 %s381, %s382
        %s384 = smul.addr %s383, 8
        %s385 = scalar_lea.vmem %s1, %s384
        %p386 = pneg %p60
        %p387 = pneg %p57
        %p388 = pneg %p81
        %p389 = pneg %p78
        %p390 = pneg %p102
        %p391 = pneg %p99
        %p392 = pneg %p123
        %p393 = pneg %p120
        %p394 = pneg %p144
        %p395 = pneg %p141
        %p396 = pneg %p165
        %p397 = pneg %p162
        %p398 = pneg %p186
        %p399 = pneg %p183
        %p400 = pneg %p207
        %p401 = pneg %p204
        %p402 = pneg %p228
        %p403 = pneg %p225
        %p404 = pneg %p249
        %p405 = pneg %p246
        %p406 = pneg %p270
        %p407 = pneg %p267
        %p408 = pneg %p296
        %p409 = pneg %p293
        %s410 = smul.u32 16, %s30
        %s411 = ssub.s32 38, %s410
        %p412 = scmp.lt.s32.totalorder %s411, 16
        %s413 = scalar_select %p412, %s411, 16
        %s414 = smul.u32 128, %s413
        %p415 = scmp.lt.s32.totalorder %s29, 0
        %s416 = scalar_select %p415, %s29, 0
        %p417 = scmp.lt.s32.totalorder %s410, 37
        %s418 = scalar_select %p417, %s410, 37
        %s419 = smul.addr %s416, 38
        %s420 = sadd.s32 %s418, %s419
        %s421 = smul.addr %s420, 8
        %s422 = scalar_lea.vmem %s1, %s421
        %s423 = smul.u32 16, %s30
        %s424 = ssub.s32 38, %s423
        %p425 = scmp.lt.s32.totalorder %s424, 16
        %s426 = scalar_select %p425, %s424, 16
        %s427 = smul.u32 128, %s426
        %s428 = sld [smem:[#allocation6]]
        %p429 = scmp.eq.s32.totalorder %s30, 0
        // Predicated region
        $region65: #{tpu_custom_call.1} parent=63 // pred_check
          %p430 = pneg %p429
        $region66: #{tpu_custom_call.1} parent=63 // pred_check_branch
          %432 = sbr.rel (%p430) target = $region68
        $region67: #{tpu_custom_call.1} parent=63 // pred_region
          %vm433 = vcmask 253952
          %434 = vst.msk [vmem:[#allocation2] sm:$0x1] %vm433, -inf
          %435 = vst.msk [vmem:[#allocation3] sm:$0x1] %vm433, 0.0
          %436 = vst.msk [vmem:[#allocation4] sm:$0x1] %vm433, 0.0
        $region68: #{tpu_custom_call.1} parent=63 // pred_fallthru
          _
        %v437 = vld [vmem:[%s422] sm:$0xff]
        %v438 = vld [vmem:[%s422 + $0x8] sm:$0xff]
        %v439 = vld [vmem:[%s422 + $0x10] sm:$0xff]
        %v440 = vld [vmem:[%s422 + $0x18] sm:$0xff]
        %v441 = vld [vmem:[%s422 + $0x20] sm:$0xff]
        %v442 = vld [vmem:[%s422 + $0x28] sm:$0xff]
        %v443 = vld [vmem:[%s422 + $0x30] sm:$0xff]
        %v444 = vld [vmem:[%s422 + $0x38] sm:$0xff]
        %v445 = vld [vmem:[%s422 + $0x40] sm:$0xff]
        %v446 = vld [vmem:[%s422 + $0x48] sm:$0xff]
        %v447 = vld [vmem:[%s422 + $0x50] sm:$0xff]
        %v448 = vld [vmem:[%s422 + $0x58] sm:$0xff]
        %v449 = vld [vmem:[%s422 + $0x60] sm:$0xff]
        %v450 = vld [vmem:[%s422 + $0x68] sm:$0xff]
        %v451 = vld [vmem:[%s422 + $0x70] sm:$0xff]
        %v452 = vld [vmem:[%s422 + $0x78] sm:$0xff]
        %v453 = vld [vmem:[%s2] sm:$0xff]
        %v454 = vld [vmem:[%s2 + $0x8] sm:$0xff]
        %v455 = vld [vmem:[%s2 + $0x10] sm:$0xff]
        %v456 = vld [vmem:[%s2 + $0x18] sm:$0xff]
        %v457 = vld [vmem:[%s2 + $0x20] sm:$0xff]
        %v458 = vld [vmem:[%s2 + $0x28] sm:$0xff]
        %v459 = vld [vmem:[%s2 + $0x30] sm:$0xff]
        %v460 = vld [vmem:[%s2 + $0x38] sm:$0xff]
        %v461 = vld [vmem:[%s3] sm:$0x1]
        %v463 = vlaneseq
        %v464 = vshrl.u32 %v463, 7
        %v465 = vsub.s32 0, %v464
        %v466 = vrot.slane %v461, %v465
        %vm468 = vcmask 523264
        %v470 = vsel %vm468, %v437, 0
        %v473 = vsel %vm468, %v438, 0
        %v476 = vsel %vm468, %v439, 0
        %v479 = vsel %vm468, %v440, 0
        %v482 = vsel %vm468, %v441, 0
        %v485 = vsel %vm468, %v442, 0
        %v488 = vsel %vm468, %v443, 0
        %v491 = vsel %vm468, %v444, 0
        %v494 = vsel %vm468, %v445, 0
        %v497 = vsel %vm468, %v446, 0
        %v500 = vsel %vm468, %v447, 0
        %v503 = vsel %vm468, %v448, 0
        %v506 = vsel %vm468, %v449, 0
        %v509 = vsel %vm468, %v450, 0
        %v512 = vsel %vm468, %v451, 0
        %v515 = vsel %vm468, %v452, 0
        %517 = vmatprep.subr.mxu0 0.0
        %518 = vmatpush1.msra.mxu0 %v453
        %519 = vmatprep.subr.mxu0 0.0
        %520 = vmatpush1.msra.mxu0 %v454
        %521 = vmatprep.subr.mxu0 0.0
        %522 = vmatpush1.msra.mxu0 %v455
        %523 = vmatprep.subr.mxu0 0.0
        %524 = vmatpush1.msra.mxu0 %v456
        %525 = vmatprep.subr.mxu0 0.0
        %526 = vmatpush1.msra.mxu0 %v457
        %527 = vmatprep.subr.mxu0 0.0
        %528 = vmatpush1.msra.mxu0 %v458
        %529 = vmatprep.subr.mxu0 0.0
        %530 = vmatpush1.msra.mxu0 %v459
        %531 = vmatprep.subr.mxu0 0.0
        %532 = vmatpush1.msra.mxu0 %v460
        %533 = vmatprep.subr.mxu0 0.0
        %534 = vmatpush1.msra.mxu0 0.0
        %535 = vmatprep.subr.mxu0 0.0
        %536 = vmatpush1.msra.mxu0 0.0
        %537 = vmatprep.subr.mxu0 0.0
        %538 = vmatpush1.msra.mxu0 0.0
        %539 = vmatprep.subr.mxu0 0.0
        %540 = vmatpush1.msra.mxu0 0.0
        %541 = vmatprep.subr.mxu0 0.0
        %542 = vmatpush1.msra.mxu0 0.0
        %543 = vmatprep.subr.mxu0 0.0
        %544 = vmatpush1.msra.mxu0 0.0
        %545 = vmatprep.subr.mxu0 0.0
        %546 = vmatpush1.msra.mxu0 0.0
        %547 = vmatprep.subr.mxu0 0.0
        %548 = vmatpush1.msra.mxu0 0.0
        %549 = vmatprep.subr.mxu0 0.0
        %550 = vmatpush1.msra.mxu0 0.0
        %551 = vmatprep.subr.mxu0 0.0
        %552 = vmatpush1.msra.mxu0 0.0
        %553 = vmatprep.subr.mxu0 0.0
        %554 = vmatpush1.msra.mxu0 0.0
        %555 = vmatprep.subr.mxu0 0.0
        %556 = vmatpush1.msra.mxu0 0.0
        %557 = vmatprep.subr.mxu0 0.0
        %558 = vmatpush1.msra.mxu0 0.0
        %559 = vmatprep.subr.mxu0 0.0
        %560 = vmatpush1.msra.mxu0 0.0
        %561 = vmatprep.subr.mxu0 0.0
        %562 = vmatpush1.msra.mxu0 0.0
        %563 = vmatprep.subr.mxu0 0.0
        %564 = vmatpush1.msra.mxu0 0.0
        %565 = vmatprep.subr.mxu0 0.0
        %566 = vmatpush1.msra.mxu0 0.0
        %567 = vmatprep.subr.mxu0 0.0
        %568 = vmatpush1.msra.mxu0 0.0
        %569 = vmatprep.subr.mxu0 0.0
        %570 = vmatpush1.msra.mxu0 0.0
        %571 = vmatprep.subr.mxu0 0.0
        %572 = vmatpush1.msra.mxu0 0.0
        %573 = vmatprep.subr.mxu0 0.0
        %574 = vmatpush1.msra.mxu0 0.0
        %575 = vmatprep.subr.mxu0 0.0
        %576 = vmatpush1.msra.mxu0 0.0
        %577 = vmatprep.subr.mxu0 0.0
        %578 = vmatpush1.msra.mxu0 0.0
        %579 = vmatprep.subr.mxu0 0.0
        %580 = vmatpush1.msra.mxu0 0.0
        %581 = vmatprep.mubr.f32.mxu0 0.0
        %582 = vmatmul.mubr.f32.gmra.mrb[0].mxu0 %v470
        %v583 = vpop.f32.mrb[0].mxu0
        %v584 = vadd.f32 %v466, %v583
        %v585 = vpop.f32.mrb[0].mxu0
        %586 = vmatprep.mubr.f32.mxu0 0.0
        %587 = vmatmul.mubr.f32.gmra.mrb[0].mxu0 %v473
        %v588 = vpop.f32.mrb[0].mxu0
        %v589 = vadd.f32 %v466, %v588
        %v590 = vpop.f32.mrb[0].mxu0
        %591 = vmatprep.mubr.f32.mxu0 0.0
        %592 = vmatmul.mubr.f32.gmra.mrb[0].mxu0 %v476
        %v593 = vpop.f32.mrb[0].mxu0
        %v594 = vadd.f32 %v466, %v593
        %v595 = vpop.f32.mrb[0].mxu0
        %596 = vmatprep.mubr.f32.mxu0 0.0
        %597 = vmatmul.mubr.f32.gmra.mrb[0].mxu0 %v479
        %v598 = vpop.f32.mrb[0].mxu0
        %v599 = vadd.f32 %v466, %v598
        %v600 = vpop.f32.mrb[0].mxu0
        %601 = vmatprep.mubr.f32.mxu0 0.0
        %602 = vmatmul.mubr.f32.gmra.mrb[0].mxu0 %v482
        %v603 = vpop.f32.mrb[0].mxu0
        %v604 = vadd.f32 %v466, %v603
        %v605 = vpop.f32.mrb[0].mxu0
        %606 = vmatprep.mubr.f32.mxu0 0.0
        %607 = vmatmul.mubr.f32.gmra.mrb[0].mxu0 %v485
        %v608 = vpop.f32.mrb[0].mxu0
        %v609 = vadd.f32 %v466, %v608
        %v610 = vpop.f32.mrb[0].mxu0
        %611 = vmatprep.mubr.f32.mxu0 0.0
        %612 = vmatmul.mubr.f32.gmra.mrb[0].mxu0 %v488
        %v613 = vpop.f32.mrb[0].mxu0
        %v614 = vadd.f32 %v466, %v613
        %v615 = vpop.f32.mrb[0].mxu0
        %616 = vmatprep.mubr.f32.mxu0 0.0
        %617 = vmatmul.mubr.f32.gmra.mrb[0].mxu0 %v491
        %v618 = vpop.f32.mrb[0].mxu0
        %v619 = vadd.f32 %v466, %v618
        %v620 = vpop.f32.mrb[0].mxu0
        %621 = vmatprep.mubr.f32.mxu0 0.0
        %622 = vmatmul.mubr.f32.gmra.mrb[0].mxu0 %v494
        %v623 = vpop.f32.mrb[0].mxu0
        %v624 = vadd.f32 %v466, %v623
        %v625 = vpop.f32.mrb[0].mxu0
        %626 = vmatprep.mubr.f32.mxu0 0.0
        %627 = vmatmul.mubr.f32.gmra.mrb[0].mxu0 %v497
        %v628 = vpop.f32.mrb[0].mxu0
        %v629 = vadd.f32 %v466, %v628
        %v630 = vpop.f32.mrb[0].mxu0
        %631 = vmatprep.mubr.f32.mxu0 0.0
        %632 = vmatmul.mubr.f32.gmra.mrb[0].mxu0 %v500
        %v633 = vpop.f32.mrb[0].mxu0
        %v634 = vadd.f32 %v466, %v633
        %v635 = vpop.f32.mrb[0].mxu0
        %636 = vmatprep.mubr.f32.mxu0 0.0
        %637 = vmatmul.mubr.f32.gmra.mrb[0].mxu0 %v503
        %v638 = vpop.f32.mrb[0].mxu0
        %v639 = vadd.f32 %v466, %v638
        %v640 = vpop.f32.mrb[0].mxu0
        %641 = vmatprep.mubr.f32.mxu0 0.0
        %642 = vmatmul.mubr.f32.gmra.mrb[0].mxu0 %v506
        %v643 = vpop.f32.mrb[0].mxu0
        %v644 = vadd.f32 %v466, %v643
        %v645 = vpop.f32.mrb[0].mxu0
        %646 = vmatprep.mubr.f32.mxu0 0.0
        %647 = vmatmul.mubr.f32.gmra.mrb[0].mxu0 %v509
        %v648 = vpop.f32.mrb[0].mxu0
        %v649 = vadd.f32 %v466, %v648
        %v650 = vpop.f32.mrb[0].mxu0
        %651 = vmatprep.mubr.f32.mxu0 0.0
        %652 = vmatmul.mubr.f32.gmra.mrb[0].mxu0 %v512
        %v653 = vpop.f32.mrb[0].mxu0
        %v654 = vadd.f32 %v466, %v653
        %v655 = vpop.f32.mrb[0].mxu0
        %656 = vmatprep.mubr.f32.mxu0 0.0
        %657 = vmatmul.mubr.f32.gmra.mrb[0].mxu0 %v515
        %v658 = vpop.f32.mrb[0].mxu0
        %v659 = vadd.f32 %v466, %v658
        %v660 = vpop.f32.mrb[0].mxu0
        %661 = vdwg.mxu0
        %v662 = vmax.f32 %v584, 0.0
        %v663 = vmax.f32 %v589, 0.0
        %v664 = vmax.f32 %v594, 0.0
        %v665 = vmax.f32 %v599, 0.0
        %v666 = vmax.f32 %v604, 0.0
        %v667 = vmax.f32 %v609, 0.0
        %v668 = vmax.f32 %v614, 0.0
        %v669 = vmax.f32 %v619, 0.0
        %v670 = vmax.f32 %v624, 0.0
        %v671 = vmax.f32 %v629, 0.0
        %v672 = vmax.f32 %v634, 0.0
        %v673 = vmax.f32 %v639, 0.0
        %v674 = vmax.f32 %v644, 0.0
        %v675 = vmax.f32 %v649, 0.0
        %v676 = vmax.f32 %v654, 0.0
        %v677 = vmax.f32 %v659, 0.0
        %v678 = vld [vmem:[%s4] sm:$0xff]
        %v679 = vld [vmem:[%s4 + $0x8] sm:$0xff]
        %v680 = vld [vmem:[%s4 + $0x10] sm:$0xff]
        %v681 = vld [vmem:[%s4 + $0x18] sm:$0xff]
        %v682 = vld [vmem:[%s5] sm:$0x1]
        %v684 = vlaneseq
        %v685 = vshrl.u32 %v684, 7
        %v686 = vsub.s32 0, %v685
        %v687 = vrot.slane %v682, %v686
        %vm689 = vcmask 261120
        %v691 = vsel %vm689, %v662, 0
        %v694 = vsel %vm689, %v663, 0
        %v697 = vsel %vm689, %v664, 0
        %v700 = vsel %vm689, %v665, 0
        %v703 = vsel %vm689, %v666, 0
        %v706 = vsel %vm689, %v667, 0
        %v709 = vsel %vm689, %v668, 0
        %v712 = vsel %vm689, %v669, 0
        %v715 = vsel %vm689, %v670, 0
        %v718 = vsel %vm689, %v671, 0
        %v721 = vsel %vm689, %v672, 0
        %v724 = vsel %vm689, %v673, 0
        %v727 = vsel %vm689, %v674, 0
        %v730 = vsel %vm689, %v675, 0
        %v733 = vsel %vm689, %v676, 0
        %v736 = vsel %vm689, %v677, 0
        %738 = vmatprep.subr.mxu0 0.0
        %739 = vmatpush1.msra.mxu0 %v678
        %740 = vmatprep.subr.mxu0 0.0
        %741 = vmatpush1.msra.mxu0 %v679
        %742 = vmatprep.subr.mxu0 0.0
        %743 = vmatpush1.msra.mxu0 %v680
        %744 = vmatprep.subr.mxu0 0.0
        %745 = vmatpush1.msra.mxu0 %v681
        %746 = vmatprep.subr.mxu0 0.0
        %747 = vmatpush1.msra.mxu0 0.0
        %748 = vmatprep.subr.mxu0 0.0
        %749 = vmatpush1.msra.mxu0 0.0
        %750 = vmatprep.subr.mxu0 0.0
        %751 = vmatpush1.msra.mxu0 0.0
        %752 = vmatprep.subr.mxu0 0.0
        %753 = vmatpush1.msra.mxu0 0.0
        %754 = vmatprep.subr.mxu0 0.0
        %755 = vmatpush1.msra.mxu0 0.0
        %756 = vmatprep.subr.mxu0 0.0
        %757 = vmatpush1.msra.mxu0 0.0
        %758 = vmatprep.subr.mxu0 0.0
        %759 = vmatpush1.msra.mxu0 0.0
        %760 = vmatprep.subr.mxu0 0.0
        %761 = vmatpush1.msra.mxu0 0.0
        %762 = vmatprep.subr.mxu0 0.0
        %763 = vmatpush1.msra.mxu0 0.0
        %764 = vmatprep.subr.mxu0 0.0
        %765 = vmatpush1.msra.mxu0 0.0
        %766 = vmatprep.subr.mxu0 0.0
        %767 = vmatpush1.msra.mxu0 0.0
        %768 = vmatprep.subr.mxu0 0.0
        %769 = vmatpush1.msra.mxu0 0.0
        %770 = vmatprep.subr.mxu0 0.0
        %771 = vmatpush1.msra.mxu0 0.0
        %772 = vmatprep.subr.mxu0 0.0
        %773 = vmatpush1.msra.mxu0 0.0
        %774 = vmatprep.subr.mxu0 0.0
        %775 = vmatpush1.msra.mxu0 0.0
        %776 = vmatprep.subr.mxu0 0.0
        %777 = vmatpush1.msra.mxu0 0.0
        %778 = vmatprep.subr.mxu0 0.0
        %779 = vmatpush1.msra.mxu0 0.0
        %780 = vmatprep.subr.mxu0 0.0
        %781 = vmatpush1.msra.mxu0 0.0
        %782 = vmatprep.subr.mxu0 0.0
        %783 = vmatpush1.msra.mxu0 0.0
        %784 = vmatprep.subr.mxu0 0.0
        %785 = vmatpush1.msra.mxu0 0.0
        %786 = vmatprep.subr.mxu0 0.0
        %787 = vmatpush1.msra.mxu0 0.0
        %788 = vmatprep.subr.mxu0 0.0
        %789 = vmatpush1.msra.mxu0 0.0
        %790 = vmatprep.subr.mxu0 0.0
        %791 = vmatpush1.msra.mxu0 0.0
        %792 = vmatprep.subr.mxu0 0.0
        %793 = vmatpush1.msra.mxu0 0.0
        %794 = vmatprep.subr.mxu0 0.0
        %795 = vmatpush1.msra.mxu0 0.0
        %796 = vmatprep.subr.mxu0 0.0
        %797 = vmatpush1.msra.mxu0 0.0
        %798 = vmatprep.subr.mxu0 0.0
        %799 = vmatpush1.msra.mxu0 0.0
        %800 = vmatprep.subr.mxu0 0.0
        %801 = vmatpush1.msra.mxu0 0.0
        %802 = vmatprep.mubr.f32.mxu0 0.0
        %803 = vmatmul.mubr.f32.gmra.mrb[0].mxu0 %v691
        %v804 = vpop.f32.mrb[0].mxu0
        %v805 = vadd.f32 %v687, %v804
        %v806 = vpop.f32.mrb[0].mxu0
        %807 = vmatprep.mubr.f32.mxu0 0.0
        %808 = vmatmul.mubr.f32.gmra.mrb[0].mxu0 %v694
        %v809 = vpop.f32.mrb[0].mxu0
        %v810 = vadd.f32 %v687, %v809
        %v811 = vpop.f32.mrb[0].mxu0
        %812 = vmatprep.mubr.f32.mxu0 0.0
        %813 = vmatmul.mubr.f32.gmra.mrb[0].mxu0 %v697
        %v814 = vpop.f32.mrb[0].mxu0
        %v815 = vadd.f32 %v687, %v814
        %v816 = vpop.f32.mrb[0].mxu0
        %817 = vmatprep.mubr.f32.mxu0 0.0
        %818 = vmatmul.mubr.f32.gmra.mrb[0].mxu0 %v700
        %v819 = vpop.f32.mrb[0].mxu0
        %v820 = vadd.f32 %v687, %v819
        %v821 = vpop.f32.mrb[0].mxu0
        %822 = vmatprep.mubr.f32.mxu0 0.0
        %823 = vmatmul.mubr.f32.gmra.mrb[0].mxu0 %v703
        %v824 = vpop.f32.mrb[0].mxu0
        %v825 = vadd.f32 %v687, %v824
        %v826 = vpop.f32.mrb[0].mxu0
        %827 = vmatprep.mubr.f32.mxu0 0.0
        %828 = vmatmul.mubr.f32.gmra.mrb[0].mxu0 %v706
        %v829 = vpop.f32.mrb[0].mxu0
        %v830 = vadd.f32 %v687, %v829
        %v831 = vpop.f32.mrb[0].mxu0
        %832 = vmatprep.mubr.f32.mxu0 0.0
        %833 = vmatmul.mubr.f32.gmra.mrb[0].mxu0 %v709
        %v834 = vpop.f32.mrb[0].mxu0
        %v835 = vadd.f32 %v687, %v834
        %v836 = vpop.f32.mrb[0].mxu0
        %837 = vmatprep.mubr.f32.mxu0 0.0
        %838 = vmatmul.mubr.f32.gmra.mrb[0].mxu0 %v712
        %v839 = vpop.f32.mrb[0].mxu0
        %v840 = vadd.f32 %v687, %v839
        %v841 = vpop.f32.mrb[0].mxu0
        %842 = vmatprep.mubr.f32.mxu0 0.0
        %843 = vmatmul.mubr.f32.gmra.mrb[0].mxu0 %v715
        %v844 = vpop.f32.mrb[0].mxu0
        %v845 = vadd.f32 %v687, %v844
        %v846 = vpop.f32.mrb[0].mxu0
        %847 = vmatprep.mubr.f32.mxu0 0.0
        %848 = vmatmul.mubr.f32.gmra.mrb[0].mxu0 %v718
        %v849 = vpop.f32.mrb[0].mxu0
        %v850 = vadd.f32 %v687, %v849
        %v851 = vpop.f32.mrb[0].mxu0
        %852 = vmatprep.mubr.f32.mxu0 0.0
        %853 = vmatmul.mubr.f32.gmra.mrb[0].mxu0 %v721
        %v854 = vpop.f32.mrb[0].mxu0
        %v855 = vadd.f32 %v687, %v854
        %v856 = vpop.f32.mrb[0].mxu0
        %857 = vmatprep.mubr.f32.mxu0 0.0
        %858 = vmatmul.mubr.f32.gmra.mrb[0].mxu0 %v724
        %v859 = vpop.f32.mrb[0].mxu0
        %v860 = vadd.f32 %v687, %v859
        %v861 = vpop.f32.mrb[0].mxu0
        %862 = vmatprep.mubr.f32.mxu0 0.0
        %863 = vmatmul.mubr.f32.gmra.mrb[0].mxu0 %v727
        %v864 = vpop.f32.mrb[0].mxu0
        %v865 = vadd.f32 %v687, %v864
        %v866 = vpop.f32.mrb[0].mxu0
        %867 = vmatprep.mubr.f32.mxu0 0.0
        %868 = vmatmul.mubr.f32.gmra.mrb[0].mxu0 %v730
        %v869 = vpop.f32.mrb[0].mxu0
        %v870 = vadd.f32 %v687, %v869
        %v871 = vpop.f32.mrb[0].mxu0
        %872 = vmatprep.mubr.f32.mxu0 0.0
        %873 = vmatmul.mubr.f32.gmra.mrb[0].mxu0 %v733
        %v874 = vpop.f32.mrb[0].mxu0
        %v875 = vadd.f32 %v687, %v874
        %v876 = vpop.f32.mrb[0].mxu0
        %877 = vmatprep.mubr.f32.mxu0 0.0
        %878 = vmatmul.mubr.f32.gmra.mrb[0].mxu0 %v736
        %v879 = vpop.f32.mrb[0].mxu0
        %v880 = vadd.f32 %v687, %v879
        %v881 = vpop.f32.mrb[0].mxu0
        %882 = vdwg.mxu0
        %s883 = sadd.s32 %s30, 1
        %s884 = smul.u32 %s883, 128
        %p885 = scmp.gt.s32.totalorder %s884, %s428
        %p886 = scmp.le.s32.totalorder %s884, %s428
        // Predicated region
        $region69: #{tpu_custom_call.1} parent=63 // pred_check
          %p887 = pneg %p886
        $region70: #{tpu_custom_call.1} parent=63 // pred_check_branch
          %889 = sbr.rel (%p887) target = $region72
        $region71: #{tpu_custom_call.1} parent=63 // pred_region
          %v890 = vld [vmem:[#allocation2] sm:$0x1]
          %vm891 = vcmask 523520
          %v892 = vsel %vm891, %v805, -inf
          %v893 = vsel %vm891, %v810, -inf
          %v894 = vsel %vm891, %v815, -inf
          %v895 = vsel %vm891, %v820, -inf
          %v896 = vsel %vm891, %v825, -inf
          %v897 = vmax.f32 %v892, %v896
          %v898 = vsel %vm891, %v830, -inf
          %v899 = vmax.f32 %v893, %v898
          %v900 = vsel %vm891, %v835, -inf
          %v901 = vmax.f32 %v894, %v900
          %v902 = vsel %vm891, %v840, -inf
          %v903 = vmax.f32 %v895, %v902
          %v904 = vsel %vm891, %v845, -inf
          %v905 = vmax.f32 %v897, %v904
          %v906 = vsel %vm891, %v850, -inf
          %v907 = vmax.f32 %v899, %v906
          %v908 = vsel %vm891, %v855, -inf
          %v909 = vmax.f32 %v901, %v908
          %v910 = vsel %vm891, %v860, -inf
          %v911 = vmax.f32 %v903, %v910
          %v912 = vsel %vm891, %v865, -inf
          %v913 = vmax.f32 %v905, %v912
          %v914 = vsel %vm891, %v870, -inf
          %v915 = vmax.f32 %v907, %v914
          %v916 = vsel %vm891, %v875, -inf
          %v917 = vmax.f32 %v909, %v916
          %v918 = vsel %vm891, %v880, -inf
          %v919 = vmax.f32 %v911, %v918
          %v920 = vmax.f32 %v913, %v915
          %v921 = vmax.f32 %v917, %v919
          %v922 = vmax.f32 %v920, %v921
          %v923 = vrot.slane %v922, 4
          %v924 = vmax.f32 %v922, %v923
          %v925 = vrot.slane %v924, 2
          %v926 = vmax.f32 %v924, %v925
          %v927 = vrot.slane %v926, 1
          %v928 = vmax.f32 %v926, %v927
          %v931 = vunpack.c.l.s4 1966171168
          %v932 = vunpack.c.0.s8 %v931
          %v933 = vlaneseq
          %v934 = vshrl.u32 %v933, 7
          %v935 = vsub.s32 %v932, %v934
          %v936 = vrot.slane %v928, %v935
          %v938 = vunpack.c.l.s4 1966171168
          %v939 = vunpack.c.0.s8 %v938
          %v940 = vlaneseq
          %v941 = vshrl.u32 %v940, 7
          %v942 = vsub.s32 %v939, %v941
          %v943 = vrot.slane %v936, %v942
          %944 = vrot.lane.b32.xlu0 %v943, 96
          %v945 = vpop.permute.xlu0 %944
          %v947 = vmax.f32 %v890, %v945
          %v948 = vsub.f32 %v890, %v947
          %v949 = vmul.f32 %v948, 1.442695
          %v950 = vpow.pop %v949
          %v952 = vlaneseq
          %v953 = vshrl.u32 %v952, 7
          %v954 = vsub.s32 0, %v953
          %v955 = vrot.slane %v947, %v954
          %956 = vrot.lane.b32.xlu0 %v955, 32
          %v957 = vpop.permute.xlu0 %956
          %v959 = vsub.f32 %v805, %v957
          %v960 = vsub.f32 %v810, %v957
          %v961 = vsub.f32 %v815, %v957
          %v962 = vsub.f32 %v820, %v957
          %v963 = vsub.f32 %v825, %v957
          %v964 = vsub.f32 %v830, %v957
          %v965 = vsub.f32 %v835, %v957
          %v966 = vsub.f32 %v840, %v957
          %v967 = vsub.f32 %v845, %v957
          %v968 = vsub.f32 %v850, %v957
          %v969 = vsub.f32 %v855, %v957
          %v970 = vsub.f32 %v860, %v957
          %v971 = vsub.f32 %v865, %v957
          %v972 = vsub.f32 %v870, %v957
          %v973 = vsub.f32 %v875, %v957
          %v974 = vsub.f32 %v880, %v957
          %v975 = vmul.f32 %v959, 1.442695
          %v976 = vpow.pop %v975
          %v977 = vmul.f32 %v960, 1.442695
          %v978 = vpow.pop %v977
          %v979 = vmul.f32 %v961, 1.442695
          %v980 = vpow.pop %v979
          %v981 = vmul.f32 %v962, 1.442695
          %v982 = vpow.pop %v981
          %v983 = vmul.f32 %v963, 1.442695
          %v984 = vpow.pop %v983
          %v985 = vmul.f32 %v964, 1.442695
          %v986 = vpow.pop %v985
          %v987 = vmul.f32 %v965, 1.442695
          %v988 = vpow.pop %v987
          %v989 = vmul.f32 %v966, 1.442695
          %v990 = vpow.pop %v989
          %v991 = vmul.f32 %v967, 1.442695
          %v992 = vpow.pop %v991
          %v993 = vmul.f32 %v968, 1.442695
          %v994 = vpow.pop %v993
          %v995 = vmul.f32 %v969, 1.442695
          %v996 = vpow.pop %v995
          %v997 = vmul.f32 %v970, 1.442695
          %v998 = vpow.pop %v997
          %v999 = vmul.f32 %v971, 1.442695
          %v1000 = vpow.pop %v999
          %v1001 = vmul.f32 %v972, 1.442695
          %v1002 = vpow.pop %v1001
          %v1003 = vmul.f32 %v973, 1.442695
          %v1004 = vpow.pop %v1003
          %v1005 = vmul.f32 %v974, 1.442695
          %v1006 = vpow.pop %v1005
          %v1007 = vld [vmem:[#allocation3] sm:$0x1]
          %v1008 = vmul.f32 %v950, %v1007
          %v1009 = vsel %vm891, %v976, 0.0
          %v1010 = vsel %vm891, %v978, 0.0
          %v1011 = vadd.f32 %v1009, %v1010
          %v1012 = vsel %vm891, %v980, 0.0
          %v1013 = vadd.f32 %v1011, %v1012
          %v1014 = vsel %vm891, %v982, 0.0
          %v1015 = vadd.f32 %v1013, %v1014
          %v1016 = vsel %vm891, %v984, 0.0
          %v1017 = vadd.f32 %v1015, %v1016
          %v1018 = vsel %vm891, %v986, 0.0
          %v1019 = vadd.f32 %v1017, %v1018
          %v1020 = vsel %vm891, %v988, 0.0
          %v1021 = vadd.f32 %v1019, %v1020
          %v1022 = vsel %vm891, %v990, 0.0
          %v1023 = vadd.f32 %v1021, %v1022
          %v1024 = vsel %vm891, %v992, 0.0
          %v1025 = vadd.f32 %v1023, %v1024
          %v1026 = vsel %vm891, %v994, 0.0
          %v1027 = vadd.f32 %v1025, %v1026
          %v1028 = vsel %vm891, %v996, 0.0
          %v1029 = vadd.f32 %v1027, %v1028
          %v1030 = vsel %vm891, %v998, 0.0
          %v1031 = vadd.f32 %v1029, %v1030
          %v1032 = vsel %vm891, %v1000, 0.0
          %v1033 = vadd.f32 %v1031, %v1032
          %v1034 = vsel %vm891, %v1002, 0.0
          %v1035 = vadd.f32 %v1033, %v1034
          %v1036 = vsel %vm891, %v1004, 0.0
          %v1037 = vadd.f32 %v1035, %v1036
          %v1038 = vsel %vm891, %v1006, 0.0
          %v1039 = vadd.f32 %v1037, %v1038
          %v1040 = vrot.slane %v1039, 4
          %v1041 = vadd.f32 %v1039, %v1040
          %v1042 = vrot.slane %v1041, 2
          %v1043 = vadd.f32 %v1041, %v1042
          %v1044 = vrot.slane %v1043, 1
          %v1045 = vadd.f32 %v1043, %v1044
          %v1048 = vunpack.c.l.s4 1966171168
          %v1049 = vunpack.c.0.s8 %v1048
          %v1050 = vlaneseq
          %v1051 = vshrl.u32 %v1050, 7
          %v1052 = vsub.s32 %v1049, %v1051
          %v1053 = vrot.slane %v1045, %v1052
          %v1055 = vunpack.c.l.s4 1966171168
          %v1056 = vunpack.c.0.s8 %v1055
          %v1057 = vlaneseq
          %v1058 = vshrl.u32 %v1057, 7
          %v1059 = vsub.s32 %v1056, %v1058
          %v1060 = vrot.slane %v1053, %v1059
          %1061 = vrot.lane.b32.xlu0 %v1060, 96
          %v1062 = vpop.permute.xlu0 %1061
          %v1064 = vadd.f32 %v1008, %v1062
          %vm1065 = vcmask 253952
          %1066 = vst.msk [vmem:[#allocation3] sm:$0x1] %vm1065, %v1064
          %v1067 = vld [vmem:[#allocation4] sm:$0x1]
          %v1068 = vmul.f32 %v950, %v1067
          %1085 = vrot.lane.b32.xlu0 %v805, 32
          %v1086 = vpop.permute.xlu0 %1085
          %1087 = vrot.lane.b32.xlu0 %v810, 32
          %v1088 = vpop.permute.xlu0 %1087
          %1089 = vrot.lane.b32.xlu0 %v815, 32
          %v1090 = vpop.permute.xlu0 %1089
          %1091 = vrot.lane.b32.xlu0 %v820, 32
          %v1092 = vpop.permute.xlu0 %1091
          %1093 = vrot.lane.b32.xlu0 %v825, 32
          %v1094 = vpop.permute.xlu0 %1093
          %1095 = vrot.lane.b32.xlu0 %v830, 32
          %v1096 = vpop.permute.xlu0 %1095
          %1097 = vrot.lane.b32.xlu0 %v835, 32
          %v1098 = vpop.permute.xlu0 %1097
          %1099 = vrot.lane.b32.xlu0 %v840, 32
          %v1100 = vpop.permute.xlu0 %1099
          %1101 = vrot.lane.b32.xlu0 %v845, 32
          %v1102 = vpop.permute.xlu0 %1101
          %1103 = vrot.lane.b32.xlu0 %v850, 32
          %v1104 = vpop.permute.xlu0 %1103
          %1105 = vrot.lane.b32.xlu0 %v855, 32
          %v1106 = vpop.permute.xlu0 %1105
          %1107 = vrot.lane.b32.xlu0 %v860, 32
          %v1108 = vpop.permute.xlu0 %1107
          %1109 = vrot.lane.b32.xlu0 %v865, 32
          %v1110 = vpop.permute.xlu0 %1109
          %1111 = vrot.lane.b32.xlu0 %v870, 32
          %v1112 = vpop.permute.xlu0 %1111
          %1113 = vrot.lane.b32.xlu0 %v875, 32
          %v1114 = vpop.permute.xlu0 %1113
          %1115 = vrot.lane.b32.xlu0 %v880, 32
          %v1116 = vpop.permute.xlu0 %1115
          %v1133 = vmul.f32 %v976, %v1086
          %v1134 = vmul.f32 %v978, %v1088
          %v1135 = vmul.f32 %v980, %v1090
          %v1136 = vmul.f32 %v982, %v1092
          %v1137 = vmul.f32 %v984, %v1094
          %v1138 = vmul.f32 %v986, %v1096
          %v1139 = vmul.f32 %v988, %v1098
          %v1140 = vmul.f32 %v990, %v1100
          %v1141 = vmul.f32 %v992, %v1102
          %v1142 = vmul.f32 %v994, %v1104
          %v1143 = vmul.f32 %v996, %v1106
          %v1144 = vmul.f32 %v998, %v1108
          %v1145 = vmul.f32 %v1000, %v1110
          %v1146 = vmul.f32 %v1002, %v1112
          %v1147 = vmul.f32 %v1004, %v1114
          %v1148 = vmul.f32 %v1006, %v1116
          %v1149 = vsel %vm891, %v1133, 0.0
          %v1150 = vsel %vm891, %v1134, 0.0
          %v1151 = vadd.f32 %v1149, %v1150
          %v1152 = vsel %vm891, %v1135, 0.0
          %v1153 = vadd.f32 %v1151, %v1152
          %v1154 = vsel %vm891, %v1136, 0.0
          %v1155 = vadd.f32 %v1153, %v1154
          %v1156 = vsel %vm891, %v1137, 0.0
          %v1157 = vadd.f32 %v1155, %v1156
          %v1158 = vsel %vm891, %v1138, 0.0
          %v1159 = vadd.f32 %v1157, %v1158
          %v1160 = vsel %vm891, %v1139, 0.0
          %v1161 = vadd.f32 %v1159, %v1160
          %v1162 = vsel %vm891, %v1140, 0.0
          %v1163 = vadd.f32 %v1161, %v1162
          %v1164 = vsel %vm891, %v1141, 0.0
          %v1165 = vadd.f32 %v1163, %v1164
          %v1166 = vsel %vm891, %v1142, 0.0
          %v1167 = vadd.f32 %v1165, %v1166
          %v1168 = vsel %vm891, %v1143, 0.0
          %v1169 = vadd.f32 %v1167, %v1168
          %v1170 = vsel %vm891, %v1144, 0.0
          %v1171 = vadd.f32 %v1169, %v1170
          %v1172 = vsel %vm891, %v1145, 0.0
          %v1173 = vadd.f32 %v1171, %v1172
          %v1174 = vsel %vm891, %v1146, 0.0
          %v1175 = vadd.f32 %v1173, %v1174
          %v1176 = vsel %vm891, %v1147, 0.0
          %v1177 = vadd.f32 %v1175, %v1176
          %v1178 = vsel %vm891, %v1148, 0.0
          %v1179 = vadd.f32 %v1177, %v1178
          %v1180 = vrot.slane %v1179, 4
          %v1181 = vadd.f32 %v1179, %v1180
          %v1182 = vrot.slane %v1181, 2
          %v1183 = vadd.f32 %v1181, %v1182
          %v1184 = vrot.slane %v1183, 1
          %v1185 = vadd.f32 %v1183, %v1184
          %v1188 = vunpack.c.l.s4 1966171168
          %v1189 = vunpack.c.0.s8 %v1188
          %v1190 = vlaneseq
          %v1191 = vshrl.u32 %v1190, 7
          %v1192 = vsub.s32 %v1189, %v1191
          %v1193 = vrot.slane %v1185, %v1192
          %v1195 = vunpack.c.l.s4 1966171168
          %v1196 = vunpack.c.0.s8 %v1195
          %v1197 = vlaneseq
          %v1198 = vshrl.u32 %v1197, 7
          %v1199 = vsub.s32 %v1196, %v1198
          %v1200 = vrot.slane %v1193, %v1199
          %1201 = vrot.lane.b32.xlu0 %v1200, 96
          %v1202 = vpop.permute.xlu0 %1201
          %v1204 = vadd.f32 %v1068, %v1202
          %1205 = vst.msk [vmem:[#allocation4] sm:$0x1] %vm1065, %v1204
          %1206 = vst.msk [vmem:[#allocation2] sm:$0x1] %vm1065, %v947
        $region72: #{tpu_custom_call.1} parent=63 // pred_fallthru
          _
        // Predicated region
        $region73: #{tpu_custom_call.1} parent=63 // pred_check
          %p1207 = pneg %p885
        $region74: #{tpu_custom_call.1} parent=63 // pred_check_branch
          %1209 = sbr.rel (%p1207) target = $region76
        $region75: #{tpu_custom_call.1} parent=63 // pred_region
          %v1210 = vlaneseq
          %v1211 = vshrl.u32 %v1210, 7
          %v1212 = vadd.s32 %v1211, 8
          %v1213 = vadd.s32 %v1211, 16
          %v1214 = vadd.s32 %v1211, 24
          %v1215 = vadd.s32 %v1211, 32
          %v1216 = vadd.s32 %v1211, 40
          %v1217 = vadd.s32 %v1211, 48
          %v1218 = vadd.s32 %v1211, 56
          %v1219 = vadd.s32 %v1211, 64
          %v1220 = vadd.s32 %v1211, 72
          %v1221 = vadd.s32 %v1211, 80
          %v1222 = vadd.s32 %v1211, 88
          %v1223 = vadd.s32 %v1211, 96
          %v1224 = vadd.s32 %v1211, 104
          %v1225 = vadd.s32 %v1211, 112
          %v1226 = vadd.s32 %v1211, 120
          %s1227 = smul.u32 %s30, 128
          %v1228 = vstv %s1227
          %v1229 = vadd.s32 %v1211, %v1228
          %v1230 = vadd.s32 %v1212, %v1228
          %v1231 = vadd.s32 %v1213, %v1228
          %v1232 = vadd.s32 %v1214, %v1228
          %v1233 = vadd.s32 %v1215, %v1228
          %v1234 = vadd.s32 %v1216, %v1228
          %v1235 = vadd.s32 %v1217, %v1228
          %v1236 = vadd.s32 %v1218, %v1228
          %v1237 = vadd.s32 %v1219, %v1228
          %v1238 = vadd.s32 %v1220, %v1228
          %v1239 = vadd.s32 %v1221, %v1228
          %v1240 = vadd.s32 %v1222, %v1228
          %v1241 = vadd.s32 %v1223, %v1228
          %v1242 = vadd.s32 %v1224, %v1228
          %v1243 = vadd.s32 %v1225, %v1228
          %v1244 = vadd.s32 %v1226, %v1228
          %v1245 = vstv %s428
          %vm1246 = vcmp.lt.s32.totalorder %v1229, %v1245
          %vm1247 = vcmp.lt.s32.totalorder %v1230, %v1245
          %vm1248 = vcmp.lt.s32.totalorder %v1231, %v1245
          %vm1249 = vcmp.lt.s32.totalorder %v1232, %v1245
          %vm1250 = vcmp.lt.s32.totalorder %v1233, %v1245
          %vm1251 = vcmp.lt.s32.totalorder %v1234, %v1245
          %vm1252 = vcmp.lt.s32.totalorder %v1235, %v1245
          %vm1253 = vcmp.lt.s32.totalorder %v1236, %v1245
          %vm1254 = vcmp.lt.s32.totalorder %v1237, %v1245
          %vm1255 = vcmp.lt.s32.totalorder %v1238, %v1245
          %vm1256 = vcmp.lt.s32.totalorder %v1239, %v1245
          %vm1257 = vcmp.lt.s32.totalorder %v1240, %v1245
          %vm1258 = vcmp.lt.s32.totalorder %v1241, %v1245
          %vm1259 = vcmp.lt.s32.totalorder %v1242, %v1245
          %vm1260 = vcmp.lt.s32.totalorder %v1243, %v1245
          %vm1261 = vcmp.lt.s32.totalorder %v1244, %v1245
          %v1262 = vsel %vm1246, 1, 0
          %v1263 = vsel %vm1247, 1, 0
          %v1264 = vsel %vm1248, 1, 0
          %v1265 = vsel %vm1249, 1, 0
          %v1266 = vsel %vm1250, 1, 0
          %v1267 = vsel %vm1251, 1, 0
          %v1268 = vsel %vm1252, 1, 0
          %v1269 = vsel %vm1253, 1, 0
          %v1270 = vsel %vm1254, 1, 0
          %v1271 = vsel %vm1255, 1, 0
          %v1272 = vsel %vm1256, 1, 0
          %v1273 = vsel %vm1257, 1, 0
          %v1274 = vsel %vm1258, 1, 0
          %v1275 = vsel %vm1259, 1, 0
          %v1276 = vsel %vm1260, 1, 0
          %v1277 = vsel %vm1261, 1, 0
          %vm1278 = vcmp.eq.s32.totalorder %v1262, 1
          %vm1279 = vcmp.eq.s32.totalorder %v1263, 1
          %vm1280 = vcmp.eq.s32.totalorder %v1264, 1
          %vm1281 = vcmp.eq.s32.totalorder %v1265, 1
          %vm1282 = vcmp.eq.s32.totalorder %v1266, 1
          %vm1283 = vcmp.eq.s32.totalorder %v1267, 1
          %vm1284 = vcmp.eq.s32.totalorder %v1268, 1
          %vm1285 = vcmp.eq.s32.totalorder %v1269, 1
          %vm1286 = vcmp.eq.s32.totalorder %v1270, 1
          %vm1287 = vcmp.eq.s32.totalorder %v1271, 1
          %vm1288 = vcmp.eq.s32.totalorder %v1272, 1
          %vm1289 = vcmp.eq.s32.totalorder %v1273, 1
          %vm1290 = vcmp.eq.s32.totalorder %v1274, 1
          %vm1291 = vcmp.eq.s32.totalorder %v1275, 1
          %vm1292 = vcmp.eq.s32.totalorder %v1276, 1
          %vm1293 = vcmp.eq.s32.totalorder %v1277, 1
          %v1294 = vsel %vm1278, %v805, -1e+30
          %v1295 = vsel %vm1279, %v810, -1e+30
          %v1296 = vsel %vm1280, %v815, -1e+30
          %v1297 = vsel %vm1281, %v820, -1e+30
          %v1298 = vsel %vm1282, %v825, -1e+30
          %v1299 = vsel %vm1283, %v830, -1e+30
          %v1300 = vsel %vm1284, %v835, -1e+30
          %v1301 = vsel %vm1285, %v840, -1e+30
          %v1302 = vsel %vm1286, %v845, -1e+30
          %v1303 = vsel %vm1287, %v850, -1e+30
          %v1304 = vsel %vm1288, %v855, -1e+30
          %v1305 = vsel %vm1289, %v860, -1e+30
          %v1306 = vsel %vm1290, %v865, -1e+30
          %v1307 = vsel %vm1291, %v870, -1e+30
          %v1308 = vsel %vm1292, %v875, -1e+30
          %v1309 = vsel %vm1293, %v880, -1e+30
          %v1310 = vsel %vm1278, %v805, 0.0
          %v1311 = vsel %vm1279, %v810, 0.0
          %v1312 = vsel %vm1280, %v815, 0.0
          %v1313 = vsel %vm1281, %v820, 0.0
          %v1314 = vsel %vm1282, %v825, 0.0
          %v1315 = vsel %vm1283, %v830, 0.0
          %v1316 = vsel %vm1284, %v835, 0.0
          %v1317 = vsel %vm1285, %v840, 0.0
          %v1318 = vsel %vm1286, %v845, 0.0
          %v1319 = vsel %vm1287, %v850, 0.0
          %v1320 = vsel %vm1288, %v855, 0.0
          %v1321 = vsel %vm1289, %v860, 0.0
          %v1322 = vsel %vm1290, %v865, 0.0
          %v1323 = vsel %vm1291, %v870, 0.0
          %v1324 = vsel %vm1292, %v875, 0.0
          %v1325 = vsel %vm1293, %v880, 0.0
          %v1326 = vld [vmem:[#allocation2] sm:$0x1]
          %vm1327 = vcmask 523520
          %v1328 = vsel %vm1327, %v1294, -inf
          %v1329 = vsel %vm1327, %v1295, -inf
          %v1330 = vsel %vm1327, %v1296, -inf
          %v1331 = vsel %vm1327, %v1297, -inf
          %v1332 = vsel %vm1327, %v1298, -inf
          %v1333 = vmax.f32 %v1328, %v1332
          %v1334 = vsel %vm1327, %v1299, -inf
          %v1335 = vmax.f32 %v1329, %v1334
          %v1336 = vsel %vm1327, %v1300, -inf
          %v1337 = vmax.f32 %v1330, %v1336
          %v1338 = vsel %vm1327, %v1301, -inf
          %v1339 = vmax.f32 %v1331, %v1338
          %v1340 = vsel %vm1327, %v1302, -inf
          %v1341 = vmax.f32 %v1333, %v1340
          %v1342 = vsel %vm1327, %v1303, -inf
          %v1343 = vmax.f32 %v1335, %v1342
          %v1344 = vsel %vm1327, %v1304, -inf
          %v1345 = vmax.f32 %v1337, %v1344
          %v1346 = vsel %vm1327, %v1305, -inf
          %v1347 = vmax.f32 %v1339, %v1346
          %v1348 = vsel %vm1327, %v1306, -inf
          %v1349 = vmax.f32 %v1341, %v1348
          %v1350 = vsel %vm1327, %v1307, -inf
          %v1351 = vmax.f32 %v1343, %v1350
          %v1352 = vsel %vm1327, %v1308, -inf
          %v1353 = vmax.f32 %v1345, %v1352
          %v1354 = vsel %vm1327, %v1309, -inf
          %v1355 = vmax.f32 %v1347, %v1354
          %v1356 = vmax.f32 %v1349, %v1351
          %v1357 = vmax.f32 %v1353, %v1355
          %v1358 = vmax.f32 %v1356, %v1357
          %v1359 = vrot.slane %v1358, 4
          %v1360 = vmax.f32 %v1358, %v1359
          %v1361 = vrot.slane %v1360, 2
          %v1362 = vmax.f32 %v1360, %v1361
          %v1363 = vrot.slane %v1362, 1
          %v1364 = vmax.f32 %v1362, %v1363
          %v1367 = vunpack.c.l.s4 1966171168
          %v1368 = vunpack.c.0.s8 %v1367
          %v1369 = vlaneseq
          %v1370 = vshrl.u32 %v1369, 7
          %v1371 = vsub.s32 %v1368, %v1370
          %v1372 = vrot.slane %v1364, %v1371
          %v1374 = vunpack.c.l.s4 1966171168
          %v1375 = vunpack.c.0.s8 %v1374
          %v1376 = vlaneseq
          %v1377 = vshrl.u32 %v1376, 7
          %v1378 = vsub.s32 %v1375, %v1377
          %v1379 = vrot.slane %v1372, %v1378
          %1380 = vrot.lane.b32.xlu0 %v1379, 96
          %v1381 = vpop.permute.xlu0 %1380
          %v1383 = vmax.f32 %v1326, %v1381
          %v1384 = vsub.f32 %v1326, %v1383
          %v1385 = vmul.f32 %v1384, 1.442695
          %v1386 = vpow.pop %v1385
          %v1388 = vlaneseq
          %v1389 = vshrl.u32 %v1388, 7
          %v1390 = vsub.s32 0, %v1389
          %v1391 = vrot.slane %v1383, %v1390
          %1392 = vrot.lane.b32.xlu0 %v1391, 32
          %v1393 = vpop.permute.xlu0 %1392
          %v1395 = vsub.f32 %v1294, %v1393
          %v1396 = vsub.f32 %v1295, %v1393
          %v1397 = vsub.f32 %v1296, %v1393
          %v1398 = vsub.f32 %v1297, %v1393
          %v1399 = vsub.f32 %v1298, %v1393
          %v1400 = vsub.f32 %v1299, %v1393
          %v1401 = vsub.f32 %v1300, %v1393
          %v1402 = vsub.f32 %v1301, %v1393
          %v1403 = vsub.f32 %v1302, %v1393
          %v1404 = vsub.f32 %v1303, %v1393
          %v1405 = vsub.f32 %v1304, %v1393
          %v1406 = vsub.f32 %v1305, %v1393
          %v1407 = vsub.f32 %v1306, %v1393
          %v1408 = vsub.f32 %v1307, %v1393
          %v1409 = vsub.f32 %v1308, %v1393
          %v1410 = vsub.f32 %v1309, %v1393
          %v1411 = vmul.f32 %v1395, 1.442695
          %v1412 = vpow.pop %v1411
          %v1413 = vmul.f32 %v1396, 1.442695
          %v1414 = vpow.pop %v1413
          %v1415 = vmul.f32 %v1397, 1.442695
          %v1416 = vpow.pop %v1415
          %v1417 = vmul.f32 %v1398, 1.442695
          %v1418 = vpow.pop %v1417
          %v1419 = vmul.f32 %v1399, 1.442695
          %v1420 = vpow.pop %v1419
          %v1421 = vmul.f32 %v1400, 1.442695
          %v1422 = vpow.pop %v1421
          %v1423 = vmul.f32 %v1401, 1.442695
          %v1424 = vpow.pop %v1423
          %v1425 = vmul.f32 %v1402, 1.442695
          %v1426 = vpow.pop %v1425
          %v1427 = vmul.f32 %v1403, 1.442695
          %v1428 = vpow.pop %v1427
          %v1429 = vmul.f32 %v1404, 1.442695
          %v1430 = vpow.pop %v1429
          %v1431 = vmul.f32 %v1405, 1.442695
          %v1432 = vpow.pop %v1431
          %v1433 = vmul.f32 %v1406, 1.442695
          %v1434 = vpow.pop %v1433
          %v1435 = vmul.f32 %v1407, 1.442695
          %v1436 = vpow.pop %v1435
          %v1437 = vmul.f32 %v1408, 1.442695
          %v1438 = vpow.pop %v1437
          %v1439 = vmul.f32 %v1409, 1.442695
          %v1440 = vpow.pop %v1439
          %v1441 = vmul.f32 %v1410, 1.442695
          %v1442 = vpow.pop %v1441
          %v1443 = vld [vmem:[#allocation3] sm:$0x1]
          %v1444 = vmul.f32 %v1386, %v1443
          %v1445 = vsel %vm1327, %v1412, 0.0
          %v1446 = vsel %vm1327, %v1414, 0.0
          %v1447 = vadd.f32 %v1445, %v1446
          %v1448 = vsel %vm1327, %v1416, 0.0
          %v1449 = vadd.f32 %v1447, %v1448
          %v1450 = vsel %vm1327, %v1418, 0.0
          %v1451 = vadd.f32 %v1449, %v1450
          %v1452 = vsel %vm1327, %v1420, 0.0
          %v1453 = vadd.f32 %v1451, %v1452
          %v1454 = vsel %vm1327, %v1422, 0.0
          %v1455 = vadd.f32 %v1453, %v1454
          %v1456 = vsel %vm1327, %v1424, 0.0
          %v1457 = vadd.f32 %v1455, %v1456
          %v1458 = vsel %vm1327, %v1426, 0.0
          %v1459 = vadd.f32 %v1457, %v1458
          %v1460 = vsel %vm1327, %v1428, 0.0
          %v1461 = vadd.f32 %v1459, %v1460
          %v1462 = vsel %vm1327, %v1430, 0.0
          %v1463 = vadd.f32 %v1461, %v1462
          %v1464 = vsel %vm1327, %v1432, 0.0
          %v1465 = vadd.f32 %v1463, %v1464
          %v1466 = vsel %vm1327, %v1434, 0.0
          %v1467 = vadd.f32 %v1465, %v1466
          %v1468 = vsel %vm1327, %v1436, 0.0
          %v1469 = vadd.f32 %v1467, %v1468
          %v1470 = vsel %vm1327, %v1438, 0.0
          %v1471 = vadd.f32 %v1469, %v1470
          %v1472 = vsel %vm1327, %v1440, 0.0
          %v1473 = vadd.f32 %v1471, %v1472
          %v1474 = vsel %vm1327, %v1442, 0.0
          %v1475 = vadd.f32 %v1473, %v1474
          %v1476 = vrot.slane %v1475, 4
          %v1477 = vadd.f32 %v1475, %v1476
          %v1478 = vrot.slane %v1477, 2
          %v1479 = vadd.f32 %v1477, %v1478
          %v1480 = vrot.slane %v1479, 1
          %v1481 = vadd.f32 %v1479, %v1480
          %v1484 = vunpack.c.l.s4 1966171168
          %v1485 = vunpack.c.0.s8 %v1484
          %v1486 = vlaneseq
          %v1487 = vshrl.u32 %v1486, 7
          %v1488 = vsub.s32 %v1485, %v1487
          %v1489 = vrot.slane %v1481, %v1488
          %v1491 = vunpack.c.l.s4 1966171168
          %v1492 = vunpack.c.0.s8 %v1491
          %v1493 = vlaneseq
          %v1494 = vshrl.u32 %v1493, 7
          %v1495 = vsub.s32 %v1492, %v1494
          %v1496 = vrot.slane %v1489, %v1495
          %1497 = vrot.lane.b32.xlu0 %v1496, 96
          %v1498 = vpop.permute.xlu0 %1497
          %v1500 = vadd.f32 %v1444, %v1498
          %vm1501 = vcmask 253952
          %1502 = vst.msk [vmem:[#allocation3] sm:$0x1] %vm1501, %v1500
          %v1503 = vld [vmem:[#allocation4] sm:$0x1]
          %v1504 = vmul.f32 %v1386, %v1503
          %1521 = vrot.lane.b32.xlu0 %v1310, 32
          %v1522 = vpop.permute.xlu0 %1521
          %1523 = vrot.lane.b32.xlu0 %v1311, 32
          %v1524 = vpop.permute.xlu0 %1523
          %1525 = vrot.lane.b32.xlu0 %v1312, 32
          %v1526 = vpop.permute.xlu0 %1525
          %1527 = vrot.lane.b32.xlu0 %v1313, 32
          %v1528 = vpop.permute.xlu0 %1527
          %1529 = vrot.lane.b32.xlu0 %v1314, 32
          %v1530 = vpop.permute.xlu0 %1529
          %1531 = vrot.lane.b32.xlu0 %v1315, 32
          %v1532 = vpop.permute.xlu0 %1531
          %1533 = vrot.lane.b32.xlu0 %v1316, 32
          %v1534 = vpop.permute.xlu0 %1533
          %1535 = vrot.lane.b32.xlu0 %v1317, 32
          %v1536 = vpop.permute.xlu0 %1535
          %1537 = vrot.lane.b32.xlu0 %v1318, 32
          %v1538 = vpop.permute.xlu0 %1537
          %1539 = vrot.lane.b32.xlu0 %v1319, 32
          %v1540 = vpop.permute.xlu0 %1539
          %1541 = vrot.lane.b32.xlu0 %v1320, 32
          %v1542 = vpop.permute.xlu0 %1541
          %1543 = vrot.lane.b32.xlu0 %v1321, 32
          %v1544 = vpop.permute.xlu0 %1543
          %1545 = vrot.lane.b32.xlu0 %v1322, 32
          %v1546 = vpop.permute.xlu0 %1545
          %1547 = vrot.lane.b32.xlu0 %v1323, 32
          %v1548 = vpop.permute.xlu0 %1547
          %1549 = vrot.lane.b32.xlu0 %v1324, 32
          %v1550 = vpop.permute.xlu0 %1549
          %1551 = vrot.lane.b32.xlu0 %v1325, 32
          %v1552 = vpop.permute.xlu0 %1551
          %v1569 = vmul.f32 %v1412, %v1522
          %v1570 = vmul.f32 %v1414, %v1524
          %v1571 = vmul.f32 %v1416, %v1526
          %v1572 = vmul.f32 %v1418, %v1528
          %v1573 = vmul.f32 %v1420, %v1530
          %v1574 = vmul.f32 %v1422, %v1532
          %v1575 = vmul.f32 %v1424, %v1534
          %v1576 = vmul.f32 %v1426, %v1536
          %v1577 = vmul.f32 %v1428, %v1538
          %v1578 = vmul.f32 %v1430, %v1540
          %v1579 = vmul.f32 %v1432, %v1542
          %v1580 = vmul.f32 %v1434, %v1544
          %v1581 = vmul.f32 %v1436, %v1546
          %v1582 = vmul.f32 %v1438, %v1548
          %v1583 = vmul.f32 %v1440, %v1550
          %v1584 = vmul.f32 %v1442, %v1552
          %v1585 = vsel %vm1327, %v1569, 0.0
          %v1586 = vsel %vm1327, %v1570, 0.0
          %v1587 = vadd.f32 %v1585, %v1586
          %v1588 = vsel %vm1327, %v1571, 0.0
          %v1589 = vadd.f32 %v1587, %v1588
          %v1590 = vsel %vm1327, %v1572, 0.0
          %v1591 = vadd.f32 %v1589, %v1590
          %v1592 = vsel %vm1327, %v1573, 0.0
          %v1593 = vadd.f32 %v1591, %v1592
          %v1594 = vsel %vm1327, %v1574, 0.0
          %v1595 = vadd.f32 %v1593, %v1594
          %v1596 = vsel %vm1327, %v1575, 0.0
          %v1597 = vadd.f32 %v1595, %v1596
          %v1598 = vsel %vm1327, %v1576, 0.0
          %v1599 = vadd.f32 %v1597, %v1598
          %v1600 = vsel %vm1327, %v1577, 0.0
          %v1601 = vadd.f32 %v1599, %v1600
          %v1602 = vsel %vm1327, %v1578, 0.0
          %v1603 = vadd.f32 %v1601, %v1602
          %v1604 = vsel %vm1327, %v1579, 0.0
          %v1605 = vadd.f32 %v1603, %v1604
          %v1606 = vsel %vm1327, %v1580, 0.0
          %v1607 = vadd.f32 %v1605, %v1606
          %v1608 = vsel %vm1327, %v1581, 0.0
          %v1609 = vadd.f32 %v1607, %v1608
          %v1610 = vsel %vm1327, %v1582, 0.0
          %v1611 = vadd.f32 %v1609, %v1610
          %v1612 = vsel %vm1327, %v1583, 0.0
          %v1613 = vadd.f32 %v1611, %v1612
          %v1614 = vsel %vm1327, %v1584, 0.0
          %v1615 = vadd.f32 %v1613, %v1614
          %v1616 = vrot.slane %v1615, 4
          %v1617 = vadd.f32 %v1615, %v1616
          %v1618 = vrot.slane %v1617, 2
          %v1619 = vadd.f32 %v1617, %v1618
          %v1620 = vrot.slane %v1619, 1
          %v1621 = vadd.f32 %v1619, %v1620
          %v1624 = vunpack.c.l.s4 1966171168
          %v1625 = vunpack.c.0.s8 %v1624
          %v1626 = vlaneseq
          %v1627 = vshrl.u32 %v1626, 7
          %v1628 = vsub.s32 %v1625, %v1627
          %v1629 = vrot.slane %v1621, %v1628
          %v1631 = vunpack.c.l.s4 1966171168
          %v1632 = vunpack.c.0.s8 %v1631
          %v1633 = vlaneseq
          %v1634 = vshrl.u32 %v1633, 7
          %v1635 = vsub.s32 %v1632, %v1634
          %v1636 = vrot.slane %v1629, %v1635
          %1637 = vrot.lane.b32.xlu0 %v1636, 96
          %v1638 = vpop.permute.xlu0 %1637
          %v1640 = vadd.f32 %v1504, %v1638
          %1641 = vst.msk [vmem:[#allocation4] sm:$0x1] %vm1501, %v1640
          %1642 = vst.msk [vmem:[#allocation2] sm:$0x1] %vm1501, %v1383
        $region76: #{tpu_custom_call.1} parent=63 // pred_fallthru
          _
        %p1643 = scmp.eq.s32.totalorder %s30, 2
        // Predicated region
        $region77: #{tpu_custom_call.1} parent=63 // pred_check
          %p1644 = pneg %p1643
        $region78: #{tpu_custom_call.1} parent=63 // pred_check_branch
          %1646 = sbr.rel (%p1644) target = $region80
        $region79: #{tpu_custom_call.1} parent=63 // pred_region
          %v1647 = vld [vmem:[#allocation4] sm:$0x1]
          %v1648 = vld [vmem:[#allocation3] sm:$0x1]
          %v1649 = vrcp.pop %v1648
          %v1650 = vmul.f32 %v1647, %v1649
          %v1651 = vld [vmem:[%s6] sm:$0xff]
          %v1652 = vld [vmem:[%s6 + $0x8] sm:$0xff]
          %v1653 = vld [vmem:[%s6 + $0x10] sm:$0xff]
          %v1654 = vld [vmem:[%s6 + $0x18] sm:$0xff]
          %v1655 = vld [vmem:[%s7] sm:$0x1]
          %v1657 = vsel %vm689, %v1650, 0
          %1659 = vmatprep.subr.mxu0 0.0
          %1660 = vmatpush1.msra.mxu0 %v1651
          %1661 = vmatprep.subr.mxu0 0.0
          %1662 = vmatpush1.msra.mxu0 %v1652
          %1663 = vmatprep.subr.mxu0 0.0
          %1664 = vmatpush1.msra.mxu0 %v1653
          %1665 = vmatprep.subr.mxu0 0.0
          %1666 = vmatpush1.msra.mxu0 %v1654
          %1667 = vmatprep.subr.mxu0 0.0
          %1668 = vmatpush1.msra.mxu0 0.0
          %1669 = vmatprep.subr.mxu0 0.0
          %1670 = vmatpush1.msra.mxu0 0.0
          %1671 = vmatprep.subr.mxu0 0.0
          %1672 = vmatpush1.msra.mxu0 0.0
          %1673 = vmatprep.subr.mxu0 0.0
          %1674 = vmatpush1.msra.mxu0 0.0
          %1675 = vmatprep.subr.mxu0 0.0
          %1676 = vmatpush1.msra.mxu0 0.0
          %1677 = vmatprep.subr.mxu0 0.0
          %1678 = vmatpush1.msra.mxu0 0.0
          %1679 = vmatprep.subr.mxu0 0.0
          %1680 = vmatpush1.msra.mxu0 0.0
          %1681 = vmatprep.subr.mxu0 0.0
          %1682 = vmatpush1.msra.mxu0 0.0
          %1683 = vmatprep.subr.mxu0 0.0
          %1684 = vmatpush1.msra.mxu0 0.0
          %1685 = vmatprep.subr.mxu0 0.0
          %1686 = vmatpush1.msra.mxu0 0.0
          %1687 = vmatprep.subr.mxu0 0.0
          %1688 = vmatpush1.msra.mxu0 0.0
          %1689 = vmatprep.subr.mxu0 0.0
          %1690 = vmatpush1.msra.mxu0 0.0
          %1691 = vmatprep.subr.mxu0 0.0
          %1692 = vmatpush1.msra.mxu0 0.0
          %1693 = vmatprep.subr.mxu0 0.0
          %1694 = vmatpush1.msra.mxu0 0.0
          %1695 = vmatprep.subr.mxu0 0.0
          %1696 = vmatpush1.msra.mxu0 0.0
          %1697 = vmatprep.subr.mxu0 0.0
          %1698 = vmatpush1.msra.mxu0 0.0
          %1699 = vmatprep.subr.mxu0 0.0
          %1700 = vmatpush1.msra.mxu0 0.0
          %1701 = vmatprep.subr.mxu0 0.0
          %1702 = vmatpush1.msra.mxu0 0.0
          %1703 = vmatprep.subr.mxu0 0.0
          %1704 = vmatpush1.msra.mxu0 0.0
          %1705 = vmatprep.subr.mxu0 0.0
          %1706 = vmatpush1.msra.mxu0 0.0
          %1707 = vmatprep.subr.mxu0 0.0
          %1708 = vmatpush1.msra.mxu0 0.0
          %1709 = vmatprep.subr.mxu0 0.0
          %1710 = vmatpush1.msra.mxu0 0.0
          %1711 = vmatprep.subr.mxu0 0.0
          %1712 = vmatpush1.msra.mxu0 0.0
          %1713 = vmatprep.subr.mxu0 0.0
          %1714 = vmatpush1.msra.mxu0 0.0
          %1715 = vmatprep.subr.mxu0 0.0
          %1716 = vmatpush1.msra.mxu0 0.0
          %1717 = vmatprep.subr.mxu0 0.0
          %1718 = vmatpush1.msra.mxu0 0.0
          %1719 = vmatprep.subr.mxu0 0.0
          %1720 = vmatpush1.msra.mxu0 0.0
          %1721 = vmatprep.subr.mxu0 0.0
          %1722 = vmatpush1.msra.mxu0 0.0
          %1723 = vmatprep.mubr.f32.mxu0 0.0
          %1724 = vmatmul.mubr.f32.gmra.mrb[0].mxu0 %v1657
          %v1725 = vpop.f32.mrb[0].mxu0
          %v1726 = vadd.f32 %v1655, %v1725
          %v1727 = vpop.f32.mrb[0].mxu0
          %1728 = vdwg.mxu0
          %vm1729 = vcmask 253952
          %v1730 = vsel %vm1729, %v1726, 0.0
          %1731 = vadd.xlane.f32.xlu0 %v1730
          %v1732 = vpop.xlane.xlu0 %1731
          %v1733 = vrcp.pop 32.0
          %v1734 = vmul.f32 %v1732, %v1733
          %v1735 = vsub.f32 %v1726, %v1734
          %v1736 = vmul.f32 %v1735, %v1735
          %v1737 = vsel %vm1729, %v1736, 0.0
          %1738 = vadd.xlane.f32.xlu0 %v1737
          %v1739 = vpop.xlane.xlu0 %1738
          %v1740 = vmul.f32 %v1739, %v1733
          %v1741 = vadd.f32 %v1740, 1e-06
          %v1742 = vrsqrt.pop %v1741
          %v1743 = vmul.f32 %v1735, %v1742
          %v1744 = vld [vmem:[%s8] sm:$0x1]
          %v1745 = vmul.f32 %v1743, %v1744
          %v1746 = vld [vmem:[%s9] sm:$0x1]
          %v1747 = vadd.f32 %v1745, %v1746
          %v1748 = vld [vmem:[%s10] sm:$0xff]
          %v1749 = vld [vmem:[%s10 + $0x8] sm:$0xff]
          %v1750 = vld [vmem:[%s10 + $0x10] sm:$0xff]
          %v1751 = vld [vmem:[%s10 + $0x18] sm:$0xff]
          %v1752 = vld [vmem:[%s11] sm:$0x1]
          %v1754 = vsel %vm689, %v1747, 0
          %1756 = vmatprep.subr.mxu0 0.0
          %1757 = vmatpush1.msra.mxu0 %v1748
          %1758 = vmatprep.subr.mxu0 0.0
          %1759 = vmatpush1.msra.mxu0 %v1749
          %1760 = vmatprep.subr.mxu0 0.0
          %1761 = vmatpush1.msra.mxu0 %v1750
          %1762 = vmatprep.subr.mxu0 0.0
          %1763 = vmatpush1.msra.mxu0 %v1751
          %1764 = vmatprep.subr.mxu0 0.0
          %1765 = vmatpush1.msra.mxu0 0.0
          %1766 = vmatprep.subr.mxu0 0.0
          %1767 = vmatpush1.msra.mxu0 0.0
          %1768 = vmatprep.subr.mxu0 0.0
          %1769 = vmatpush1.msra.mxu0 0.0
          %1770 = vmatprep.subr.mxu0 0.0
          %1771 = vmatpush1.msra.mxu0 0.0
          %1772 = vmatprep.subr.mxu0 0.0
          %1773 = vmatpush1.msra.mxu0 0.0
          %1774 = vmatprep.subr.mxu0 0.0
          %1775 = vmatpush1.msra.mxu0 0.0
          %1776 = vmatprep.subr.mxu0 0.0
          %1777 = vmatpush1.msra.mxu0 0.0
          %1778 = vmatprep.subr.mxu0 0.0
          %1779 = vmatpush1.msra.mxu0 0.0
          %1780 = vmatprep.subr.mxu0 0.0
          %1781 = vmatpush1.msra.mxu0 0.0
          %1782 = vmatprep.subr.mxu0 0.0
          %1783 = vmatpush1.msra.mxu0 0.0
          %1784 = vmatprep.subr.mxu0 0.0
          %1785 = vmatpush1.msra.mxu0 0.0
          %1786 = vmatprep.subr.mxu0 0.0
          %1787 = vmatpush1.msra.mxu0 0.0
          %1788 = vmatprep.subr.mxu0 0.0
          %1789 = vmatpush1.msra.mxu0 0.0
          %1790 = vmatprep.subr.mxu0 0.0
          %1791 = vmatpush1.msra.mxu0 0.0
          %1792 = vmatprep.subr.mxu0 0.0
          %1793 = vmatpush1.msra.mxu0 0.0
          %1794 = vmatprep.subr.mxu0 0.0
          %1795 = vmatpush1.msra.mxu0 0.0
          %1796 = vmatprep.subr.mxu0 0.0
          %1797 = vmatpush1.msra.mxu0 0.0
          %1798 = vmatprep.subr.mxu0 0.0
          %1799 = vmatpush1.msra.mxu0 0.0
          %1800 = vmatprep.subr.mxu0 0.0
          %1801 = vmatpush1.msra.mxu0 0.0
          %1802 = vmatprep.subr.mxu0 0.0
          %1803 = vmatpush1.msra.mxu0 0.0
          %1804 = vmatprep.subr.mxu0 0.0
          %1805 = vmatpush1.msra.mxu0 0.0
          %1806 = vmatprep.subr.mxu0 0.0
          %1807 = vmatpush1.msra.mxu0 0.0
          %1808 = vmatprep.subr.mxu0 0.0
          %1809 = vmatpush1.msra.mxu0 0.0
          %1810 = vmatprep.subr.mxu0 0.0
          %1811 = vmatpush1.msra.mxu0 0.0
          %1812 = vmatprep.subr.mxu0 0.0
          %1813 = vmatpush1.msra.mxu0 0.0
          %1814 = vmatprep.subr.mxu0 0.0
          %1815 = vmatpush1.msra.mxu0 0.0
          %1816 = vmatprep.subr.mxu0 0.0
          %1817 = vmatpush1.msra.mxu0 0.0
          %1818 = vmatprep.subr.mxu0 0.0
          %1819 = vmatpush1.msra.mxu0 0.0
          %1820 = vmatprep.mubr.f32.mxu0 0.0
          %1821 = vmatmul.mubr.f32.gmra.mrb[0].mxu0 %v1754
          %v1822 = vpop.f32.mrb[0].mxu0
          %v1823 = vadd.f32 %v1752, %v1822
          %v1824 = vpop.f32.mrb[0].mxu0
          %1825 = vdwg.mxu0
          %vm1826 = vcmask 24576
          %1827 = vst.msk [vmem:[#allocation7] sm:$0x1] %vm1826, %v1823
        $region80: #{tpu_custom_call.1} parent=63 // pred_fallthru
          _
        // Predicated region
        $region81: #{tpu_custom_call.1} parent=63 // pred_check
          %p1828 = pneg %p293
        $region82: #{tpu_custom_call.1} parent=63 // pred_check_branch
          %1830 = sbr.rel (%p1828) target = $region84
        $region83: #{tpu_custom_call.1} parent=63 // pred_region
          %s1832 = ssub.s32 16, 16
          %1833 = vsyncadd [#allocation8], %s1832
          %s1834 = smul.addr %s29, 16
          %s1835 = scalar_lea.hbm %s12, %s1834
          %s1837 = sshll.u32 [#allocation7], 4
          %s1838 = int_to_ptr.vmem [resolvable:$true] %s1837
          %1840 = dma.vmem_to_hbm [thread:$0]  %s1838, 16, %s1835, [#allocation8]
        $region84: #{tpu_custom_call.1} parent=63 // pred_fallthru
          _
        // Predicated region
        $region85: #{tpu_custom_call.1} parent=63 // pred_check
          %p1841 = pneg %p293
        $region86: #{tpu_custom_call.1} parent=63 // pred_check_branch
          %1843 = sbr.rel (%p1841) target = $region88
        $region87: #{tpu_custom_call.1} parent=63 // pred_region
          %1844 = dma.done [#allocation8], 16
        $region88: #{tpu_custom_call.1} parent=63 // pred_fallthru
          _
      $region64: #{tpu_custom_call.1} parent=5 // pred_fallthru
        _
      %p1845 = scmp.le.s32.totalorder 2, %s20
      // Predicated region
      $region89: #{tpu_custom_call.1} parent=5 // pred_check
        %p1846 = pneg %p1845
      $region90: #{tpu_custom_call.1} parent=5 // pred_check_branch
        %1848 = sbr.rel (%p1846) target = $region92
      $region91: #{tpu_custom_call.1} parent=5 // pred_region
        %s1849 = ssub.s32 %s20, 2
      $region92: #{tpu_custom_call.1} parent=5 // pred_fallthru
        _
    $region6: #{tpu_custom_call.1} parent=1 // loop_footer
      %s24 = sadd.s32 1, %s20
    $region7: #{tpu_custom_call.1} parent=1 // loop_footer_branch
      %19 = sbr.rel target = $region3
    $region8: #{tpu_custom_call.1} parent=1 // loop_exit
      _
    %1850 = vsyncpa [#allocation8], 1
    %s1851 = scalar_lea.sflag [#allocation8], 1
    %1852 = vsyncpa %s1851, 1

</llo_original>
